<compile_context>
chip_gen: v7x
topology: tpu7x:2x2x1
jax: 0.10.0
libtpu: 0.0.40
codegen_flags: <defaults>
</compile_context>

<pallas_src>
import functools
import itertools

import numpy as np
import jax
import jax.numpy as jnp
from jax import lax
from jax.experimental import pallas as pl
from jax.experimental.pallas import tpu as pltpu


def conv2d_output_size(kernel_size, stride, sidesize):
    return (sidesize - kernel_size) // stride + 1


def _round_up(x, m):
    return ((x + m - 1) // m) * m


_SUB = 16     # sublane alignment (bf16 packed rows); also fine for f32
_LANE = 128   # lane width

_VMEM = pl.BlockSpec(memory_space=pltpu.MemorySpace.VMEM)


# ------------------------------ Pallas kernel -------------------------------

def _fused_cnn_kernel(x_ref, w_ref, b_ref, o_ref, *, stages):
    """Entire CNN forward in one kernel.

    x_ref : (M, K*K*Cin)  bf16 patch matrix (nested im2col, built in wrapper)
    w_ref : (R, 128)      bf16 weight slab, one 16-aligned row band per stage
    b_ref : (S, 128)      f32 bias slab, one row per stage
    o_ref : (Npad, 128)   f32 lane-dense output

    stages = tuple of (nblocks, cin_blk, fout_pad, w_row_offset, apply_relu).
    Each stage computes
        y = sum_i  h[i*rows:(i+1)*rows, :] @ W_blk_i  + bias      (f32 acc)
        h = relu(y)   (all but the final stage)
    where rows = h.shape[0] // nblocks.  nblocks is K*K for conv layers after
    the first (cross-layer tap folding) and side*side for the flatten->linear
    stage; 1 otherwise.  All slices are static, contiguous and 16-row aligned
    (batch and channel widths were padded at pack / wrapper time), so they are
    free views — no cross-lane concatenate, no relayout.  Accumulating small
    matmuls instead of one concat+matmul keeps the work on the (idle) MXU.
    """
    h = x_ref[...]
    wdt = w_ref.dtype
    for si, (nblocks, cin_blk, fout, w_off, apply_relu) in enumerate(stages):
        assert h.shape[0] % nblocks == 0, (h.shape, nblocks)
        rows = h.shape[0] // nblocks
        lhs = h.astype(wdt)                       # single cast per stage
        acc = jnp.zeros((rows, fout), jnp.float32)
        for i in range(nblocks):
            a = lhs[i * rows:(i + 1) * rows, :]
            wblk = w_ref[w_off + i * cin_blk: w_off + (i + 1) * cin_blk, 0:fout]
            acc = acc + jnp.dot(a, wblk, preferred_element_type=jnp.float32)
        y = acc + b_ref[si:si + 1, 0:fout]
        h = jnp.maximum(y, 0.0) if apply_relu else y
    o_ref[...] = h.astype(o_ref.dtype)


# ----------------------- wrapper-side patch extraction ----------------------

def _nested_im2col(x_nhwc, *, kernel_size, stride, num_conv_layers):
    """Patch matrix for the FIRST conv of the fused conv stack (zero-FLOP glue).

    Rows are ordered (t_2, ..., t_L, oh, ow, n) where t_i = (kh_i, kw_i) is the
    tap of downstream conv layer i and (oh, ow) the FINAL conv's output
    position; columns are (kh_1, kw_1, c_in).  With this ordering, every later
    conv's im2col inside the kernel is just a split into contiguous row blocks.

    # TODO(synk): for v5e-scale batches, move this (and the NCHW->NHWC
    #             transpose) in-kernel from an x ref in ANY/HBM space so the
    #             ~K*K-expanded patch matrix never round-trips through HBM.
    """
    K, s, L = kernel_size, stride, num_conv_layers
    N, H, W, C0 = x_nhwc.shape
    assert H == W, "square input assumed"
    side = H
    for _ in range(L):
        side = conv2d_output_size(K, s, side)
        assert side >= 1, "conv stack does not fit the input"
    sL = s ** L                                  # stride of final positions in input space
    span = (side - 1) * sL + 1
    tap_axes = []
    for _ in range(L - 1):                       # taps of conv layers 2..L
        tap_axes.extend([range(K), range(K)])
    blocks = []
    for taps in itertools.product(*tap_axes):    # t_2 slowest ... t_L fastest
        off_h = off_w = 0
        for j in range(len(taps) // 2):
            layer = 2 + j
            off_h += taps[2 * j] * (s ** (layer - 1))
            off_w += taps[2 * j + 1] * (s ** (layer - 1))
        cols = []
        for kh in range(K):
            for kw in range(K):
                h0, w0 = off_h + kh, off_w + kw
                cols.append(x_nhwc[:, h0:h0 + span:sL, w0:w0 + span:sL, :])
        tap_mat = jnp.stack(cols, axis=-2)                  # (N, side, side, K*K, C0)
        tap_mat = jnp.transpose(tap_mat, (1, 2, 0, 3, 4))   # (side, side, N, K*K, C0)
        blocks.append(tap_mat.reshape(side * side * N, K * K * C0))
    return jnp.concatenate(blocks, axis=0) if len(blocks) > 1 else blocks[0]


# ------------------------- one-time weight packing ---------------------------

def pack_params(params, *, kernel_size, stride, input_height,
                compute_dtype=jnp.bfloat16):
    """Pack PyTorch-layout params once into a single weight slab + bias slab.

    Per stage, the weight band holds `nblocks` contiguous (cin_blk, fout_pad)
    sub-blocks (taps for conv layers, flatten positions for the first linear).
    Intermediate fout is zero-padded to a multiple of 16 so downstream blocks
    stay 16-row aligned; the LAST stage's fout is padded to 128 for a
    lane-dense output store.  Only uniform kernel_size/stride, VALID convs,
    ReLU activations and no dropout are supported.

    Returns (w_slab, b_slab, stages, out_features).
    """
    K, s = kernel_size, stride
    convs, lins = params["conv"], params["linear"]
    assert len(convs) >= 1 and len(lins) >= 1
    n_stage = len(convs) + len(lins)

    side = input_height
    for (w, _) in convs:
        assert w.shape[2] == K and w.shape[3] == K, "uniform kernel_size assumed"
        side = conv2d_output_size(K, s, side)
        assert side >= 1
    S2 = side * side
    c_last = convs[-1][0].shape[0]

    stage_ws, stage_bs, stage_meta = [], [], []
    prev_pad = None
    sidx = 0

    for li, (w, b) in enumerate(convs):
        cout, cin = w.shape[0], w.shape[1]
        is_last = (sidx == n_stage - 1)
        fout_pad = _round_up(cout, _LANE if is_last else _SUB)
        if li == 0:
            nblocks, cin_blk = 1, K * K * cin
            ws = jnp.transpose(w, (2, 3, 1, 0)).reshape(K * K * cin, cout)
        else:
            nblocks, cin_blk = K * K, prev_pad
            taps = []
            for kh in range(K):
                for kw in range(K):
                    blk = jnp.transpose(w[:, :, kh, kw])        # (cin, cout)
                    blk = jnp.pad(blk, ((0, prev_pad - cin), (0, 0)))
                    taps.append(blk)
            ws = jnp.concatenate(taps, axis=0)                  # (K*K*prev_pad, cout)
        ws = jnp.pad(ws, ((0, 0), (0, fout_pad - cout)))
        bs = jnp.pad(b.astype(jnp.float32), (0, fout_pad - cout))
        stage_ws.append(ws)
        stage_bs.append(bs)
        stage_meta.append((nblocks, cin_blk, fout_pad, True))
        prev_pad = fout_pad
        sidx += 1

    for lj, (w, b) in enumerate(lins):
        fout, fin = w.shape
        is_last = (sidx == n_stage - 1)
        fout_pad = _round_up(fout, _LANE if is_last else _SUB)
        if lj == 0:
            # torch Flatten order is (c, oh, ow); the kernel's activations are
            # ordered (oh, ow) over row blocks and c over lanes.
            assert fin == c_last * S2, (fin, c_last, S2)
            nblocks, cin_blk = S2, prev_pad
            blocks = []
            for p in range(S2):                                 # p = oh*side + ow
                blk = jnp.transpose(w[:, p::S2])                # (c_last, fout)
                blk = jnp.pad(blk, ((0, prev_pad - c_last), (0, 0)))
                blocks.append(blk)
            ws = jnp.concatenate(blocks, axis=0)                # (S2*prev_pad, fout)
        else:
            nblocks, cin_blk = 1, prev_pad
            ws = jnp.pad(jnp.transpose(w), ((0, prev_pad - fin), (0, 0)))
        ws = jnp.pad(ws, ((0, 0), (0, fout_pad - fout)))
        bs = jnp.pad(b.astype(jnp.float32), (0, fout_pad - fout))
        stage_ws.append(ws)
        stage_bs.append(bs)
        stage_meta.append((nblocks, cin_blk, fout_pad, not is_last))
        prev_pad = fout_pad
        sidx += 1

    slab_cols = max(ws.shape[1] for ws in stage_ws)             # >= 128
    pieces, stages, offset = [], [], 0
    for ws, (nblocks, cin_blk, fout_pad, relu) in zip(stage_ws, stage_meta):
        rows = ws.shape[0]
        pieces.append(jnp.pad(ws, ((0, 0), (0, slab_cols - ws.shape[1]))))
        stages.append((nblocks, cin_blk, fout_pad, offset, relu))
        rows_pad = _round_up(rows, _SUB)                        # keep offsets 16-aligned
        if rows_pad > rows:
            pieces.append(jnp.zeros((rows_pad - rows, slab_cols), ws.dtype))
        offset += rows_pad
    w_slab = jnp.concatenate(pieces, axis=0).astype(compute_dtype)
    b_slab = jnp.stack(
        [jnp.pad(bs, (0, slab_cols - bs.shape[0])) for bs in stage_bs]
    ).astype(jnp.float32)
    out_features = lins[-1][0].shape[0]
    return w_slab, b_slab, tuple(stages), out_features


# ---------------------------------- forward ----------------------------------

def cnn_forward(w_slab, b_slab, x_nchw, *, stages, out_features, kernel_size,
                stride, num_conv_layers, out_squeeze=False):
    # TODO(synk): dropout path not implemented (module default dropout_layers=None);
    #             only relu activation / None output_activation are implemented.
    N = x_nchw.shape[0]
    # Pad batch to a multiple of 16 so every per-tap / per-position row block in
    # the kernel is sublane-aligned for bf16 packing (also amortizes fixed
    # overhead; larger real batches are essentially free throughput here).
    n_pad = max(_round_up(N, 16), 16)
    if n_pad != N:
        x_nchw = jnp.pad(x_nchw, ((0, n_pad - N), (0, 0), (0, 0), (0, 0)))
    x = jnp.transpose(x_nchw, (0, 2, 3, 1))                     # NCHW -> NHWC
    patches = _nested_im2col(x, kernel_size=kernel_size, stride=stride,
                             num_conv_layers=num_conv_layers)
    patches = patches.astype(w_slab.dtype)
    out_pad = stages[-1][2]                                     # lane-dense (>=128)

    # Whole-array VMEM residency: patches + weight slab + bias slab are < 1 MiB.
    # TODO(synk): when batch scales, add an M-tiled grid over patch rows with
    #             dimension_semantics=("parallel",) (uses v7x's 2nd TensorCore),
    #             re-derive tile sizes against v7x's 32 MiB scoped / 64 MiB
    #             physical VMEM, and do the im2col in-kernel from an ANY/HBM ref.
    out = pl.pallas_call(
        functools.partial(_fused_cnn_kernel, stages=stages),
        out_shape=jax.ShapeDtypeStruct((n_pad, out_pad), jnp.float32),
        in_specs=[_VMEM, _VMEM, _VMEM],
        out_specs=_VMEM,
        compiler_params=pltpu.CompilerParams(
            # Explicit limit: v5e's scoped-VMEM default is only 16 MiB.
            vmem_limit_bytes=32 * 1024 * 1024),
    )(patches, w_slab, b_slab)
    out = out[:N, :out_features]
    # NOTE: matches torch .squeeze() semantics — squeezes ALL size-1 dims,
    # including the batch dim when N == 1.
    return jnp.squeeze(out) if out_squeeze else out


# ------------------------------ params & reference ---------------------------

def init_cnn_params(key, *, kernel_size, stride, output_size, input_channels,
                    input_height, channels, linear_layer_sizes):
    conv_sizes = [input_channels] + channels
    params = {"conv": [], "linear": []}
    hw = input_height
    for i, cout in enumerate(conv_sizes[1:]):
        cin = conv_sizes[i]
        hw = conv2d_output_size(kernel_size, stride, hw)
        bound = 1.0 / np.sqrt(cin * kernel_size * kernel_size)
        key, k1, k2 = jax.random.split(key, 3)
        w = jax.random.uniform(k1, (cout, cin, kernel_size, kernel_size),
                               jnp.float32, -bound, bound)
        bb = jax.random.uniform(k2, (cout,), jnp.float32, -bound, bound)
        params["conv"].append((w, bb))
    conv_out = hw * hw * conv_sizes[-1]
    linear_sizes = [conv_out] + linear_layer_sizes + [output_size]
    for i, lout in enumerate(linear_sizes[1:]):
        lin = linear_sizes[i]
        bound = 1.0 / np.sqrt(lin)
        key, k1, k2 = jax.random.split(key, 3)
        w = jax.random.uniform(k1, (lout, lin), jnp.float32, -bound, bound)
        bb = jax.random.uniform(k2, (lout,), jnp.float32, -bound, bound)
        params["linear"].append((w, bb))
    return params


def cnn_forward_ref(params, x_nchw, *, kernel_size, stride, out_squeeze=False):
    x = x_nchw
    for (w, b) in params["conv"]:
        x = lax.conv_general_dilated(
            x, w, window_strides=(stride, stride), padding="VALID",
            dimension_numbers=("NCHW", "OIHW", "NCHW"),
            precision=lax.Precision.HIGHEST)
        x = jnp.maximum(x + b.reshape(1, -1, 1, 1), 0.0)
    x = x.reshape(x.shape[0], -1)
    for (w, b) in params["linear"][:-1]:
        x = jnp.maximum(x @ w.T + b, 0.0)
    w, b = params["linear"][-1]
    x = x @ w.T + b
    return jnp.squeeze(x) if out_squeeze else x


if __name__ == "__main__":
    kernel_size, stride = 3, 2
    input_channels, input_height = 4, 16
    channels = [8, 16]
    linear_layer_sizes = [32]
    output_size = 10
    batch = 2

    key = jax.random.PRNGKey(0)
    kx, kp = jax.random.split(key)
    x = jax.random.normal(
        kx, (batch, input_channels, input_height, input_height), jnp.float32)
    params = init_cnn_params(
        kp, kernel_size=kernel_size, stride=stride, output_size=output_size,
        input_channels=input_channels, input_height=input_height,
        channels=channels, linear_layer_sizes=linear_layer_sizes)

    ref = jax.block_until_ready(
        cnn_forward_ref(params, x, kernel_size=kernel_size, stride=stride))

    # Production path: bf16 MXU inputs, f32 accumulation/bias/ReLU/output.
    # (A full-f32 path is available via pack_params(compute_dtype=jnp.float32).)
    w_slab, b_slab, stages, out_features = pack_params(
        params, kernel_size=kernel_size, stride=stride,
        input_height=input_height, compute_dtype=jnp.bfloat16)
    fwd = jax.jit(functools.partial(
        cnn_forward, stages=stages, out_features=out_features,
        kernel_size=kernel_size, stride=stride, num_conv_layers=len(channels)))
    out = jax.block_until_ready(fwd(w_slab, b_slab, x))

    assert out.shape == (batch, output_size), out.shape
    # Tolerance sized for bf16 MXU inputs with f32 accumulation.
    np.testing.assert_allclose(np.asarray(out), np.asarray(ref),
                               rtol=2e-2, atol=2e-2)
    print("KERNEL_OK")
</pallas_src>

<mosaic_0001>
module attributes {stable_mosaic.version = 11 : i64} {
  func.func @_fused_cnn_kernel(%arg0: memref<1296x36xbf16, #tpu.memory_space<vmem>>, %arg1: memref<368x128xbf16, #tpu.memory_space<vmem>>, %arg2: memref<4x128xf32, #tpu.memory_space<vmem>>, %arg3: memref<16x128xf32, #tpu.memory_space<vmem>>) attributes {dimension_semantics = [], scalar_prefetch = 0 : i64, scratch_operands = 0 : i64, tpu.core_type = #tpu.core_type<tc>} {
    %c0 = arith.constant 0 : index
    %c0_0 = arith.constant 0 : index
    %0 = vector.load %arg0[%c0, %c0_0] : memref<1296x36xbf16, #tpu.memory_space<vmem>>, vector<1296x36xbf16>
    %cst = arith.constant 0.000000e+00 : f32
    %1 = vector.broadcast %cst : f32 to vector<1296x16xf32>
    %c0_1 = arith.constant 0 : index
    %c0_2 = arith.constant 0 : index
    %2 = vector.load %arg1[%c0_1, %c0_2] : memref<368x128xbf16, #tpu.memory_space<vmem>>, vector<36x16xbf16>
    %cst_3 = arith.constant dense<0.000000e+00> : vector<1296x16xf32>
    %3 = tpu.matmul %0, %2, %cst_3 {dimension_numbers = #tpu.dot_dimension_numbers<[1], [0], [0], [1], [0, 0, 1, 1], [], []>} : vector<1296x36xbf16>, vector<36x16xbf16>, vector<1296x16xf32> -> vector<1296x16xf32>
    %4 = arith.addf %1, %3 : vector<1296x16xf32>
    %c0_4 = arith.constant 0 : index
    %c0_5 = arith.constant 0 : index
    %5 = vector.load %arg2[%c0_4, %c0_5] : memref<4x128xf32, #tpu.memory_space<vmem>>, vector<1x16xf32>
    %6 = vector.broadcast %5 : vector<1x16xf32> to vector<1296x16xf32>
    %7 = arith.addf %4, %6 : vector<1296x16xf32>
    %cst_6 = arith.constant 0.000000e+00 : f32
    %8 = vector.broadcast %cst_6 : f32 to vector<1296x16xf32>
    %9 = arith.maximumf %7, %8 : vector<1296x16xf32>
    %10 = arith.truncf %9 : vector<1296x16xf32> to vector<1296x16xbf16>
    %cst_7 = arith.constant 0.000000e+00 : f32
    %11 = vector.broadcast %cst_7 : f32 to vector<144x16xf32>
    %12 = vector.extract_strided_slice %10 {offsets = [0, 0], sizes = [144, 16], strides = [1, 1]} : vector<1296x16xbf16> to vector<144x16xbf16>
    %c48 = arith.constant 48 : index
    %c0_8 = arith.constant 0 : index
    %13 = vector.load %arg1[%c48, %c0_8] : memref<368x128xbf16, #tpu.memory_space<vmem>>, vector<16x16xbf16>
    %cst_9 = arith.constant dense<0.000000e+00> : vector<144x16xf32>
    %14 = tpu.matmul %12, %13, %cst_9 {dimension_numbers = #tpu.dot_dimension_numbers<[1], [0], [0], [1], [0, 0, 1, 1], [], []>} : vector<144x16xbf16>, vector<16x16xbf16>, vector<144x16xf32> -> vector<144x16xf32>
    %15 = arith.addf %11, %14 : vector<144x16xf32>
    %16 = vector.extract_strided_slice %10 {offsets = [144, 0], sizes = [144, 16], strides = [1, 1]} : vector<1296x16xbf16> to vector<144x16xbf16>
    %c64 = arith.constant 64 : index
    %c0_10 = arith.constant 0 : index
    %17 = vector.load %arg1[%c64, %c0_10] : memref<368x128xbf16, #tpu.memory_space<vmem>>, vector<16x16xbf16>
    %cst_11 = arith.constant dense<0.000000e+00> : vector<144x16xf32>
    %18 = tpu.matmul %16, %17, %cst_11 {dimension_numbers = #tpu.dot_dimension_numbers<[1], [0], [0], [1], [0, 0, 1, 1], [], []>} : vector<144x16xbf16>, vector<16x16xbf16>, vector<144x16xf32> -> vector<144x16xf32>
    %19 = arith.addf %15, %18 : vector<144x16xf32>
    %20 = vector.extract_strided_slice %10 {offsets = [288, 0], sizes = [144, 16], strides = [1, 1]} : vector<1296x16xbf16> to vector<144x16xbf16>
    %c80 = arith.constant 80 : index
    %c0_12 = arith.constant 0 : index
    %21 = vector.load %arg1[%c80, %c0_12] : memref<368x128xbf16, #tpu.memory_space<vmem>>, vector<16x16xbf16>
    %cst_13 = arith.constant dense<0.000000e+00> : vector<144x16xf32>
    %22 = tpu.matmul %20, %21, %cst_13 {dimension_numbers = #tpu.dot_dimension_numbers<[1], [0], [0], [1], [0, 0, 1, 1], [], []>} : vector<144x16xbf16>, vector<16x16xbf16>, vector<144x16xf32> -> vector<144x16xf32>
    %23 = arith.addf %19, %22 : vector<144x16xf32>
    %24 = vector.extract_strided_slice %10 {offsets = [432, 0], sizes = [144, 16], strides = [1, 1]} : vector<1296x16xbf16> to vector<144x16xbf16>
    %c96 = arith.constant 96 : index
    %c0_14 = arith.constant 0 : index
    %25 = vector.load %arg1[%c96, %c0_14] : memref<368x128xbf16, #tpu.memory_space<vmem>>, vector<16x16xbf16>
    %cst_15 = arith.constant dense<0.000000e+00> : vector<144x16xf32>
    %26 = tpu.matmul %24, %25, %cst_15 {dimension_numbers = #tpu.dot_dimension_numbers<[1], [0], [0], [1], [0, 0, 1, 1], [], []>} : vector<144x16xbf16>, vector<16x16xbf16>, vector<144x16xf32> -> vector<144x16xf32>
    %27 = arith.addf %23, %26 : vector<144x16xf32>
    %28 = vector.extract_strided_slice %10 {offsets = [576, 0], sizes = [144, 16], strides = [1, 1]} : vector<1296x16xbf16> to vector<144x16xbf16>
    %c112 = arith.constant 112 : index
    %c0_16 = arith.constant 0 : index
    %29 = vector.load %arg1[%c112, %c0_16] : memref<368x128xbf16, #tpu.memory_space<vmem>>, vector<16x16xbf16>
    %cst_17 = arith.constant dense<0.000000e+00> : vector<144x16xf32>
    %30 = tpu.matmul %28, %29, %cst_17 {dimension_numbers = #tpu.dot_dimension_numbers<[1], [0], [0], [1], [0, 0, 1, 1], [], []>} : vector<144x16xbf16>, vector<16x16xbf16>, vector<144x16xf32> -> vector<144x16xf32>
    %31 = arith.addf %27, %30 : vector<144x16xf32>
    %32 = vector.extract_strided_slice %10 {offsets = [720, 0], sizes = [144, 16], strides = [1, 1]} : vector<1296x16xbf16> to vector<144x16xbf16>
    %c128 = arith.constant 128 : index
    %c0_18 = arith.constant 0 : index
    %33 = vector.load %arg1[%c128, %c0_18] : memref<368x128xbf16, #tpu.memory_space<vmem>>, vector<16x16xbf16>
    %cst_19 = arith.constant dense<0.000000e+00> : vector<144x16xf32>
    %34 = tpu.matmul %32, %33, %cst_19 {dimension_numbers = #tpu.dot_dimension_numbers<[1], [0], [0], [1], [0, 0, 1, 1], [], []>} : vector<144x16xbf16>, vector<16x16xbf16>, vector<144x16xf32> -> vector<144x16xf32>
    %35 = arith.addf %31, %34 : vector<144x16xf32>
    %36 = vector.extract_strided_slice %10 {offsets = [864, 0], sizes = [144, 16], strides = [1, 1]} : vector<1296x16xbf16> to vector<144x16xbf16>
    %c144 = arith.constant 144 : index
    %c0_20 = arith.constant 0 : index
    %37 = vector.load %arg1[%c144, %c0_20] : memref<368x128xbf16, #tpu.memory_space<vmem>>, vector<16x16xbf16>
    %cst_21 = arith.constant dense<0.000000e+00> : vector<144x16xf32>
    %38 = tpu.matmul %36, %37, %cst_21 {dimension_numbers = #tpu.dot_dimension_numbers<[1], [0], [0], [1], [0, 0, 1, 1], [], []>} : vector<144x16xbf16>, vector<16x16xbf16>, vector<144x16xf32> -> vector<144x16xf32>
    %39 = arith.addf %35, %38 : vector<144x16xf32>
    %40 = vector.extract_strided_slice %10 {offsets = [1008, 0], sizes = [144, 16], strides = [1, 1]} : vector<1296x16xbf16> to vector<144x16xbf16>
    %c160 = arith.constant 160 : index
    %c0_22 = arith.constant 0 : index
    %41 = vector.load %arg1[%c160, %c0_22] : memref<368x128xbf16, #tpu.memory_space<vmem>>, vector<16x16xbf16>
    %cst_23 = arith.constant dense<0.000000e+00> : vector<144x16xf32>
    %42 = tpu.matmul %40, %41, %cst_23 {dimension_numbers = #tpu.dot_dimension_numbers<[1], [0], [0], [1], [0, 0, 1, 1], [], []>} : vector<144x16xbf16>, vector<16x16xbf16>, vector<144x16xf32> -> vector<144x16xf32>
    %43 = arith.addf %39, %42 : vector<144x16xf32>
    %44 = vector.extract_strided_slice %10 {offsets = [1152, 0], sizes = [144, 16], strides = [1, 1]} : vector<1296x16xbf16> to vector<144x16xbf16>
    %c176 = arith.constant 176 : index
    %c0_24 = arith.constant 0 : index
    %45 = vector.load %arg1[%c176, %c0_24] : memref<368x128xbf16, #tpu.memory_space<vmem>>, vector<16x16xbf16>
    %cst_25 = arith.constant dense<0.000000e+00> : vector<144x16xf32>
    %46 = tpu.matmul %44, %45, %cst_25 {dimension_numbers = #tpu.dot_dimension_numbers<[1], [0], [0], [1], [0, 0, 1, 1], [], []>} : vector<144x16xbf16>, vector<16x16xbf16>, vector<144x16xf32> -> vector<144x16xf32>
    %47 = arith.addf %43, %46 : vector<144x16xf32>
    %c1 = arith.constant 1 : index
    %c0_26 = arith.constant 0 : index
    %48 = vector.load %arg2[%c1, %c0_26] : memref<4x128xf32, #tpu.memory_space<vmem>>, vector<1x16xf32>
    %49 = vector.broadcast %48 : vector<1x16xf32> to vector<144x16xf32>
    %50 = arith.addf %47, %49 : vector<144x16xf32>
    %cst_27 = arith.constant 0.000000e+00 : f32
    %51 = vector.broadcast %cst_27 : f32 to vector<144x16xf32>
    %52 = arith.maximumf %50, %51 : vector<144x16xf32>
    %53 = arith.truncf %52 : vector<144x16xf32> to vector<144x16xbf16>
    %cst_28 = arith.constant 0.000000e+00 : f32
    %54 = vector.broadcast %cst_28 : f32 to vector<16x32xf32>
    %55 = vector.extract_strided_slice %53 {offsets = [0, 0], sizes = [16, 16], strides = [1, 1]} : vector<144x16xbf16> to vector<16x16xbf16>
    %c192 = arith.constant 192 : index
    %c0_29 = arith.constant 0 : index
    %56 = vector.load %arg1[%c192, %c0_29] : memref<368x128xbf16, #tpu.memory_space<vmem>>, vector<16x32xbf16>
    %cst_30 = arith.constant dense<0.000000e+00> : vector<16x32xf32>
    %57 = tpu.matmul %55, %56, %cst_30 {dimension_numbers = #tpu.dot_dimension_numbers<[1], [0], [0], [1], [0, 0, 1, 1], [], []>} : vector<16x16xbf16>, vector<16x32xbf16>, vector<16x32xf32> -> vector<16x32xf32>
    %58 = arith.addf %54, %57 : vector<16x32xf32>
    %59 = vector.extract_strided_slice %53 {offsets = [16, 0], sizes = [16, 16], strides = [1, 1]} : vector<144x16xbf16> to vector<16x16xbf16>
    %c208 = arith.constant 208 : index
    %c0_31 = arith.constant 0 : index
    %60 = vector.load %arg1[%c208, %c0_31] : memref<368x128xbf16, #tpu.memory_space<vmem>>, vector<16x32xbf16>
    %cst_32 = arith.constant dense<0.000000e+00> : vector<16x32xf32>
    %61 = tpu.matmul %59, %60, %cst_32 {dimension_numbers = #tpu.dot_dimension_numbers<[1], [0], [0], [1], [0, 0, 1, 1], [], []>} : vector<16x16xbf16>, vector<16x32xbf16>, vector<16x32xf32> -> vector<16x32xf32>
    %62 = arith.addf %58, %61 : vector<16x32xf32>
    %63 = vector.extract_strided_slice %53 {offsets = [32, 0], sizes = [16, 16], strides = [1, 1]} : vector<144x16xbf16> to vector<16x16xbf16>
    %c224 = arith.constant 224 : index
    %c0_33 = arith.constant 0 : index
    %64 = vector.load %arg1[%c224, %c0_33] : memref<368x128xbf16, #tpu.memory_space<vmem>>, vector<16x32xbf16>
    %cst_34 = arith.constant dense<0.000000e+00> : vector<16x32xf32>
    %65 = tpu.matmul %63, %64, %cst_34 {dimension_numbers = #tpu.dot_dimension_numbers<[1], [0], [0], [1], [0, 0, 1, 1], [], []>} : vector<16x16xbf16>, vector<16x32xbf16>, vector<16x32xf32> -> vector<16x32xf32>
    %66 = arith.addf %62, %65 : vector<16x32xf32>
    %67 = vector.extract_strided_slice %53 {offsets = [48, 0], sizes = [16, 16], strides = [1, 1]} : vector<144x16xbf16> to vector<16x16xbf16>
    %c240 = arith.constant 240 : index
    %c0_35 = arith.constant 0 : index
    %68 = vector.load %arg1[%c240, %c0_35] : memref<368x128xbf16, #tpu.memory_space<vmem>>, vector<16x32xbf16>
    %cst_36 = arith.constant dense<0.000000e+00> : vector<16x32xf32>
    %69 = tpu.matmul %67, %68, %cst_36 {dimension_numbers = #tpu.dot_dimension_numbers<[1], [0], [0], [1], [0, 0, 1, 1], [], []>} : vector<16x16xbf16>, vector<16x32xbf16>, vector<16x32xf32> -> vector<16x32xf32>
    %70 = arith.addf %66, %69 : vector<16x32xf32>
    %71 = vector.extract_strided_slice %53 {offsets = [64, 0], sizes = [16, 16], strides = [1, 1]} : vector<144x16xbf16> to vector<16x16xbf16>
    %c256 = arith.constant 256 : index
    %c0_37 = arith.constant 0 : index
    %72 = vector.load %arg1[%c256, %c0_37] : memref<368x128xbf16, #tpu.memory_space<vmem>>, vector<16x32xbf16>
    %cst_38 = arith.constant dense<0.000000e+00> : vector<16x32xf32>
    %73 = tpu.matmul %71, %72, %cst_38 {dimension_numbers = #tpu.dot_dimension_numbers<[1], [0], [0], [1], [0, 0, 1, 1], [], []>} : vector<16x16xbf16>, vector<16x32xbf16>, vector<16x32xf32> -> vector<16x32xf32>
    %74 = arith.addf %70, %73 : vector<16x32xf32>
    %75 = vector.extract_strided_slice %53 {offsets = [80, 0], sizes = [16, 16], strides = [1, 1]} : vector<144x16xbf16> to vector<16x16xbf16>
    %c272 = arith.constant 272 : index
    %c0_39 = arith.constant 0 : index
    %76 = vector.load %arg1[%c272, %c0_39] : memref<368x128xbf16, #tpu.memory_space<vmem>>, vector<16x32xbf16>
    %cst_40 = arith.constant dense<0.000000e+00> : vector<16x32xf32>
    %77 = tpu.matmul %75, %76, %cst_40 {dimension_numbers = #tpu.dot_dimension_numbers<[1], [0], [0], [1], [0, 0, 1, 1], [], []>} : vector<16x16xbf16>, vector<16x32xbf16>, vector<16x32xf32> -> vector<16x32xf32>
    %78 = arith.addf %74, %77 : vector<16x32xf32>
    %79 = vector.extract_strided_slice %53 {offsets = [96, 0], sizes = [16, 16], strides = [1, 1]} : vector<144x16xbf16> to vector<16x16xbf16>
    %c288 = arith.constant 288 : index
    %c0_41 = arith.constant 0 : index
    %80 = vector.load %arg1[%c288, %c0_41] : memref<368x128xbf16, #tpu.memory_space<vmem>>, vector<16x32xbf16>
    %cst_42 = arith.constant dense<0.000000e+00> : vector<16x32xf32>
    %81 = tpu.matmul %79, %80, %cst_42 {dimension_numbers = #tpu.dot_dimension_numbers<[1], [0], [0], [1], [0, 0, 1, 1], [], []>} : vector<16x16xbf16>, vector<16x32xbf16>, vector<16x32xf32> -> vector<16x32xf32>
    %82 = arith.addf %78, %81 : vector<16x32xf32>
    %83 = vector.extract_strided_slice %53 {offsets = [112, 0], sizes = [16, 16], strides = [1, 1]} : vector<144x16xbf16> to vector<16x16xbf16>
    %c304 = arith.constant 304 : index
    %c0_43 = arith.constant 0 : index
    %84 = vector.load %arg1[%c304, %c0_43] : memref<368x128xbf16, #tpu.memory_space<vmem>>, vector<16x32xbf16>
    %cst_44 = arith.constant dense<0.000000e+00> : vector<16x32xf32>
    %85 = tpu.matmul %83, %84, %cst_44 {dimension_numbers = #tpu.dot_dimension_numbers<[1], [0], [0], [1], [0, 0, 1, 1], [], []>} : vector<16x16xbf16>, vector<16x32xbf16>, vector<16x32xf32> -> vector<16x32xf32>
    %86 = arith.addf %82, %85 : vector<16x32xf32>
    %87 = vector.extract_strided_slice %53 {offsets = [128, 0], sizes = [16, 16], strides = [1, 1]} : vector<144x16xbf16> to vector<16x16xbf16>
    %c320 = arith.constant 320 : index
    %c0_45 = arith.constant 0 : index
    %88 = vector.load %arg1[%c320, %c0_45] : memref<368x128xbf16, #tpu.memory_space<vmem>>, vector<16x32xbf16>
    %cst_46 = arith.constant dense<0.000000e+00> : vector<16x32xf32>
    %89 = tpu.matmul %87, %88, %cst_46 {dimension_numbers = #tpu.dot_dimension_numbers<[1], [0], [0], [1], [0, 0, 1, 1], [], []>} : vector<16x16xbf16>, vector<16x32xbf16>, vector<16x32xf32> -> vector<16x32xf32>
    %90 = arith.addf %86, %89 : vector<16x32xf32>
    %c2 = arith.constant 2 : index
    %c0_47 = arith.constant 0 : index
    %91 = vector.load %arg2[%c2, %c0_47] : memref<4x128xf32, #tpu.memory_space<vmem>>, vector<1x32xf32>
    %92 = vector.broadcast %91 : vector<1x32xf32> to vector<16x32xf32>
    %93 = arith.addf %90, %92 : vector<16x32xf32>
    %cst_48 = arith.constant 0.000000e+00 : f32
    %94 = vector.broadcast %cst_48 : f32 to vector<16x32xf32>
    %95 = arith.maximumf %93, %94 : vector<16x32xf32>
    %96 = arith.truncf %95 : vector<16x32xf32> to vector<16x32xbf16>
    %cst_49 = arith.constant 0.000000e+00 : f32
    %97 = vector.broadcast %cst_49 : f32 to vector<16x128xf32>
    %c336 = arith.constant 336 : index
    %c0_50 = arith.constant 0 : index
    %98 = vector.load %arg1[%c336, %c0_50] : memref<368x128xbf16, #tpu.memory_space<vmem>>, vector<32x128xbf16>
    %cst_51 = arith.constant dense<0.000000e+00> : vector<16x128xf32>
    %99 = tpu.matmul %96, %98, %cst_51 {dimension_numbers = #tpu.dot_dimension_numbers<[1], [0], [0], [1], [0, 0, 1, 1], [], []>} : vector<16x32xbf16>, vector<32x128xbf16>, vector<16x128xf32> -> vector<16x128xf32>
    %100 = arith.addf %97, %99 : vector<16x128xf32>
    %c3 = arith.constant 3 : index
    %c0_52 = arith.constant 0 : index
    %101 = vector.load %arg2[%c3, %c0_52] : memref<4x128xf32, #tpu.memory_space<vmem>>, vector<1x128xf32>
    %102 = vector.broadcast %101 : vector<1x128xf32> to vector<16x128xf32>
    %103 = arith.addf %100, %102 : vector<16x128xf32>
    %c0_53 = arith.constant 0 : index
    %c0_54 = arith.constant 0 : index
    %104 = vector.load %arg3[%c0_53, %c0_54] : memref<16x128xf32, #tpu.memory_space<vmem>>, vector<16x128xf32>
    tpu.vector_store %arg3[%c0_53, %c0_54], %103 {strides = array<i32>} : memref<16x128xf32, #tpu.memory_space<vmem>>, vector<16x128xf32>,
    return
  }
}

</mosaic_0001>

<llo_original>
// kernel: cnn_forward.1
$region0: #{cnn_forward.1}
  #allocation0 [shape = 'u32[]', space=smem, size = 0x4, offset = 0x4, fixed_abs, tag = 'smem constant byte address 0x4 - core index']
  #allocation1 [shape = 'u32[144,128]{1,0:T(1,128)}', space=vmem, size = 0x12000, scoped, tag = 'internal scratch']
  %s0 = inlined_call_operand.vmem [shape: bf16[1296,36], index: 0, kind: input, shape index: {}]
  %s1 = inlined_call_operand.vmem [shape: bf16[368,128], index: 1, kind: input, shape index: {}]
  %s2 = inlined_call_operand.vmem [shape: f32[4,128], index: 2, kind: input, shape index: {}]
  %s3 = inlined_call_operand.vmem [shape: f32[16,128], index: 3, kind: output, shape index: {}]
  %s4 = sld [smem:[#allocation0]]
  $region22: #{cnn_forward.1} parent=0
    _
  %s6 = ssub.s32 1, %s4
  %s7 = scalar_select 0, %s6, %s4
  // Predicated region
  $region2: #{cnn_forward.1} parent=0 // pred_check
    _
  $region3: #{cnn_forward.1} parent=0 // pred_check_branch
    %9 = sbr.rel (0) target = $region5
  $region4: #{cnn_forward.1} parent=0 // pred_region
    _
  $region5: #{cnn_forward.1} parent=0 // pred_fallthru
    _
  // Predicated region
  $region6: #{cnn_forward.1} parent=0 // pred_check
    _
  $region7: #{cnn_forward.1} parent=0 // pred_check_branch
    %11 = sbr.rel (0) target = $region9
  $region8: #{cnn_forward.1} parent=0 // pred_region
    _
  $region9: #{cnn_forward.1} parent=0 // pred_fallthru
    _
  // Predicated region
  $region10: #{cnn_forward.1} parent=0 // pred_check
    _
  $region11: #{cnn_forward.1} parent=0 // pred_check_branch
    %13 = sbr.rel (0) target = $region13
  $region12: #{cnn_forward.1} parent=0 // pred_region
    _
  $region13: #{cnn_forward.1} parent=0 // pred_fallthru
    _
  %v15 = vld [vmem:[%s0] sm:$0xf]
  %v16 = vld [vmem:[%s0 + $0x4] sm:$0xf]
  %v17 = vld [vmem:[%s0 + $0x8] sm:$0xf]
  %v18 = vld [vmem:[%s0 + $0xc] sm:$0xf]
  %v19 = vld [vmem:[%s0 + $0x10] sm:$0xf]
  %v20 = vld [vmem:[%s0 + $0x14] sm:$0xf]
  %v21 = vld [vmem:[%s0 + $0x18] sm:$0xf]
  %v22 = vld [vmem:[%s0 + $0x1c] sm:$0xf]
  %v23 = vld [vmem:[%s0 + $0x20] sm:$0xf]
  %v24 = vld [vmem:[%s0 + $0x24] sm:$0xf]
  %v25 = vld [vmem:[%s0 + $0x28] sm:$0xf]
  %v26 = vld [vmem:[%s0 + $0x2c] sm:$0xf]
  %v27 = vld [vmem:[%s0 + $0x30] sm:$0xf]
  %v28 = vld [vmem:[%s0 + $0x34] sm:$0xf]
  %v29 = vld [vmem:[%s0 + $0x38] sm:$0xf]
  %v30 = vld [vmem:[%s0 + $0x3c] sm:$0xf]
  %v31 = vld [vmem:[%s0 + $0x40] sm:$0xf]
  %v32 = vld [vmem:[%s0 + $0x44] sm:$0xf]
  %v33 = vld [vmem:[%s0 + $0x48] sm:$0xf]
  %v34 = vld [vmem:[%s0 + $0x4c] sm:$0xf]
  %v35 = vld [vmem:[%s0 + $0x50] sm:$0xf]
  %v36 = vld [vmem:[%s0 + $0x54] sm:$0xf]
  %v37 = vld [vmem:[%s0 + $0x58] sm:$0xf]
  %v38 = vld [vmem:[%s0 + $0x5c] sm:$0xf]
  %v39 = vld [vmem:[%s0 + $0x60] sm:$0xf]
  %v40 = vld [vmem:[%s0 + $0x64] sm:$0xf]
  %v41 = vld [vmem:[%s0 + $0x68] sm:$0xf]
  %v42 = vld [vmem:[%s0 + $0x6c] sm:$0xf]
  %v43 = vld [vmem:[%s0 + $0x70] sm:$0xf]
  %v44 = vld [vmem:[%s0 + $0x74] sm:$0xf]
  %v45 = vld [vmem:[%s0 + $0x78] sm:$0xf]
  %v46 = vld [vmem:[%s0 + $0x7c] sm:$0xf]
  %v47 = vld [vmem:[%s0 + $0x80] sm:$0xf]
  %v48 = vld [vmem:[%s0 + $0x84] sm:$0xf]
  %v49 = vld [vmem:[%s0 + $0x88] sm:$0xf]
  %v50 = vld [vmem:[%s0 + $0x8c] sm:$0xf]
  %v51 = vld [vmem:[%s0 + $0x90] sm:$0xf]
  %v52 = vld [vmem:[%s0 + $0x94] sm:$0xf]
  %v53 = vld [vmem:[%s0 + $0x98] sm:$0xf]
  %v54 = vld [vmem:[%s0 + $0x9c] sm:$0xf]
  %v55 = vld [vmem:[%s0 + $0xa0] sm:$0xf]
  %v56 = vld [vmem:[%s0 + $0xa4] sm:$0xf]
  %v57 = vld [vmem:[%s0 + $0xa8] sm:$0xf]
  %v58 = vld [vmem:[%s0 + $0xac] sm:$0xf]
  %v59 = vld [vmem:[%s0 + $0xb0] sm:$0xf]
  %v60 = vld [vmem:[%s0 + $0xb4] sm:$0xf]
  %v61 = vld [vmem:[%s0 + $0xb8] sm:$0xf]
  %v62 = vld [vmem:[%s0 + $0xbc] sm:$0xf]
  %v63 = vld [vmem:[%s0 + $0xc0] sm:$0xf]
  %v64 = vld [vmem:[%s0 + $0xc4] sm:$0xf]
  %v65 = vld [vmem:[%s0 + $0xc8] sm:$0xf]
  %v66 = vld [vmem:[%s0 + $0xcc] sm:$0xf]
  %v67 = vld [vmem:[%s0 + $0xd0] sm:$0xf]
  %v68 = vld [vmem:[%s0 + $0xd4] sm:$0xf]
  %v69 = vld [vmem:[%s0 + $0xd8] sm:$0xf]
  %v70 = vld [vmem:[%s0 + $0xdc] sm:$0xf]
  %v71 = vld [vmem:[%s0 + $0xe0] sm:$0xf]
  %v72 = vld [vmem:[%s0 + $0xe4] sm:$0xf]
  %v73 = vld [vmem:[%s0 + $0xe8] sm:$0xf]
  %v74 = vld [vmem:[%s0 + $0xec] sm:$0xf]
  %v75 = vld [vmem:[%s0 + $0xf0] sm:$0xf]
  %v76 = vld [vmem:[%s0 + $0xf4] sm:$0xf]
  %v77 = vld [vmem:[%s0 + $0xf8] sm:$0xf]
  %v78 = vld [vmem:[%s0 + $0xfc] sm:$0xf]
  %v79 = vld [vmem:[%s0 + $0x100] sm:$0xf]
  %v80 = vld [vmem:[%s0 + $0x104] sm:$0xf]
  %v81 = vld [vmem:[%s0 + $0x108] sm:$0xf]
  %v82 = vld [vmem:[%s0 + $0x10c] sm:$0xf]
  %v83 = vld [vmem:[%s0 + $0x110] sm:$0xf]
  %v84 = vld [vmem:[%s0 + $0x114] sm:$0xf]
  %v85 = vld [vmem:[%s0 + $0x118] sm:$0xf]
  %v86 = vld [vmem:[%s0 + $0x11c] sm:$0xf]
  %v87 = vld [vmem:[%s0 + $0x120] sm:$0xf]
  %v88 = vld [vmem:[%s0 + $0x124] sm:$0xf]
  %v89 = vld [vmem:[%s0 + $0x128] sm:$0xf]
  %v90 = vld [vmem:[%s0 + $0x12c] sm:$0xf]
  %v91 = vld [vmem:[%s0 + $0x130] sm:$0xf]
  %v92 = vld [vmem:[%s0 + $0x134] sm:$0xf]
  %v93 = vld [vmem:[%s0 + $0x138] sm:$0xf]
  %v94 = vld [vmem:[%s0 + $0x13c] sm:$0xf]
  %v95 = vld [vmem:[%s0 + $0x140] sm:$0xf]
  %v96 = vld [vmem:[%s0 + $0x144] sm:$0xf]
  %v97 = vld [vmem:[%s0 + $0x148] sm:$0xf]
  %v98 = vld [vmem:[%s0 + $0x14c] sm:$0xf]
  %v99 = vld [vmem:[%s0 + $0x150] sm:$0xf]
  %v100 = vld [vmem:[%s0 + $0x154] sm:$0xf]
  %v101 = vld [vmem:[%s0 + $0x158] sm:$0xf]
  %v102 = vld [vmem:[%s0 + $0x15c] sm:$0xf]
  %v103 = vld [vmem:[%s0 + $0x160] sm:$0xf]
  %v104 = vld [vmem:[%s0 + $0x164] sm:$0xf]
  %v105 = vld [vmem:[%s0 + $0x168] sm:$0xf]
  %v106 = vld [vmem:[%s0 + $0x16c] sm:$0xf]
  %v107 = vld [vmem:[%s0 + $0x170] sm:$0xf]
  %v108 = vld [vmem:[%s0 + $0x174] sm:$0xf]
  %v109 = vld [vmem:[%s0 + $0x178] sm:$0xf]
  %v110 = vld [vmem:[%s0 + $0x17c] sm:$0xf]
  %v111 = vld [vmem:[%s0 + $0x180] sm:$0xf]
  %v112 = vld [vmem:[%s0 + $0x184] sm:$0xf]
  %v113 = vld [vmem:[%s0 + $0x188] sm:$0xf]
  %v114 = vld [vmem:[%s0 + $0x18c] sm:$0xf]
  %v115 = vld [vmem:[%s0 + $0x190] sm:$0xf]
  %v116 = vld [vmem:[%s0 + $0x194] sm:$0xf]
  %v117 = vld [vmem:[%s0 + $0x198] sm:$0xf]
  %v118 = vld [vmem:[%s0 + $0x19c] sm:$0xf]
  %v119 = vld [vmem:[%s0 + $0x1a0] sm:$0xf]
  %v120 = vld [vmem:[%s0 + $0x1a4] sm:$0xf]
  %v121 = vld [vmem:[%s0 + $0x1a8] sm:$0xf]
  %v122 = vld [vmem:[%s0 + $0x1ac] sm:$0xf]
  %v123 = vld [vmem:[%s0 + $0x1b0] sm:$0xf]
  %v124 = vld [vmem:[%s0 + $0x1b4] sm:$0xf]
  %v125 = vld [vmem:[%s0 + $0x1b8] sm:$0xf]
  %v126 = vld [vmem:[%s0 + $0x1bc] sm:$0xf]
  %v127 = vld [vmem:[%s0 + $0x1c0] sm:$0xf]
  %v128 = vld [vmem:[%s0 + $0x1c4] sm:$0xf]
  %v129 = vld [vmem:[%s0 + $0x1c8] sm:$0xf]
  %v130 = vld [vmem:[%s0 + $0x1cc] sm:$0xf]
  %v131 = vld [vmem:[%s0 + $0x1d0] sm:$0xf]
  %v132 = vld [vmem:[%s0 + $0x1d4] sm:$0xf]
  %v133 = vld [vmem:[%s0 + $0x1d8] sm:$0xf]
  %v134 = vld [vmem:[%s0 + $0x1dc] sm:$0xf]
  %v135 = vld [vmem:[%s0 + $0x1e0] sm:$0xf]
  %v136 = vld [vmem:[%s0 + $0x1e4] sm:$0xf]
  %v137 = vld [vmem:[%s0 + $0x1e8] sm:$0xf]
  %v138 = vld [vmem:[%s0 + $0x1ec] sm:$0xf]
  %v139 = vld [vmem:[%s0 + $0x1f0] sm:$0xf]
  %v140 = vld [vmem:[%s0 + $0x1f4] sm:$0xf]
  %v141 = vld [vmem:[%s0 + $0x1f8] sm:$0xf]
  %v142 = vld [vmem:[%s0 + $0x1fc] sm:$0xf]
  %v143 = vld [vmem:[%s0 + $0x200] sm:$0xf]
  %v144 = vld [vmem:[%s0 + $0x204] sm:$0xf]
  %v145 = vld [vmem:[%s0 + $0x208] sm:$0xf]
  %v146 = vld [vmem:[%s0 + $0x20c] sm:$0xf]
  %v147 = vld [vmem:[%s0 + $0x210] sm:$0xf]
  %v148 = vld [vmem:[%s0 + $0x214] sm:$0xf]
  %v149 = vld [vmem:[%s0 + $0x218] sm:$0xf]
  %v150 = vld [vmem:[%s0 + $0x21c] sm:$0xf]
  %v151 = vld [vmem:[%s0 + $0x220] sm:$0xf]
  %v152 = vld [vmem:[%s0 + $0x224] sm:$0xf]
  %v153 = vld [vmem:[%s0 + $0x228] sm:$0xf]
  %v154 = vld [vmem:[%s0 + $0x22c] sm:$0xf]
  %v155 = vld [vmem:[%s0 + $0x230] sm:$0xf]
  %v156 = vld [vmem:[%s0 + $0x234] sm:$0xf]
  %v157 = vld [vmem:[%s0 + $0x238] sm:$0xf]
  %v158 = vld [vmem:[%s0 + $0x23c] sm:$0xf]
  %v159 = vld [vmem:[%s0 + $0x240] sm:$0xf]
  %v160 = vld [vmem:[%s0 + $0x244] sm:$0xf]
  %v161 = vld [vmem:[%s0 + $0x248] sm:$0xf]
  %v162 = vld [vmem:[%s0 + $0x24c] sm:$0xf]
  %v163 = vld [vmem:[%s0 + $0x250] sm:$0xf]
  %v164 = vld [vmem:[%s0 + $0x254] sm:$0xf]
  %v165 = vld [vmem:[%s0 + $0x258] sm:$0xf]
  %v166 = vld [vmem:[%s0 + $0x25c] sm:$0xf]
  %v167 = vld [vmem:[%s0 + $0x260] sm:$0xf]
  %v168 = vld [vmem:[%s0 + $0x264] sm:$0xf]
  %v169 = vld [vmem:[%s0 + $0x268] sm:$0xf]
  %v170 = vld [vmem:[%s0 + $0x26c] sm:$0xf]
  %v171 = vld [vmem:[%s0 + $0x270] sm:$0xf]
  %v172 = vld [vmem:[%s0 + $0x274] sm:$0xf]
  %v173 = vld [vmem:[%s0 + $0x278] sm:$0xf]
  %v174 = vld [vmem:[%s0 + $0x27c] sm:$0xf]
  %v175 = vld [vmem:[%s0 + $0x280] sm:$0xf]
  %v176 = vld [vmem:[%s0 + $0x284] sm:$0xf]
  %v177 = vld [vmem:[%s1] sm:$0xf]
  %v178 = vld [vmem:[%s1 + $0x4] sm:$0xf]
  %v179 = vld [vmem:[%s1 + $0x8] sm:$0xf]
  %v180 = vld [vmem:[%s1 + $0xc] sm:$0xf]
  %v181 = vld [vmem:[%s1 + $0x10] sm:$0x3]
  %v182 = vld [vmem:[%s2] sm:$0x1]
  %v183 = vlaneseq
  %v184 = vshrl.u32 %v183, 7
  %v185 = vsub.s32 0, %v184
  %v186 = vrot.slane %v182, %v185
  %v349 = vunpack.c.l.b16 %v15
  %v350 = vunpack.c.l.b16 %v16
  %v351 = vunpack.c.l.b16 %v17
  %v352 = vunpack.c.l.b16 %v18
  %v353 = vunpack.c.l.b16 %v19
  %v354 = vunpack.c.l.b16 %v20
  %v355 = vunpack.c.l.b16 %v21
  %v356 = vunpack.c.l.b16 %v22
  %v357 = vunpack.c.l.b16 %v23
  %v358 = vunpack.c.l.b16 %v24
  %v359 = vunpack.c.l.b16 %v25
  %v360 = vunpack.c.l.b16 %v26
  %v361 = vunpack.c.l.b16 %v27
  %v362 = vunpack.c.l.b16 %v28
  %v363 = vunpack.c.l.b16 %v29
  %v364 = vunpack.c.l.b16 %v30
  %v365 = vunpack.c.l.b16 %v31
  %v366 = vunpack.c.l.b16 %v32
  %v367 = vunpack.c.l.b16 %v33
  %v368 = vunpack.c.l.b16 %v34
  %v369 = vunpack.c.l.b16 %v35
  %v370 = vunpack.c.l.b16 %v36
  %v371 = vunpack.c.l.b16 %v37
  %v372 = vunpack.c.l.b16 %v38
  %v373 = vunpack.c.l.b16 %v39
  %v374 = vunpack.c.l.b16 %v40
  %v375 = vunpack.c.l.b16 %v41
  %v376 = vunpack.c.l.b16 %v42
  %v377 = vunpack.c.l.b16 %v43
  %v378 = vunpack.c.l.b16 %v44
  %v379 = vunpack.c.l.b16 %v45
  %v380 = vunpack.c.l.b16 %v46
  %v381 = vunpack.c.l.b16 %v47
  %v382 = vunpack.c.l.b16 %v48
  %v383 = vunpack.c.l.b16 %v49
  %v384 = vunpack.c.l.b16 %v50
  %v385 = vunpack.c.l.b16 %v51
  %v386 = vunpack.c.l.b16 %v52
  %v387 = vunpack.c.l.b16 %v53
  %v388 = vunpack.c.l.b16 %v54
  %v389 = vunpack.c.l.b16 %v55
  %v390 = vunpack.c.l.b16 %v56
  %v391 = vunpack.c.l.b16 %v57
  %v392 = vunpack.c.l.b16 %v58
  %v393 = vunpack.c.l.b16 %v59
  %v394 = vunpack.c.l.b16 %v60
  %v395 = vunpack.c.l.b16 %v61
  %v396 = vunpack.c.l.b16 %v62
  %v397 = vunpack.c.l.b16 %v63
  %v398 = vunpack.c.l.b16 %v64
  %v399 = vunpack.c.l.b16 %v65
  %v400 = vunpack.c.l.b16 %v66
  %v401 = vunpack.c.l.b16 %v67
  %v402 = vunpack.c.l.b16 %v68
  %v403 = vunpack.c.l.b16 %v69
  %v404 = vunpack.c.l.b16 %v70
  %v405 = vunpack.c.l.b16 %v71
  %v406 = vunpack.c.l.b16 %v72
  %v407 = vunpack.c.l.b16 %v73
  %v408 = vunpack.c.l.b16 %v74
  %v409 = vunpack.c.l.b16 %v75
  %v410 = vunpack.c.l.b16 %v76
  %v411 = vunpack.c.l.b16 %v77
  %v412 = vunpack.c.l.b16 %v78
  %v413 = vunpack.c.l.b16 %v79
  %v414 = vunpack.c.l.b16 %v80
  %v415 = vunpack.c.l.b16 %v81
  %v416 = vunpack.c.l.b16 %v82
  %v417 = vunpack.c.l.b16 %v83
  %v418 = vunpack.c.l.b16 %v84
  %v419 = vunpack.c.l.b16 %v85
  %v420 = vunpack.c.l.b16 %v86
  %v421 = vunpack.c.l.b16 %v87
  %v422 = vunpack.c.l.b16 %v88
  %v423 = vunpack.c.l.b16 %v89
  %v424 = vunpack.c.l.b16 %v90
  %v425 = vunpack.c.l.b16 %v91
  %v426 = vunpack.c.l.b16 %v92
  %v427 = vunpack.c.l.b16 %v93
  %v428 = vunpack.c.l.b16 %v94
  %v429 = vunpack.c.l.b16 %v95
  %v430 = vunpack.c.l.b16 %v96
  %v431 = vunpack.c.l.b16 %v97
  %v432 = vunpack.c.l.b16 %v98
  %v433 = vunpack.c.l.b16 %v99
  %v434 = vunpack.c.l.b16 %v100
  %v435 = vunpack.c.l.b16 %v101
  %v436 = vunpack.c.l.b16 %v102
  %v437 = vunpack.c.l.b16 %v103
  %v438 = vunpack.c.l.b16 %v104
  %v439 = vunpack.c.l.b16 %v105
  %v440 = vunpack.c.l.b16 %v106
  %v441 = vunpack.c.l.b16 %v107
  %v442 = vunpack.c.l.b16 %v108
  %v443 = vunpack.c.l.b16 %v109
  %v444 = vunpack.c.l.b16 %v110
  %v445 = vunpack.c.l.b16 %v111
  %v446 = vunpack.c.l.b16 %v112
  %v447 = vunpack.c.l.b16 %v113
  %v448 = vunpack.c.l.b16 %v114
  %v449 = vunpack.c.l.b16 %v115
  %v450 = vunpack.c.l.b16 %v116
  %v451 = vunpack.c.l.b16 %v117
  %v452 = vunpack.c.l.b16 %v118
  %v453 = vunpack.c.l.b16 %v119
  %v454 = vunpack.c.l.b16 %v120
  %v455 = vunpack.c.l.b16 %v121
  %v456 = vunpack.c.l.b16 %v122
  %v457 = vunpack.c.l.b16 %v123
  %v458 = vunpack.c.l.b16 %v124
  %v459 = vunpack.c.l.b16 %v125
  %v460 = vunpack.c.l.b16 %v126
  %v461 = vunpack.c.l.b16 %v127
  %v462 = vunpack.c.l.b16 %v128
  %v463 = vunpack.c.l.b16 %v129
  %v464 = vunpack.c.l.b16 %v130
  %v465 = vunpack.c.l.b16 %v131
  %v466 = vunpack.c.l.b16 %v132
  %v467 = vunpack.c.l.b16 %v133
  %v468 = vunpack.c.l.b16 %v134
  %v469 = vunpack.c.l.b16 %v135
  %v470 = vunpack.c.l.b16 %v136
  %v471 = vunpack.c.l.b16 %v137
  %v472 = vunpack.c.l.b16 %v138
  %v473 = vunpack.c.l.b16 %v139
  %v474 = vunpack.c.l.b16 %v140
  %v475 = vunpack.c.l.b16 %v141
  %v476 = vunpack.c.l.b16 %v142
  %v477 = vunpack.c.l.b16 %v143
  %v478 = vunpack.c.l.b16 %v144
  %v479 = vunpack.c.l.b16 %v145
  %v480 = vunpack.c.l.b16 %v146
  %v481 = vunpack.c.l.b16 %v147
  %v482 = vunpack.c.l.b16 %v148
  %v483 = vunpack.c.l.b16 %v149
  %v484 = vunpack.c.l.b16 %v150
  %v485 = vunpack.c.l.b16 %v151
  %v486 = vunpack.c.l.b16 %v152
  %v487 = vunpack.c.l.b16 %v153
  %v488 = vunpack.c.l.b16 %v154
  %v489 = vunpack.c.l.b16 %v155
  %v490 = vunpack.c.l.b16 %v156
  %v491 = vunpack.c.l.b16 %v157
  %v492 = vunpack.c.l.b16 %v158
  %v493 = vunpack.c.l.b16 %v159
  %v494 = vunpack.c.l.b16 %v160
  %v495 = vunpack.c.l.b16 %v161
  %v496 = vunpack.c.l.b16 %v162
  %v497 = vunpack.c.l.b16 %v163
  %v498 = vunpack.c.l.b16 %v164
  %v499 = vunpack.c.l.b16 %v165
  %v500 = vunpack.c.l.b16 %v166
  %v501 = vunpack.c.l.b16 %v167
  %v502 = vunpack.c.l.b16 %v168
  %v503 = vunpack.c.l.b16 %v169
  %v504 = vunpack.c.l.b16 %v170
  %v505 = vunpack.c.l.b16 %v171
  %v506 = vunpack.c.l.b16 %v172
  %v507 = vunpack.c.l.b16 %v173
  %v508 = vunpack.c.l.b16 %v174
  %v509 = vunpack.c.l.b16 %v175
  %v510 = vunpack.c.l.b16 %v176
  %v511 = vpack.c.b16 %v350, %v349
  %v512 = vpack.c.b16 %v352, %v351
  %v513 = vpack.c.b16 %v354, %v353
  %v514 = vpack.c.b16 %v356, %v355
  %v515 = vpack.c.b16 %v358, %v357
  %v516 = vpack.c.b16 %v360, %v359
  %v517 = vpack.c.b16 %v362, %v361
  %v518 = vpack.c.b16 %v364, %v363
  %v519 = vpack.c.b16 %v366, %v365
  %v520 = vpack.c.b16 %v368, %v367
  %v521 = vpack.c.b16 %v370, %v369
  %v522 = vpack.c.b16 %v372, %v371
  %v523 = vpack.c.b16 %v374, %v373
  %v524 = vpack.c.b16 %v376, %v375
  %v525 = vpack.c.b16 %v378, %v377
  %v526 = vpack.c.b16 %v380, %v379
  %v527 = vpack.c.b16 %v382, %v381
  %v528 = vpack.c.b16 %v384, %v383
  %v529 = vpack.c.b16 %v386, %v385
  %v530 = vpack.c.b16 %v388, %v387
  %v531 = vpack.c.b16 %v390, %v389
  %v532 = vpack.c.b16 %v392, %v391
  %v533 = vpack.c.b16 %v394, %v393
  %v534 = vpack.c.b16 %v396, %v395
  %v535 = vpack.c.b16 %v398, %v397
  %v536 = vpack.c.b16 %v400, %v399
  %v537 = vpack.c.b16 %v402, %v401
  %v538 = vpack.c.b16 %v404, %v403
  %v539 = vpack.c.b16 %v406, %v405
  %v540 = vpack.c.b16 %v408, %v407
  %v541 = vpack.c.b16 %v410, %v409
  %v542 = vpack.c.b16 %v412, %v411
  %v543 = vpack.c.b16 %v414, %v413
  %v544 = vpack.c.b16 %v416, %v415
  %v545 = vpack.c.b16 %v418, %v417
  %v546 = vpack.c.b16 %v420, %v419
  %v547 = vpack.c.b16 %v422, %v421
  %v548 = vpack.c.b16 %v424, %v423
  %v549 = vpack.c.b16 %v426, %v425
  %v550 = vpack.c.b16 %v428, %v427
  %v551 = vpack.c.b16 %v430, %v429
  %v552 = vpack.c.b16 %v432, %v431
  %v553 = vpack.c.b16 %v434, %v433
  %v554 = vpack.c.b16 %v436, %v435
  %v555 = vpack.c.b16 %v438, %v437
  %v556 = vpack.c.b16 %v440, %v439
  %v557 = vpack.c.b16 %v442, %v441
  %v558 = vpack.c.b16 %v444, %v443
  %v559 = vpack.c.b16 %v446, %v445
  %v560 = vpack.c.b16 %v448, %v447
  %v561 = vpack.c.b16 %v450, %v449
  %v562 = vpack.c.b16 %v452, %v451
  %v563 = vpack.c.b16 %v454, %v453
  %v564 = vpack.c.b16 %v456, %v455
  %v565 = vpack.c.b16 %v458, %v457
  %v566 = vpack.c.b16 %v460, %v459
  %v567 = vpack.c.b16 %v462, %v461
  %v568 = vpack.c.b16 %v464, %v463
  %v569 = vpack.c.b16 %v466, %v465
  %v570 = vpack.c.b16 %v468, %v467
  %v571 = vpack.c.b16 %v470, %v469
  %v572 = vpack.c.b16 %v472, %v471
  %v573 = vpack.c.b16 %v474, %v473
  %v574 = vpack.c.b16 %v476, %v475
  %v575 = vpack.c.b16 %v478, %v477
  %v576 = vpack.c.b16 %v480, %v479
  %v577 = vpack.c.b16 %v482, %v481
  %v578 = vpack.c.b16 %v484, %v483
  %v579 = vpack.c.b16 %v486, %v485
  %v580 = vpack.c.b16 %v488, %v487
  %v581 = vpack.c.b16 %v490, %v489
  %v582 = vpack.c.b16 %v492, %v491
  %v583 = vpack.c.b16 %v494, %v493
  %v584 = vpack.c.b16 %v496, %v495
  %v585 = vpack.c.b16 %v498, %v497
  %v586 = vpack.c.b16 %v500, %v499
  %v587 = vpack.c.b16 %v502, %v501
  %v588 = vpack.c.b16 %v504, %v503
  %v589 = vpack.c.b16 %v506, %v505
  %v590 = vpack.c.b16 %v508, %v507
  %v591 = vpack.c.b16 %v510, %v509
  %v597 = vunpack.c.l.b16 %v177
  %v598 = vunpack.c.l.b16 %v178
  %v599 = vunpack.c.l.b16 %v179
  %v600 = vunpack.c.l.b16 %v180
  %v601 = vunpack.c.l.b16 %v181
  %v602 = vpack.c.b16 %v598, %v597
  %v603 = vpack.c.b16 %v600, %v599
  %v604 = vpack.c.b16 %v601, %v601
  %vm607 = vcmask 293888
  %v609 = vsel %vm607, %v511, 0
  %v612 = vsel %vm607, %v512, 0
  %v615 = vsel %vm607, %v513, 0
  %v618 = vsel %vm607, %v514, 0
  %v621 = vsel %vm607, %v515, 0
  %v624 = vsel %vm607, %v516, 0
  %v627 = vsel %vm607, %v517, 0
  %v630 = vsel %vm607, %v518, 0
  %v633 = vsel %vm607, %v519, 0
  %v636 = vsel %vm607, %v520, 0
  %v639 = vsel %vm607, %v521, 0
  %v642 = vsel %vm607, %v522, 0
  %v645 = vsel %vm607, %v523, 0
  %v648 = vsel %vm607, %v524, 0
  %v651 = vsel %vm607, %v525, 0
  %v654 = vsel %vm607, %v526, 0
  %v657 = vsel %vm607, %v527, 0
  %v660 = vsel %vm607, %v528, 0
  %v663 = vsel %vm607, %v529, 0
  %v666 = vsel %vm607, %v530, 0
  %v669 = vsel %vm607, %v531, 0
  %v672 = vsel %vm607, %v532, 0
  %v675 = vsel %vm607, %v533, 0
  %v678 = vsel %vm607, %v534, 0
  %v681 = vsel %vm607, %v535, 0
  %v684 = vsel %vm607, %v536, 0
  %v687 = vsel %vm607, %v537, 0
  %v690 = vsel %vm607, %v538, 0
  %v693 = vsel %vm607, %v539, 0
  %v696 = vsel %vm607, %v540, 0
  %v699 = vsel %vm607, %v541, 0
  %v702 = vsel %vm607, %v542, 0
  %v705 = vsel %vm607, %v543, 0
  %v708 = vsel %vm607, %v544, 0
  %v711 = vsel %vm607, %v545, 0
  %v714 = vsel %vm607, %v546, 0
  %v717 = vsel %vm607, %v547, 0
  %v720 = vsel %vm607, %v548, 0
  %v723 = vsel %vm607, %v549, 0
  %v726 = vsel %vm607, %v550, 0
  %v729 = vsel %vm607, %v551, 0
  %v732 = vsel %vm607, %v552, 0
  %v735 = vsel %vm607, %v553, 0
  %v738 = vsel %vm607, %v554, 0
  %v741 = vsel %vm607, %v555, 0
  %v744 = vsel %vm607, %v556, 0
  %v747 = vsel %vm607, %v557, 0
  %v750 = vsel %vm607, %v558, 0
  %v753 = vsel %vm607, %v559, 0
  %v756 = vsel %vm607, %v560, 0
  %v759 = vsel %vm607, %v561, 0
  %v762 = vsel %vm607, %v562, 0
  %v765 = vsel %vm607, %v563, 0
  %v768 = vsel %vm607, %v564, 0
  %v771 = vsel %vm607, %v565, 0
  %v774 = vsel %vm607, %v566, 0
  %v777 = vsel %vm607, %v567, 0
  %v780 = vsel %vm607, %v568, 0
  %v783 = vsel %vm607, %v569, 0
  %v786 = vsel %vm607, %v570, 0
  %v789 = vsel %vm607, %v571, 0
  %v792 = vsel %vm607, %v572, 0
  %v795 = vsel %vm607, %v573, 0
  %v798 = vsel %vm607, %v574, 0
  %v801 = vsel %vm607, %v575, 0
  %v804 = vsel %vm607, %v576, 0
  %v807 = vsel %vm607, %v577, 0
  %v810 = vsel %vm607, %v578, 0
  %v813 = vsel %vm607, %v579, 0
  %v816 = vsel %vm607, %v580, 0
  %v819 = vsel %vm607, %v581, 0
  %v822 = vsel %vm607, %v582, 0
  %v825 = vsel %vm607, %v583, 0
  %v828 = vsel %vm607, %v584, 0
  %v831 = vsel %vm607, %v585, 0
  %v834 = vsel %vm607, %v586, 0
  %v837 = vsel %vm607, %v587, 0
  %v840 = vsel %vm607, %v588, 0
  %v843 = vsel %vm607, %v589, 0
  %v846 = vsel %vm607, %v590, 0
  %v849 = vsel %vm607, %v591, 0
  %vm851 = vcmask 1041408
  %v853 = vsel %vm851, %v604, 0
  %855 = vmatprep.subr.bf16.mxu0 0
  %856 = vmatpush1.bf16.msra.mxu0 %v602
  %857 = vmatprep.subr.bf16.mxu0 0
  %858 = vmatpush1.bf16.msra.mxu0 %v603
  %859 = vmatprep.subr.bf16.mxu0 0
  %860 = vmatpush1.bf16.msra.mxu0 %v853
  %861 = vmatprep.subr.bf16.mxu0 0
  %862 = vmatpush1.bf16.msra.mxu0 0
  %863 = vmatprep.subr.bf16.mxu0 0
  %864 = vmatpush1.bf16.msra.mxu0 0
  %865 = vmatprep.subr.bf16.mxu0 0
  %866 = vmatpush1.bf16.msra.mxu0 0
  %867 = vmatprep.subr.bf16.mxu0 0
  %868 = vmatpush1.bf16.msra.mxu0 0
  %869 = vmatprep.subr.bf16.mxu0 0
  %870 = vmatpush1.bf16.msra.mxu0 0
  %871 = vmatprep.subr.bf16.mxu0 0
  %872 = vmatpush1.bf16.msra.mxu0 0
  %873 = vmatprep.subr.bf16.mxu0 0
  %874 = vmatpush1.bf16.msra.mxu0 0
  %875 = vmatprep.subr.bf16.mxu0 0
  %876 = vmatpush1.bf16.msra.mxu0 0
  %877 = vmatprep.subr.bf16.mxu0 0
  %878 = vmatpush1.bf16.msra.mxu0 0
  %879 = vmatprep.subr.bf16.mxu0 0
  %880 = vmatpush1.bf16.msra.mxu0 0
  %881 = vmatprep.subr.bf16.mxu0 0
  %882 = vmatpush1.bf16.msra.mxu0 0
  %883 = vmatprep.subr.bf16.mxu0 0
  %884 = vmatpush1.bf16.msra.mxu0 0
  %885 = vmatprep.subr.bf16.mxu0 0
  %886 = vmatpush1.bf16.msra.mxu0 0
  %887 = vmatprep.mubr.bf16.mxu0 0
  %888 = vmatmul.mubr.bf16.gmra.mrb[0].mxu0 %v609
  %v889 = vpop.f32.mrb[0].mxu0
  %v890 = vadd.f32 %v186, %v889
  %v891 = vpop.f32.mrb[0].mxu0
  %v892 = vpop.f32.mrb[0].mxu0
  %v893 = vadd.f32 %v186, %v892
  %v894 = vpop.f32.mrb[0].mxu0
  %895 = vmatprep.mubr.bf16.mxu0 0
  %896 = vmatmul.mubr.bf16.gmra.mrb[0].mxu0 %v612
  %v897 = vpop.f32.mrb[0].mxu0
  %v898 = vadd.f32 %v186, %v897
  %v899 = vpop.f32.mrb[0].mxu0
  %v900 = vpop.f32.mrb[0].mxu0
  %v901 = vadd.f32 %v186, %v900
  %v902 = vpop.f32.mrb[0].mxu0
  %903 = vmatprep.mubr.bf16.mxu0 0
  %904 = vmatmul.mubr.bf16.gmra.mrb[0].mxu0 %v615
  %v905 = vpop.f32.mrb[0].mxu0
  %v906 = vadd.f32 %v186, %v905
  %v907 = vpop.f32.mrb[0].mxu0
  %v908 = vpop.f32.mrb[0].mxu0
  %v909 = vadd.f32 %v186, %v908
  %v910 = vpop.f32.mrb[0].mxu0
  %911 = vmatprep.mubr.bf16.mxu0 0
  %912 = vmatmul.mubr.bf16.gmra.mrb[0].mxu0 %v618
  %v913 = vpop.f32.mrb[0].mxu0
  %v914 = vadd.f32 %v186, %v913
  %v915 = vpop.f32.mrb[0].mxu0
  %v916 = vpop.f32.mrb[0].mxu0
  %v917 = vadd.f32 %v186, %v916
  %v918 = vpop.f32.mrb[0].mxu0
  %919 = vmatprep.mubr.bf16.mxu0 0
  %920 = vmatmul.mubr.bf16.gmra.mrb[0].mxu0 %v621
  %v921 = vpop.f32.mrb[0].mxu0
  %v922 = vadd.f32 %v186, %v921
  %v923 = vpop.f32.mrb[0].mxu0
  %v924 = vpop.f32.mrb[0].mxu0
  %v925 = vadd.f32 %v186, %v924
  %v926 = vpop.f32.mrb[0].mxu0
  %927 = vmatprep.mubr.bf16.mxu0 0
  %928 = vmatmul.mubr.bf16.gmra.mrb[0].mxu0 %v624
  %v929 = vpop.f32.mrb[0].mxu0
  %v930 = vadd.f32 %v186, %v929
  %v931 = vpop.f32.mrb[0].mxu0
  %v932 = vpop.f32.mrb[0].mxu0
  %v933 = vadd.f32 %v186, %v932
  %v934 = vpop.f32.mrb[0].mxu0
  %935 = vmatprep.mubr.bf16.mxu0 0
  %936 = vmatmul.mubr.bf16.gmra.mrb[0].mxu0 %v627
  %v937 = vpop.f32.mrb[0].mxu0
  %v938 = vadd.f32 %v186, %v937
  %v939 = vpop.f32.mrb[0].mxu0
  %v940 = vpop.f32.mrb[0].mxu0
  %v941 = vadd.f32 %v186, %v940
  %v942 = vpop.f32.mrb[0].mxu0
  %943 = vmatprep.mubr.bf16.mxu0 0
  %944 = vmatmul.mubr.bf16.gmra.mrb[0].mxu0 %v630
  %v945 = vpop.f32.mrb[0].mxu0
  %v946 = vadd.f32 %v186, %v945
  %v947 = vpop.f32.mrb[0].mxu0
  %v948 = vpop.f32.mrb[0].mxu0
  %v949 = vadd.f32 %v186, %v948
  %v950 = vpop.f32.mrb[0].mxu0
  %951 = vmatprep.mubr.bf16.mxu0 0
  %952 = vmatmul.mubr.bf16.gmra.mrb[0].mxu0 %v633
  %v953 = vpop.f32.mrb[0].mxu0
  %v954 = vadd.f32 %v186, %v953
  %v955 = vpop.f32.mrb[0].mxu0
  %v956 = vpop.f32.mrb[0].mxu0
  %v957 = vadd.f32 %v186, %v956
  %v958 = vpop.f32.mrb[0].mxu0
  %959 = vmatprep.mubr.bf16.mxu0 0
  %960 = vmatmul.mubr.bf16.gmra.mrb[0].mxu0 %v636
  %v961 = vpop.f32.mrb[0].mxu0
  %v962 = vadd.f32 %v186, %v961
  %v963 = vpop.f32.mrb[0].mxu0
  %v964 = vpop.f32.mrb[0].mxu0
  %v965 = vadd.f32 %v186, %v964
  %v966 = vpop.f32.mrb[0].mxu0
  %967 = vmatprep.mubr.bf16.mxu0 0
  %968 = vmatmul.mubr.bf16.gmra.mrb[0].mxu0 %v639
  %v969 = vpop.f32.mrb[0].mxu0
  %v970 = vadd.f32 %v186, %v969
  %v971 = vpop.f32.mrb[0].mxu0
  %v972 = vpop.f32.mrb[0].mxu0
  %v973 = vadd.f32 %v186, %v972
  %v974 = vpop.f32.mrb[0].mxu0
  %975 = vmatprep.mubr.bf16.mxu0 0
  %976 = vmatmul.mubr.bf16.gmra.mrb[0].mxu0 %v642
  %v977 = vpop.f32.mrb[0].mxu0
  %v978 = vadd.f32 %v186, %v977
  %v979 = vpop.f32.mrb[0].mxu0
  %v980 = vpop.f32.mrb[0].mxu0
  %v981 = vadd.f32 %v186, %v980
  %v982 = vpop.f32.mrb[0].mxu0
  %983 = vmatprep.mubr.bf16.mxu0 0
  %984 = vmatmul.mubr.bf16.gmra.mrb[0].mxu0 %v645
  %v985 = vpop.f32.mrb[0].mxu0
  %v986 = vadd.f32 %v186, %v985
  %v987 = vpop.f32.mrb[0].mxu0
  %v988 = vpop.f32.mrb[0].mxu0
  %v989 = vadd.f32 %v186, %v988
  %v990 = vpop.f32.mrb[0].mxu0
  %991 = vmatprep.mubr.bf16.mxu0 0
  %992 = vmatmul.mubr.bf16.gmra.mrb[0].mxu0 %v648
  %v993 = vpop.f32.mrb[0].mxu0
  %v994 = vadd.f32 %v186, %v993
  %v995 = vpop.f32.mrb[0].mxu0
  %v996 = vpop.f32.mrb[0].mxu0
  %v997 = vadd.f32 %v186, %v996
  %v998 = vpop.f32.mrb[0].mxu0
  %999 = vmatprep.mubr.bf16.mxu0 0
  %1000 = vmatmul.mubr.bf16.gmra.mrb[0].mxu0 %v651
  %v1001 = vpop.f32.mrb[0].mxu0
  %v1002 = vadd.f32 %v186, %v1001
  %v1003 = vpop.f32.mrb[0].mxu0
  %v1004 = vpop.f32.mrb[0].mxu0
  %v1005 = vadd.f32 %v186, %v1004
  %v1006 = vpop.f32.mrb[0].mxu0
  %1007 = vmatprep.mubr.bf16.mxu0 0
  %1008 = vmatmul.mubr.bf16.gmra.mrb[0].mxu0 %v654
  %v1009 = vpop.f32.mrb[0].mxu0
  %v1010 = vadd.f32 %v186, %v1009
  %v1011 = vpop.f32.mrb[0].mxu0
  %v1012 = vpop.f32.mrb[0].mxu0
  %v1013 = vadd.f32 %v186, %v1012
  %v1014 = vpop.f32.mrb[0].mxu0
  %1015 = vmatprep.mubr.bf16.mxu0 0
  %1016 = vmatmul.mubr.bf16.gmra.mrb[0].mxu0 %v657
  %v1017 = vpop.f32.mrb[0].mxu0
  %v1018 = vadd.f32 %v186, %v1017
  %v1019 = vpop.f32.mrb[0].mxu0
  %v1020 = vpop.f32.mrb[0].mxu0
  %v1021 = vadd.f32 %v186, %v1020
  %v1022 = vpop.f32.mrb[0].mxu0
  %1023 = vmatprep.mubr.bf16.mxu0 0
  %1024 = vmatmul.mubr.bf16.gmra.mrb[0].mxu0 %v660
  %v1025 = vpop.f32.mrb[0].mxu0
  %v1026 = vadd.f32 %v186, %v1025
  %v1027 = vpop.f32.mrb[0].mxu0
  %v1028 = vpop.f32.mrb[0].mxu0
  %v1029 = vadd.f32 %v186, %v1028
  %v1030 = vpop.f32.mrb[0].mxu0
  %1031 = vmatprep.mubr.bf16.mxu0 0
  %1032 = vmatmul.mubr.bf16.gmra.mrb[0].mxu0 %v663
  %v1033 = vpop.f32.mrb[0].mxu0
  %v1034 = vadd.f32 %v186, %v1033
  %v1035 = vpop.f32.mrb[0].mxu0
  %v1036 = vpop.f32.mrb[0].mxu0
  %v1037 = vadd.f32 %v186, %v1036
  %v1038 = vpop.f32.mrb[0].mxu0
  %1039 = vmatprep.mubr.bf16.mxu0 0
  %1040 = vmatmul.mubr.bf16.gmra.mrb[0].mxu0 %v666
  %v1041 = vpop.f32.mrb[0].mxu0
  %v1042 = vadd.f32 %v186, %v1041
  %v1043 = vpop.f32.mrb[0].mxu0
  %v1044 = vpop.f32.mrb[0].mxu0
  %v1045 = vadd.f32 %v186, %v1044
  %v1046 = vpop.f32.mrb[0].mxu0
  %1047 = vmatprep.mubr.bf16.mxu0 0
  %1048 = vmatmul.mubr.bf16.gmra.mrb[0].mxu0 %v669
  %v1049 = vpop.f32.mrb[0].mxu0
  %v1050 = vadd.f32 %v186, %v1049
  %v1051 = vpop.f32.mrb[0].mxu0
  %v1052 = vpop.f32.mrb[0].mxu0
  %v1053 = vadd.f32 %v186, %v1052
  %v1054 = vpop.f32.mrb[0].mxu0
  %1055 = vmatprep.mubr.bf16.mxu0 0
  %1056 = vmatmul.mubr.bf16.gmra.mrb[0].mxu0 %v672
  %v1057 = vpop.f32.mrb[0].mxu0
  %v1058 = vadd.f32 %v186, %v1057
  %v1059 = vpop.f32.mrb[0].mxu0
  %v1060 = vpop.f32.mrb[0].mxu0
  %v1061 = vadd.f32 %v186, %v1060
  %v1062 = vpop.f32.mrb[0].mxu0
  %1063 = vmatprep.mubr.bf16.mxu0 0
  %1064 = vmatmul.mubr.bf16.gmra.mrb[0].mxu0 %v675
  %v1065 = vpop.f32.mrb[0].mxu0
  %v1066 = vadd.f32 %v186, %v1065
  %v1067 = vpop.f32.mrb[0].mxu0
  %v1068 = vpop.f32.mrb[0].mxu0
  %v1069 = vadd.f32 %v186, %v1068
  %v1070 = vpop.f32.mrb[0].mxu0
  %1071 = vmatprep.mubr.bf16.mxu0 0
  %1072 = vmatmul.mubr.bf16.gmra.mrb[0].mxu0 %v678
  %v1073 = vpop.f32.mrb[0].mxu0
  %v1074 = vadd.f32 %v186, %v1073
  %v1075 = vpop.f32.mrb[0].mxu0
  %v1076 = vpop.f32.mrb[0].mxu0
  %v1077 = vadd.f32 %v186, %v1076
  %v1078 = vpop.f32.mrb[0].mxu0
  %1079 = vmatprep.mubr.bf16.mxu0 0
  %1080 = vmatmul.mubr.bf16.gmra.mrb[0].mxu0 %v681
  %v1081 = vpop.f32.mrb[0].mxu0
  %v1082 = vadd.f32 %v186, %v1081
  %v1083 = vpop.f32.mrb[0].mxu0
  %v1084 = vpop.f32.mrb[0].mxu0
  %v1085 = vadd.f32 %v186, %v1084
  %v1086 = vpop.f32.mrb[0].mxu0
  %1087 = vmatprep.mubr.bf16.mxu0 0
  %1088 = vmatmul.mubr.bf16.gmra.mrb[0].mxu0 %v684
  %v1089 = vpop.f32.mrb[0].mxu0
  %v1090 = vadd.f32 %v186, %v1089
  %v1091 = vpop.f32.mrb[0].mxu0
  %v1092 = vpop.f32.mrb[0].mxu0
  %v1093 = vadd.f32 %v186, %v1092
  %v1094 = vpop.f32.mrb[0].mxu0
  %1095 = vmatprep.mubr.bf16.mxu0 0
  %1096 = vmatmul.mubr.bf16.gmra.mrb[0].mxu0 %v687
  %v1097 = vpop.f32.mrb[0].mxu0
  %v1098 = vadd.f32 %v186, %v1097
  %v1099 = vpop.f32.mrb[0].mxu0
  %v1100 = vpop.f32.mrb[0].mxu0
  %v1101 = vadd.f32 %v186, %v1100
  %v1102 = vpop.f32.mrb[0].mxu0
  %1103 = vmatprep.mubr.bf16.mxu0 0
  %1104 = vmatmul.mubr.bf16.gmra.mrb[0].mxu0 %v690
  %v1105 = vpop.f32.mrb[0].mxu0
  %v1106 = vadd.f32 %v186, %v1105
  %v1107 = vpop.f32.mrb[0].mxu0
  %v1108 = vpop.f32.mrb[0].mxu0
  %v1109 = vadd.f32 %v186, %v1108
  %v1110 = vpop.f32.mrb[0].mxu0
  %1111 = vmatprep.mubr.bf16.mxu0 0
  %1112 = vmatmul.mubr.bf16.gmra.mrb[0].mxu0 %v693
  %v1113 = vpop.f32.mrb[0].mxu0
  %v1114 = vadd.f32 %v186, %v1113
  %v1115 = vpop.f32.mrb[0].mxu0
  %v1116 = vpop.f32.mrb[0].mxu0
  %v1117 = vadd.f32 %v186, %v1116
  %v1118 = vpop.f32.mrb[0].mxu0
  %1119 = vmatprep.mubr.bf16.mxu0 0
  %1120 = vmatmul.mubr.bf16.gmra.mrb[0].mxu0 %v696
  %v1121 = vpop.f32.mrb[0].mxu0
  %v1122 = vadd.f32 %v186, %v1121
  %v1123 = vpop.f32.mrb[0].mxu0
  %v1124 = vpop.f32.mrb[0].mxu0
  %v1125 = vadd.f32 %v186, %v1124
  %v1126 = vpop.f32.mrb[0].mxu0
  %1127 = vmatprep.mubr.bf16.mxu0 0
  %1128 = vmatmul.mubr.bf16.gmra.mrb[0].mxu0 %v699
  %v1129 = vpop.f32.mrb[0].mxu0
  %v1130 = vadd.f32 %v186, %v1129
  %v1131 = vpop.f32.mrb[0].mxu0
  %v1132 = vpop.f32.mrb[0].mxu0
  %v1133 = vadd.f32 %v186, %v1132
  %v1134 = vpop.f32.mrb[0].mxu0
  %1135 = vmatprep.mubr.bf16.mxu0 0
  %1136 = vmatmul.mubr.bf16.gmra.mrb[0].mxu0 %v702
  %v1137 = vpop.f32.mrb[0].mxu0
  %v1138 = vadd.f32 %v186, %v1137
  %v1139 = vpop.f32.mrb[0].mxu0
  %v1140 = vpop.f32.mrb[0].mxu0
  %v1141 = vadd.f32 %v186, %v1140
  %v1142 = vpop.f32.mrb[0].mxu0
  %1143 = vmatprep.mubr.bf16.mxu0 0
  %1144 = vmatmul.mubr.bf16.gmra.mrb[0].mxu0 %v705
  %v1145 = vpop.f32.mrb[0].mxu0
  %v1146 = vadd.f32 %v186, %v1145
  %v1147 = vpop.f32.mrb[0].mxu0
  %v1148 = vpop.f32.mrb[0].mxu0
  %v1149 = vadd.f32 %v186, %v1148
  %v1150 = vpop.f32.mrb[0].mxu0
  %1151 = vmatprep.mubr.bf16.mxu0 0
  %1152 = vmatmul.mubr.bf16.gmra.mrb[0].mxu0 %v708
  %v1153 = vpop.f32.mrb[0].mxu0
  %v1154 = vadd.f32 %v186, %v1153
  %v1155 = vpop.f32.mrb[0].mxu0
  %v1156 = vpop.f32.mrb[0].mxu0
  %v1157 = vadd.f32 %v186, %v1156
  %v1158 = vpop.f32.mrb[0].mxu0
  %1159 = vmatprep.mubr.bf16.mxu0 0
  %1160 = vmatmul.mubr.bf16.gmra.mrb[0].mxu0 %v711
  %v1161 = vpop.f32.mrb[0].mxu0
  %v1162 = vadd.f32 %v186, %v1161
  %v1163 = vpop.f32.mrb[0].mxu0
  %v1164 = vpop.f32.mrb[0].mxu0
  %v1165 = vadd.f32 %v186, %v1164
  %v1166 = vpop.f32.mrb[0].mxu0
  %1167 = vmatprep.mubr.bf16.mxu0 0
  %1168 = vmatmul.mubr.bf16.gmra.mrb[0].mxu0 %v714
  %v1169 = vpop.f32.mrb[0].mxu0
  %v1170 = vadd.f32 %v186, %v1169
  %v1171 = vpop.f32.mrb[0].mxu0
  %v1172 = vpop.f32.mrb[0].mxu0
  %v1173 = vadd.f32 %v186, %v1172
  %v1174 = vpop.f32.mrb[0].mxu0
  %1175 = vmatprep.mubr.bf16.mxu0 0
  %1176 = vmatmul.mubr.bf16.gmra.mrb[0].mxu0 %v717
  %v1177 = vpop.f32.mrb[0].mxu0
  %v1178 = vadd.f32 %v186, %v1177
  %v1179 = vpop.f32.mrb[0].mxu0
  %v1180 = vpop.f32.mrb[0].mxu0
  %v1181 = vadd.f32 %v186, %v1180
  %v1182 = vpop.f32.mrb[0].mxu0
  %1183 = vmatprep.mubr.bf16.mxu0 0
  %1184 = vmatmul.mubr.bf16.gmra.mrb[0].mxu0 %v720
  %v1185 = vpop.f32.mrb[0].mxu0
  %v1186 = vadd.f32 %v186, %v1185
  %v1187 = vpop.f32.mrb[0].mxu0
  %v1188 = vpop.f32.mrb[0].mxu0
  %v1189 = vadd.f32 %v186, %v1188
  %v1190 = vpop.f32.mrb[0].mxu0
  %1191 = vmatprep.mubr.bf16.mxu0 0
  %1192 = vmatmul.mubr.bf16.gmra.mrb[0].mxu0 %v723
  %v1193 = vpop.f32.mrb[0].mxu0
  %v1194 = vadd.f32 %v186, %v1193
  %v1195 = vpop.f32.mrb[0].mxu0
  %v1196 = vpop.f32.mrb[0].mxu0
  %v1197 = vadd.f32 %v186, %v1196
  %v1198 = vpop.f32.mrb[0].mxu0
  %1199 = vmatprep.mubr.bf16.mxu0 0
  %1200 = vmatmul.mubr.bf16.gmra.mrb[0].mxu0 %v726
  %v1201 = vpop.f32.mrb[0].mxu0
  %v1202 = vadd.f32 %v186, %v1201
  %v1203 = vpop.f32.mrb[0].mxu0
  %v1204 = vpop.f32.mrb[0].mxu0
  %v1205 = vadd.f32 %v186, %v1204
  %v1206 = vpop.f32.mrb[0].mxu0
  %1207 = vmatprep.mubr.bf16.mxu0 0
  %1208 = vmatmul.mubr.bf16.gmra.mrb[0].mxu0 %v729
  %v1209 = vpop.f32.mrb[0].mxu0
  %v1210 = vadd.f32 %v186, %v1209
  %v1211 = vpop.f32.mrb[0].mxu0
  %v1212 = vpop.f32.mrb[0].mxu0
  %v1213 = vadd.f32 %v186, %v1212
  %v1214 = vpop.f32.mrb[0].mxu0
  %1215 = vmatprep.mubr.bf16.mxu0 0
  %1216 = vmatmul.mubr.bf16.gmra.mrb[0].mxu0 %v732
  %v1217 = vpop.f32.mrb[0].mxu0
  %v1218 = vadd.f32 %v186, %v1217
  %v1219 = vpop.f32.mrb[0].mxu0
  %v1220 = vpop.f32.mrb[0].mxu0
  %v1221 = vadd.f32 %v186, %v1220
  %v1222 = vpop.f32.mrb[0].mxu0
  %1223 = vmatprep.mubr.bf16.mxu0 0
  %1224 = vmatmul.mubr.bf16.gmra.mrb[0].mxu0 %v735
  %v1225 = vpop.f32.mrb[0].mxu0
  %v1226 = vadd.f32 %v186, %v1225
  %v1227 = vpop.f32.mrb[0].mxu0
  %v1228 = vpop.f32.mrb[0].mxu0
  %v1229 = vadd.f32 %v186, %v1228
  %v1230 = vpop.f32.mrb[0].mxu0
  %1231 = vmatprep.mubr.bf16.mxu0 0
  %1232 = vmatmul.mubr.bf16.gmra.mrb[0].mxu0 %v738
  %v1233 = vpop.f32.mrb[0].mxu0
  %v1234 = vadd.f32 %v186, %v1233
  %v1235 = vpop.f32.mrb[0].mxu0
  %v1236 = vpop.f32.mrb[0].mxu0
  %v1237 = vadd.f32 %v186, %v1236
  %v1238 = vpop.f32.mrb[0].mxu0
  %1239 = vmatprep.mubr.bf16.mxu0 0
  %1240 = vmatmul.mubr.bf16.gmra.mrb[0].mxu0 %v741
  %v1241 = vpop.f32.mrb[0].mxu0
  %v1242 = vadd.f32 %v186, %v1241
  %v1243 = vpop.f32.mrb[0].mxu0
  %v1244 = vpop.f32.mrb[0].mxu0
  %v1245 = vadd.f32 %v186, %v1244
  %v1246 = vpop.f32.mrb[0].mxu0
  %1247 = vmatprep.mubr.bf16.mxu0 0
  %1248 = vmatmul.mubr.bf16.gmra.mrb[0].mxu0 %v744
  %v1249 = vpop.f32.mrb[0].mxu0
  %v1250 = vadd.f32 %v186, %v1249
  %v1251 = vpop.f32.mrb[0].mxu0
  %v1252 = vpop.f32.mrb[0].mxu0
  %v1253 = vadd.f32 %v186, %v1252
  %v1254 = vpop.f32.mrb[0].mxu0
  %1255 = vmatprep.mubr.bf16.mxu0 0
  %1256 = vmatmul.mubr.bf16.gmra.mrb[0].mxu0 %v747
  %v1257 = vpop.f32.mrb[0].mxu0
  %v1258 = vadd.f32 %v186, %v1257
  %v1259 = vpop.f32.mrb[0].mxu0
  %v1260 = vpop.f32.mrb[0].mxu0
  %v1261 = vadd.f32 %v186, %v1260
  %v1262 = vpop.f32.mrb[0].mxu0
  %1263 = vmatprep.mubr.bf16.mxu0 0
  %1264 = vmatmul.mubr.bf16.gmra.mrb[0].mxu0 %v750
  %v1265 = vpop.f32.mrb[0].mxu0
  %v1266 = vadd.f32 %v186, %v1265
  %v1267 = vpop.f32.mrb[0].mxu0
  %v1268 = vpop.f32.mrb[0].mxu0
  %v1269 = vadd.f32 %v186, %v1268
  %v1270 = vpop.f32.mrb[0].mxu0
  %1271 = vmatprep.mubr.bf16.mxu0 0
  %1272 = vmatmul.mubr.bf16.gmra.mrb[0].mxu0 %v753
  %v1273 = vpop.f32.mrb[0].mxu0
  %v1274 = vadd.f32 %v186, %v1273
  %v1275 = vpop.f32.mrb[0].mxu0
  %v1276 = vpop.f32.mrb[0].mxu0
  %v1277 = vadd.f32 %v186, %v1276
  %v1278 = vpop.f32.mrb[0].mxu0
  %1279 = vmatprep.mubr.bf16.mxu0 0
  %1280 = vmatmul.mubr.bf16.gmra.mrb[0].mxu0 %v756
  %v1281 = vpop.f32.mrb[0].mxu0
  %v1282 = vadd.f32 %v186, %v1281
  %v1283 = vpop.f32.mrb[0].mxu0
  %v1284 = vpop.f32.mrb[0].mxu0
  %v1285 = vadd.f32 %v186, %v1284
  %v1286 = vpop.f32.mrb[0].mxu0
  %1287 = vmatprep.mubr.bf16.mxu0 0
  %1288 = vmatmul.mubr.bf16.gmra.mrb[0].mxu0 %v759
  %v1289 = vpop.f32.mrb[0].mxu0
  %v1290 = vadd.f32 %v186, %v1289
  %v1291 = vpop.f32.mrb[0].mxu0
  %v1292 = vpop.f32.mrb[0].mxu0
  %v1293 = vadd.f32 %v186, %v1292
  %v1294 = vpop.f32.mrb[0].mxu0
  %1295 = vmatprep.mubr.bf16.mxu0 0
  %1296 = vmatmul.mubr.bf16.gmra.mrb[0].mxu0 %v762
  %v1297 = vpop.f32.mrb[0].mxu0
  %v1298 = vadd.f32 %v186, %v1297
  %v1299 = vpop.f32.mrb[0].mxu0
  %v1300 = vpop.f32.mrb[0].mxu0
  %v1301 = vadd.f32 %v186, %v1300
  %v1302 = vpop.f32.mrb[0].mxu0
  %1303 = vmatprep.mubr.bf16.mxu0 0
  %1304 = vmatmul.mubr.bf16.gmra.mrb[0].mxu0 %v765
  %v1305 = vpop.f32.mrb[0].mxu0
  %v1306 = vadd.f32 %v186, %v1305
  %v1307 = vpop.f32.mrb[0].mxu0
  %v1308 = vpop.f32.mrb[0].mxu0
  %v1309 = vadd.f32 %v186, %v1308
  %v1310 = vpop.f32.mrb[0].mxu0
  %1311 = vmatprep.mubr.bf16.mxu0 0
  %1312 = vmatmul.mubr.bf16.gmra.mrb[0].mxu0 %v768
  %v1313 = vpop.f32.mrb[0].mxu0
  %v1314 = vadd.f32 %v186, %v1313
  %v1315 = vpop.f32.mrb[0].mxu0
  %v1316 = vpop.f32.mrb[0].mxu0
  %v1317 = vadd.f32 %v186, %v1316
  %v1318 = vpop.f32.mrb[0].mxu0
  %1319 = vmatprep.mubr.bf16.mxu0 0
  %1320 = vmatmul.mubr.bf16.gmra.mrb[0].mxu0 %v771
  %v1321 = vpop.f32.mrb[0].mxu0
  %v1322 = vadd.f32 %v186, %v1321
  %v1323 = vpop.f32.mrb[0].mxu0
  %v1324 = vpop.f32.mrb[0].mxu0
  %v1325 = vadd.f32 %v186, %v1324
  %v1326 = vpop.f32.mrb[0].mxu0
  %1327 = vmatprep.mubr.bf16.mxu0 0
  %1328 = vmatmul.mubr.bf16.gmra.mrb[0].mxu0 %v774
  %v1329 = vpop.f32.mrb[0].mxu0
  %v1330 = vadd.f32 %v186, %v1329
  %v1331 = vpop.f32.mrb[0].mxu0
  %v1332 = vpop.f32.mrb[0].mxu0
  %v1333 = vadd.f32 %v186, %v1332
  %v1334 = vpop.f32.mrb[0].mxu0
  %1335 = vmatprep.mubr.bf16.mxu0 0
  %1336 = vmatmul.mubr.bf16.gmra.mrb[0].mxu0 %v777
  %v1337 = vpop.f32.mrb[0].mxu0
  %v1338 = vadd.f32 %v186, %v1337
  %v1339 = vpop.f32.mrb[0].mxu0
  %v1340 = vpop.f32.mrb[0].mxu0
  %v1341 = vadd.f32 %v186, %v1340
  %v1342 = vpop.f32.mrb[0].mxu0
  %1343 = vmatprep.mubr.bf16.mxu0 0
  %1344 = vmatmul.mubr.bf16.gmra.mrb[0].mxu0 %v780
  %v1345 = vpop.f32.mrb[0].mxu0
  %v1346 = vadd.f32 %v186, %v1345
  %v1347 = vpop.f32.mrb[0].mxu0
  %v1348 = vpop.f32.mrb[0].mxu0
  %v1349 = vadd.f32 %v186, %v1348
  %v1350 = vpop.f32.mrb[0].mxu0
  %1351 = vmatprep.mubr.bf16.mxu0 0
  %1352 = vmatmul.mubr.bf16.gmra.mrb[0].mxu0 %v783
  %v1353 = vpop.f32.mrb[0].mxu0
  %v1354 = vadd.f32 %v186, %v1353
  %v1355 = vpop.f32.mrb[0].mxu0
  %v1356 = vpop.f32.mrb[0].mxu0
  %v1357 = vadd.f32 %v186, %v1356
  %v1358 = vpop.f32.mrb[0].mxu0
  %1359 = vmatprep.mubr.bf16.mxu0 0
  %1360 = vmatmul.mubr.bf16.gmra.mrb[0].mxu0 %v786
  %v1361 = vpop.f32.mrb[0].mxu0
  %v1362 = vadd.f32 %v186, %v1361
  %v1363 = vpop.f32.mrb[0].mxu0
  %v1364 = vpop.f32.mrb[0].mxu0
  %v1365 = vadd.f32 %v186, %v1364
  %v1366 = vpop.f32.mrb[0].mxu0
  %1367 = vmatprep.mubr.bf16.mxu0 0
  %1368 = vmatmul.mubr.bf16.gmra.mrb[0].mxu0 %v789
  %v1369 = vpop.f32.mrb[0].mxu0
  %v1370 = vadd.f32 %v186, %v1369
  %v1371 = vpop.f32.mrb[0].mxu0
  %v1372 = vpop.f32.mrb[0].mxu0
  %v1373 = vadd.f32 %v186, %v1372
  %v1374 = vpop.f32.mrb[0].mxu0
  %1375 = vmatprep.mubr.bf16.mxu0 0
  %1376 = vmatmul.mubr.bf16.gmra.mrb[0].mxu0 %v792
  %v1377 = vpop.f32.mrb[0].mxu0
  %v1378 = vadd.f32 %v186, %v1377
  %v1379 = vpop.f32.mrb[0].mxu0
  %v1380 = vpop.f32.mrb[0].mxu0
  %v1381 = vadd.f32 %v186, %v1380
  %v1382 = vpop.f32.mrb[0].mxu0
  %1383 = vmatprep.mubr.bf16.mxu0 0
  %1384 = vmatmul.mubr.bf16.gmra.mrb[0].mxu0 %v795
  %v1385 = vpop.f32.mrb[0].mxu0
  %v1386 = vadd.f32 %v186, %v1385
  %v1387 = vpop.f32.mrb[0].mxu0
  %v1388 = vpop.f32.mrb[0].mxu0
  %v1389 = vadd.f32 %v186, %v1388
  %v1390 = vpop.f32.mrb[0].mxu0
  %1391 = vmatprep.mubr.bf16.mxu0 0
  %1392 = vmatmul.mubr.bf16.gmra.mrb[0].mxu0 %v798
  %v1393 = vpop.f32.mrb[0].mxu0
  %v1394 = vadd.f32 %v186, %v1393
  %v1395 = vpop.f32.mrb[0].mxu0
  %v1396 = vpop.f32.mrb[0].mxu0
  %v1397 = vadd.f32 %v186, %v1396
  %v1398 = vpop.f32.mrb[0].mxu0
  %1399 = vmatprep.mubr.bf16.mxu0 0
  %1400 = vmatmul.mubr.bf16.gmra.mrb[0].mxu0 %v801
  %v1401 = vpop.f32.mrb[0].mxu0
  %v1402 = vadd.f32 %v186, %v1401
  %v1403 = vpop.f32.mrb[0].mxu0
  %v1404 = vpop.f32.mrb[0].mxu0
  %v1405 = vadd.f32 %v186, %v1404
  %v1406 = vpop.f32.mrb[0].mxu0
  %1407 = vmatprep.mubr.bf16.mxu0 0
  %1408 = vmatmul.mubr.bf16.gmra.mrb[0].mxu0 %v804
  %v1409 = vpop.f32.mrb[0].mxu0
  %v1410 = vadd.f32 %v186, %v1409
  %v1411 = vpop.f32.mrb[0].mxu0
  %v1412 = vpop.f32.mrb[0].mxu0
  %v1413 = vadd.f32 %v186, %v1412
  %v1414 = vpop.f32.mrb[0].mxu0
  %1415 = vmatprep.mubr.bf16.mxu0 0
  %1416 = vmatmul.mubr.bf16.gmra.mrb[0].mxu0 %v807
  %v1417 = vpop.f32.mrb[0].mxu0
  %v1418 = vadd.f32 %v186, %v1417
  %v1419 = vpop.f32.mrb[0].mxu0
  %v1420 = vpop.f32.mrb[0].mxu0
  %v1421 = vadd.f32 %v186, %v1420
  %v1422 = vpop.f32.mrb[0].mxu0
  %1423 = vmatprep.mubr.bf16.mxu0 0
  %1424 = vmatmul.mubr.bf16.gmra.mrb[0].mxu0 %v810
  %v1425 = vpop.f32.mrb[0].mxu0
  %v1426 = vadd.f32 %v186, %v1425
  %v1427 = vpop.f32.mrb[0].mxu0
  %v1428 = vpop.f32.mrb[0].mxu0
  %v1429 = vadd.f32 %v186, %v1428
  %v1430 = vpop.f32.mrb[0].mxu0
  %1431 = vmatprep.mubr.bf16.mxu0 0
  %1432 = vmatmul.mubr.bf16.gmra.mrb[0].mxu0 %v813
  %v1433 = vpop.f32.mrb[0].mxu0
  %v1434 = vadd.f32 %v186, %v1433
  %v1435 = vpop.f32.mrb[0].mxu0
  %v1436 = vpop.f32.mrb[0].mxu0
  %v1437 = vadd.f32 %v186, %v1436
  %v1438 = vpop.f32.mrb[0].mxu0
  %1439 = vmatprep.mubr.bf16.mxu0 0
  %1440 = vmatmul.mubr.bf16.gmra.mrb[0].mxu0 %v816
  %v1441 = vpop.f32.mrb[0].mxu0
  %v1442 = vadd.f32 %v186, %v1441
  %v1443 = vpop.f32.mrb[0].mxu0
  %v1444 = vpop.f32.mrb[0].mxu0
  %v1445 = vadd.f32 %v186, %v1444
  %v1446 = vpop.f32.mrb[0].mxu0
  %1447 = vmatprep.mubr.bf16.mxu0 0
  %1448 = vmatmul.mubr.bf16.gmra.mrb[0].mxu0 %v819
  %v1449 = vpop.f32.mrb[0].mxu0
  %v1450 = vadd.f32 %v186, %v1449
  %v1451 = vpop.f32.mrb[0].mxu0
  %v1452 = vpop.f32.mrb[0].mxu0
  %v1453 = vadd.f32 %v186, %v1452
  %v1454 = vpop.f32.mrb[0].mxu0
  %1455 = vmatprep.mubr.bf16.mxu0 0
  %1456 = vmatmul.mubr.bf16.gmra.mrb[0].mxu0 %v822
  %v1457 = vpop.f32.mrb[0].mxu0
  %v1458 = vadd.f32 %v186, %v1457
  %v1459 = vpop.f32.mrb[0].mxu0
  %v1460 = vpop.f32.mrb[0].mxu0
  %v1461 = vadd.f32 %v186, %v1460
  %v1462 = vpop.f32.mrb[0].mxu0
  %1463 = vmatprep.mubr.bf16.mxu0 0
  %1464 = vmatmul.mubr.bf16.gmra.mrb[0].mxu0 %v825
  %v1465 = vpop.f32.mrb[0].mxu0
  %v1466 = vadd.f32 %v186, %v1465
  %v1467 = vpop.f32.mrb[0].mxu0
  %v1468 = vpop.f32.mrb[0].mxu0
  %v1469 = vadd.f32 %v186, %v1468
  %v1470 = vpop.f32.mrb[0].mxu0
  %1471 = vmatprep.mubr.bf16.mxu0 0
  %1472 = vmatmul.mubr.bf16.gmra.mrb[0].mxu0 %v828
  %v1473 = vpop.f32.mrb[0].mxu0
  %v1474 = vadd.f32 %v186, %v1473
  %v1475 = vpop.f32.mrb[0].mxu0
  %v1476 = vpop.f32.mrb[0].mxu0
  %v1477 = vadd.f32 %v186, %v1476
  %v1478 = vpop.f32.mrb[0].mxu0
  %1479 = vmatprep.mubr.bf16.mxu0 0
  %1480 = vmatmul.mubr.bf16.gmra.mrb[0].mxu0 %v831
  %v1481 = vpop.f32.mrb[0].mxu0
  %v1482 = vadd.f32 %v186, %v1481
  %v1483 = vpop.f32.mrb[0].mxu0
  %v1484 = vpop.f32.mrb[0].mxu0
  %v1485 = vadd.f32 %v186, %v1484
  %v1486 = vpop.f32.mrb[0].mxu0
  %1487 = vmatprep.mubr.bf16.mxu0 0
  %1488 = vmatmul.mubr.bf16.gmra.mrb[0].mxu0 %v834
  %v1489 = vpop.f32.mrb[0].mxu0
  %v1490 = vadd.f32 %v186, %v1489
  %v1491 = vpop.f32.mrb[0].mxu0
  %v1492 = vpop.f32.mrb[0].mxu0
  %v1493 = vadd.f32 %v186, %v1492
  %v1494 = vpop.f32.mrb[0].mxu0
  %1495 = vmatprep.mubr.bf16.mxu0 0
  %1496 = vmatmul.mubr.bf16.gmra.mrb[0].mxu0 %v837
  %v1497 = vpop.f32.mrb[0].mxu0
  %v1498 = vadd.f32 %v186, %v1497
  %v1499 = vpop.f32.mrb[0].mxu0
  %v1500 = vpop.f32.mrb[0].mxu0
  %v1501 = vadd.f32 %v186, %v1500
  %v1502 = vpop.f32.mrb[0].mxu0
  %1503 = vmatprep.mubr.bf16.mxu0 0
  %1504 = vmatmul.mubr.bf16.gmra.mrb[0].mxu0 %v840
  %v1505 = vpop.f32.mrb[0].mxu0
  %v1506 = vadd.f32 %v186, %v1505
  %v1507 = vpop.f32.mrb[0].mxu0
  %v1508 = vpop.f32.mrb[0].mxu0
  %v1509 = vadd.f32 %v186, %v1508
  %v1510 = vpop.f32.mrb[0].mxu0
  %1511 = vmatprep.mubr.bf16.mxu0 0
  %1512 = vmatmul.mubr.bf16.gmra.mrb[0].mxu0 %v843
  %v1513 = vpop.f32.mrb[0].mxu0
  %v1514 = vadd.f32 %v186, %v1513
  %v1515 = vpop.f32.mrb[0].mxu0
  %v1516 = vpop.f32.mrb[0].mxu0
  %v1517 = vadd.f32 %v186, %v1516
  %v1518 = vpop.f32.mrb[0].mxu0
  %1519 = vmatprep.mubr.bf16.mxu0 0
  %1520 = vmatmul.mubr.bf16.gmra.mrb[0].mxu0 %v846
  %v1521 = vpop.f32.mrb[0].mxu0
  %v1522 = vadd.f32 %v186, %v1521
  %v1523 = vpop.f32.mrb[0].mxu0
  %v1524 = vpop.f32.mrb[0].mxu0
  %v1525 = vadd.f32 %v186, %v1524
  %v1526 = vpop.f32.mrb[0].mxu0
  %1527 = vmatprep.mubr.bf16.mxu0 0
  %1528 = vmatmul.mubr.bf16.gmra.mrb[0].mxu0 %v849
  %v1529 = vpop.f32.mrb[0].mxu0
  %v1530 = vadd.f32 %v186, %v1529
  %v1531 = vpop.f32.mrb[0].mxu0
  %v1532 = vpop.f32.mrb[0].mxu0
  %v1533 = vadd.f32 %v186, %v1532
  %v1534 = vpop.f32.mrb[0].mxu0
  %1535 = vdwg.mxu0
  %v1536 = vmax.f32 %v890, 0.0
  %v1537 = vmax.f32 %v893, 0.0
  %v1538 = vmax.f32 %v898, 0.0
  %v1539 = vmax.f32 %v901, 0.0
  %v1540 = vmax.f32 %v906, 0.0
  %v1541 = vmax.f32 %v909, 0.0
  %v1542 = vmax.f32 %v914, 0.0
  %v1543 = vmax.f32 %v917, 0.0
  %v1544 = vmax.f32 %v922, 0.0
  %v1545 = vmax.f32 %v925, 0.0
  %v1546 = vmax.f32 %v930, 0.0
  %v1547 = vmax.f32 %v933, 0.0
  %v1548 = vmax.f32 %v938, 0.0
  %v1549 = vmax.f32 %v941, 0.0
  %v1550 = vmax.f32 %v946, 0.0
  %v1551 = vmax.f32 %v949, 0.0
  %v1552 = vmax.f32 %v954, 0.0
  %v1553 = vmax.f32 %v957, 0.0
  %v1554 = vmax.f32 %v962, 0.0
  %v1555 = vmax.f32 %v965, 0.0
  %v1556 = vmax.f32 %v970, 0.0
  %v1557 = vmax.f32 %v973, 0.0
  %v1558 = vmax.f32 %v978, 0.0
  %v1559 = vmax.f32 %v981, 0.0
  %v1560 = vmax.f32 %v986, 0.0
  %v1561 = vmax.f32 %v989, 0.0
  %v1562 = vmax.f32 %v994, 0.0
  %v1563 = vmax.f32 %v997, 0.0
  %v1564 = vmax.f32 %v1002, 0.0
  %v1565 = vmax.f32 %v1005, 0.0
  %v1566 = vmax.f32 %v1010, 0.0
  %v1567 = vmax.f32 %v1013, 0.0
  %v1568 = vmax.f32 %v1018, 0.0
  %v1569 = vmax.f32 %v1021, 0.0
  %v1570 = vmax.f32 %v1026, 0.0
  %v1571 = vmax.f32 %v1029, 0.0
  %v1572 = vmax.f32 %v1034, 0.0
  %v1573 = vmax.f32 %v1037, 0.0
  %v1574 = vmax.f32 %v1042, 0.0
  %v1575 = vmax.f32 %v1045, 0.0
  %v1576 = vmax.f32 %v1050, 0.0
  %v1577 = vmax.f32 %v1053, 0.0
  %v1578 = vmax.f32 %v1058, 0.0
  %v1579 = vmax.f32 %v1061, 0.0
  %v1580 = vmax.f32 %v1066, 0.0
  %v1581 = vmax.f32 %v1069, 0.0
  %v1582 = vmax.f32 %v1074, 0.0
  %v1583 = vmax.f32 %v1077, 0.0
  %v1584 = vmax.f32 %v1082, 0.0
  %v1585 = vmax.f32 %v1085, 0.0
  %v1586 = vmax.f32 %v1090, 0.0
  %v1587 = vmax.f32 %v1093, 0.0
  %v1588 = vmax.f32 %v1098, 0.0
  %v1589 = vmax.f32 %v1101, 0.0
  %v1590 = vmax.f32 %v1106, 0.0
  %v1591 = vmax.f32 %v1109, 0.0
  %v1592 = vmax.f32 %v1114, 0.0
  %v1593 = vmax.f32 %v1117, 0.0
  %v1594 = vmax.f32 %v1122, 0.0
  %v1595 = vmax.f32 %v1125, 0.0
  %v1596 = vmax.f32 %v1130, 0.0
  %v1597 = vmax.f32 %v1133, 0.0
  %v1598 = vmax.f32 %v1138, 0.0
  %v1599 = vmax.f32 %v1141, 0.0
  %v1600 = vmax.f32 %v1146, 0.0
  %v1601 = vmax.f32 %v1149, 0.0
  %v1602 = vmax.f32 %v1154, 0.0
  %v1603 = vmax.f32 %v1157, 0.0
  %v1604 = vmax.f32 %v1162, 0.0
  %v1605 = vmax.f32 %v1165, 0.0
  %v1606 = vmax.f32 %v1170, 0.0
  %v1607 = vmax.f32 %v1173, 0.0
  %v1608 = vmax.f32 %v1178, 0.0
  %v1609 = vmax.f32 %v1181, 0.0
  %v1610 = vmax.f32 %v1186, 0.0
  %v1611 = vmax.f32 %v1189, 0.0
  %v1612 = vmax.f32 %v1194, 0.0
  %v1613 = vmax.f32 %v1197, 0.0
  %v1614 = vmax.f32 %v1202, 0.0
  %v1615 = vmax.f32 %v1205, 0.0
  %v1616 = vmax.f32 %v1210, 0.0
  %v1617 = vmax.f32 %v1213, 0.0
  %v1618 = vmax.f32 %v1218, 0.0
  %v1619 = vmax.f32 %v1221, 0.0
  %v1620 = vmax.f32 %v1226, 0.0
  %v1621 = vmax.f32 %v1229, 0.0
  %v1622 = vmax.f32 %v1234, 0.0
  %v1623 = vmax.f32 %v1237, 0.0
  %v1624 = vmax.f32 %v1242, 0.0
  %v1625 = vmax.f32 %v1245, 0.0
  %v1626 = vmax.f32 %v1250, 0.0
  %v1627 = vmax.f32 %v1253, 0.0
  %v1628 = vmax.f32 %v1258, 0.0
  %v1629 = vmax.f32 %v1261, 0.0
  %v1630 = vmax.f32 %v1266, 0.0
  %v1631 = vmax.f32 %v1269, 0.0
  %v1632 = vmax.f32 %v1274, 0.0
  %v1633 = vmax.f32 %v1277, 0.0
  %v1634 = vmax.f32 %v1282, 0.0
  %v1635 = vmax.f32 %v1285, 0.0
  %v1636 = vmax.f32 %v1290, 0.0
  %v1637 = vmax.f32 %v1293, 0.0
  %v1638 = vmax.f32 %v1298, 0.0
  %v1639 = vmax.f32 %v1301, 0.0
  %v1640 = vmax.f32 %v1306, 0.0
  %v1641 = vmax.f32 %v1309, 0.0
  %v1642 = vmax.f32 %v1314, 0.0
  %v1643 = vmax.f32 %v1317, 0.0
  %v1644 = vmax.f32 %v1322, 0.0
  %v1645 = vmax.f32 %v1325, 0.0
  %v1646 = vmax.f32 %v1330, 0.0
  %v1647 = vmax.f32 %v1333, 0.0
  %v1648 = vmax.f32 %v1338, 0.0
  %v1649 = vmax.f32 %v1341, 0.0
  %v1650 = vmax.f32 %v1346, 0.0
  %v1651 = vmax.f32 %v1349, 0.0
  %v1652 = vmax.f32 %v1354, 0.0
  %v1653 = vmax.f32 %v1357, 0.0
  %v1654 = vmax.f32 %v1362, 0.0
  %v1655 = vmax.f32 %v1365, 0.0
  %v1656 = vmax.f32 %v1370, 0.0
  %v1657 = vmax.f32 %v1373, 0.0
  %v1658 = vmax.f32 %v1378, 0.0
  %v1659 = vmax.f32 %v1381, 0.0
  %v1660 = vmax.f32 %v1386, 0.0
  %v1661 = vmax.f32 %v1389, 0.0
  %v1662 = vmax.f32 %v1394, 0.0
  %v1663 = vmax.f32 %v1397, 0.0
  %v1664 = vmax.f32 %v1402, 0.0
  %v1665 = vmax.f32 %v1405, 0.0
  %v1666 = vmax.f32 %v1410, 0.0
  %v1667 = vmax.f32 %v1413, 0.0
  %v1668 = vmax.f32 %v1418, 0.0
  %v1669 = vmax.f32 %v1421, 0.0
  %v1670 = vmax.f32 %v1426, 0.0
  %v1671 = vmax.f32 %v1429, 0.0
  %v1672 = vmax.f32 %v1434, 0.0
  %v1673 = vmax.f32 %v1437, 0.0
  %v1674 = vmax.f32 %v1442, 0.0
  %v1675 = vmax.f32 %v1445, 0.0
  %v1676 = vmax.f32 %v1450, 0.0
  %v1677 = vmax.f32 %v1453, 0.0
  %v1678 = vmax.f32 %v1458, 0.0
  %v1679 = vmax.f32 %v1461, 0.0
  %v1680 = vmax.f32 %v1466, 0.0
  %v1681 = vmax.f32 %v1469, 0.0
  %v1682 = vmax.f32 %v1474, 0.0
  %v1683 = vmax.f32 %v1477, 0.0
  %v1684 = vmax.f32 %v1482, 0.0
  %v1685 = vmax.f32 %v1485, 0.0
  %v1686 = vmax.f32 %v1490, 0.0
  %v1687 = vmax.f32 %v1493, 0.0
  %v1688 = vmax.f32 %v1498, 0.0
  %v1689 = vmax.f32 %v1501, 0.0
  %v1690 = vmax.f32 %v1506, 0.0
  %v1691 = vmax.f32 %v1509, 0.0
  %v1692 = vmax.f32 %v1514, 0.0
  %v1693 = vmax.f32 %v1517, 0.0
  %v1694 = vmax.f32 %v1522, 0.0
  %v1695 = vmax.f32 %v1525, 0.0
  %v1696 = vmax.f32 %v1530, 0.0
  %v1697 = vmax.f32 %v1533, 0.0
  %v1698 = vpack.c.bf16 %v1537, %v1536
  %v1699 = vpack.c.bf16 %v1539, %v1538
  %v1700 = vpack.c.bf16 %v1541, %v1540
  %v1701 = vpack.c.bf16 %v1543, %v1542
  %v1702 = vpack.c.bf16 %v1545, %v1544
  %v1703 = vpack.c.bf16 %v1547, %v1546
  %v1704 = vpack.c.bf16 %v1549, %v1548
  %v1705 = vpack.c.bf16 %v1551, %v1550
  %v1706 = vpack.c.bf16 %v1553, %v1552
  %v1707 = vpack.c.bf16 %v1555, %v1554
  %v1708 = vpack.c.bf16 %v1557, %v1556
  %v1709 = vpack.c.bf16 %v1559, %v1558
  %v1710 = vpack.c.bf16 %v1561, %v1560
  %v1711 = vpack.c.bf16 %v1563, %v1562
  %v1712 = vpack.c.bf16 %v1565, %v1564
  %v1713 = vpack.c.bf16 %v1567, %v1566
  %v1714 = vpack.c.bf16 %v1569, %v1568
  %v1715 = vpack.c.bf16 %v1571, %v1570
  %v1716 = vpack.c.bf16 %v1573, %v1572
  %v1717 = vpack.c.bf16 %v1575, %v1574
  %v1718 = vpack.c.bf16 %v1577, %v1576
  %v1719 = vpack.c.bf16 %v1579, %v1578
  %v1720 = vpack.c.bf16 %v1581, %v1580
  %v1721 = vpack.c.bf16 %v1583, %v1582
  %v1722 = vpack.c.bf16 %v1585, %v1584
  %v1723 = vpack.c.bf16 %v1587, %v1586
  %v1724 = vpack.c.bf16 %v1589, %v1588
  %v1725 = vpack.c.bf16 %v1591, %v1590
  %v1726 = vpack.c.bf16 %v1593, %v1592
  %v1727 = vpack.c.bf16 %v1595, %v1594
  %v1728 = vpack.c.bf16 %v1597, %v1596
  %v1729 = vpack.c.bf16 %v1599, %v1598
  %v1730 = vpack.c.bf16 %v1601, %v1600
  %v1731 = vpack.c.bf16 %v1603, %v1602
  %v1732 = vpack.c.bf16 %v1605, %v1604
  %v1733 = vpack.c.bf16 %v1607, %v1606
  %v1734 = vpack.c.bf16 %v1609, %v1608
  %v1735 = vpack.c.bf16 %v1611, %v1610
  %v1736 = vpack.c.bf16 %v1613, %v1612
  %v1737 = vpack.c.bf16 %v1615, %v1614
  %v1738 = vpack.c.bf16 %v1617, %v1616
  %v1739 = vpack.c.bf16 %v1619, %v1618
  %v1740 = vpack.c.bf16 %v1621, %v1620
  %v1741 = vpack.c.bf16 %v1623, %v1622
  %v1742 = vpack.c.bf16 %v1625, %v1624
  %v1743 = vpack.c.bf16 %v1627, %v1626
  %v1744 = vpack.c.bf16 %v1629, %v1628
  %v1745 = vpack.c.bf16 %v1631, %v1630
  %v1746 = vpack.c.bf16 %v1633, %v1632
  %v1747 = vpack.c.bf16 %v1635, %v1634
  %v1748 = vpack.c.bf16 %v1637, %v1636
  %v1749 = vpack.c.bf16 %v1639, %v1638
  %v1750 = vpack.c.bf16 %v1641, %v1640
  %v1751 = vpack.c.bf16 %v1643, %v1642
  %v1752 = vpack.c.bf16 %v1645, %v1644
  %v1753 = vpack.c.bf16 %v1647, %v1646
  %v1754 = vpack.c.bf16 %v1649, %v1648
  %v1755 = vpack.c.bf16 %v1651, %v1650
  %v1756 = vpack.c.bf16 %v1653, %v1652
  %v1757 = vpack.c.bf16 %v1655, %v1654
  %v1758 = vpack.c.bf16 %v1657, %v1656
  %v1759 = vpack.c.bf16 %v1659, %v1658
  %v1760 = vpack.c.bf16 %v1661, %v1660
  %v1761 = vpack.c.bf16 %v1663, %v1662
  %v1762 = vpack.c.bf16 %v1665, %v1664
  %v1763 = vpack.c.bf16 %v1667, %v1666
  %v1764 = vpack.c.bf16 %v1669, %v1668
  %v1765 = vpack.c.bf16 %v1671, %v1670
  %v1766 = vpack.c.bf16 %v1673, %v1672
  %v1767 = vpack.c.bf16 %v1675, %v1674
  %v1768 = vpack.c.bf16 %v1677, %v1676
  %v1769 = vpack.c.bf16 %v1679, %v1678
  %v1770 = vpack.c.bf16 %v1681, %v1680
  %v1771 = vpack.c.bf16 %v1683, %v1682
  %v1772 = vpack.c.bf16 %v1685, %v1684
  %v1773 = vpack.c.bf16 %v1687, %v1686
  %v1774 = vpack.c.bf16 %v1689, %v1688
  %v1775 = vpack.c.bf16 %v1691, %v1690
  %v1776 = vpack.c.bf16 %v1693, %v1692
  %v1777 = vpack.c.bf16 %v1695, %v1694
  %v1778 = vpack.c.bf16 %v1697, %v1696
  %v1779 = vld [vmem:[%s1 + $0x18] sm:$0xf]
  %v1780 = vld [vmem:[%s1 + $0x1c] sm:$0xf]
  %v1781 = vld [vmem:[%s1 + $0x20] sm:$0xf]
  %v1782 = vld [vmem:[%s1 + $0x24] sm:$0xf]
  %v1785 = vunpack.c.l.b16 %v1781
  %v1786 = vunpack.c.l.b16 %v1782
  %v1787 = vpack.c.b16 %v1786, %v1785
  %vm1789 = vcmask 130048
  %v1791 = vsel %vm1789, %v1707, 0
  %v1794 = vsel %vm1789, %v1708, 0
  %v1797 = vsel %vm1789, %v1709, 0
  %v1800 = vsel %vm1789, %v1710, 0
  %v1803 = vsel %vm1789, %v1711, 0
  %v1806 = vsel %vm1789, %v1712, 0
  %v1809 = vsel %vm1789, %v1713, 0
  %v1812 = vsel %vm1789, %v1714, 0
  %v1815 = vsel %vm1789, %v1715, 0
  %1817 = vmatprep.subr.bf16.mxu0 0
  %1818 = vmatpush1.bf16.msra.mxu0 %v1787
  %1819 = vmatprep.subr.bf16.mxu0 0
  %1820 = vmatpush1.bf16.msra.mxu0 0
  %1821 = vmatprep.subr.bf16.mxu0 0
  %1822 = vmatpush1.bf16.msra.mxu0 0
  %1823 = vmatprep.subr.bf16.mxu0 0
  %1824 = vmatpush1.bf16.msra.mxu0 0
  %1825 = vmatprep.subr.bf16.mxu0 0
  %1826 = vmatpush1.bf16.msra.mxu0 0
  %1827 = vmatprep.subr.bf16.mxu0 0
  %1828 = vmatpush1.bf16.msra.mxu0 0
  %1829 = vmatprep.subr.bf16.mxu0 0
  %1830 = vmatpush1.bf16.msra.mxu0 0
  %1831 = vmatprep.subr.bf16.mxu0 0
  %1832 = vmatpush1.bf16.msra.mxu0 0
  %1833 = vmatprep.subr.bf16.mxu0 0
  %1834 = vmatpush1.bf16.msra.mxu0 0
  %1835 = vmatprep.subr.bf16.mxu0 0
  %1836 = vmatpush1.bf16.msra.mxu0 0
  %1837 = vmatprep.subr.bf16.mxu0 0
  %1838 = vmatpush1.bf16.msra.mxu0 0
  %1839 = vmatprep.subr.bf16.mxu0 0
  %1840 = vmatpush1.bf16.msra.mxu0 0
  %1841 = vmatprep.subr.bf16.mxu0 0
  %1842 = vmatpush1.bf16.msra.mxu0 0
  %1843 = vmatprep.subr.bf16.mxu0 0
  %1844 = vmatpush1.bf16.msra.mxu0 0
  %1845 = vmatprep.subr.bf16.mxu0 0
  %1846 = vmatpush1.bf16.msra.mxu0 0
  %1847 = vmatprep.subr.bf16.mxu0 0
  %1848 = vmatpush1.bf16.msra.mxu0 0
  %1849 = vmatprep.mubr.bf16.mxu0 0
  %1850 = vmatmul.mubr.bf16.gmra.mrb[0].mxu0 %v1791
  %v1851 = vpop.f32.mrb[0].mxu0
  %v1852 = vadd.f32 0.0, %v1851
  %v1853 = vpop.f32.mrb[0].mxu0
  %v1854 = vpop.f32.mrb[0].mxu0
  %v1855 = vadd.f32 0.0, %v1854
  %v1856 = vpop.f32.mrb[0].mxu0
  %1857 = vmatprep.mubr.bf16.mxu0 0
  %1858 = vmatmul.mubr.bf16.gmra.mrb[0].mxu0 %v1794
  %v1859 = vpop.f32.mrb[0].mxu0
  %v1860 = vadd.f32 0.0, %v1859
  %v1861 = vpop.f32.mrb[0].mxu0
  %v1862 = vpop.f32.mrb[0].mxu0
  %v1863 = vadd.f32 0.0, %v1862
  %v1864 = vpop.f32.mrb[0].mxu0
  %1865 = vmatprep.mubr.bf16.mxu0 0
  %1866 = vmatmul.mubr.bf16.gmra.mrb[0].mxu0 %v1797
  %v1867 = vpop.f32.mrb[0].mxu0
  %v1868 = vadd.f32 0.0, %v1867
  %v1869 = vpop.f32.mrb[0].mxu0
  %v1870 = vpop.f32.mrb[0].mxu0
  %v1871 = vadd.f32 0.0, %v1870
  %v1872 = vpop.f32.mrb[0].mxu0
  %1873 = vmatprep.mubr.bf16.mxu0 0
  %1874 = vmatmul.mubr.bf16.gmra.mrb[0].mxu0 %v1800
  %v1875 = vpop.f32.mrb[0].mxu0
  %v1876 = vadd.f32 0.0, %v1875
  %v1877 = vpop.f32.mrb[0].mxu0
  %v1878 = vpop.f32.mrb[0].mxu0
  %v1879 = vadd.f32 0.0, %v1878
  %v1880 = vpop.f32.mrb[0].mxu0
  %1881 = vmatprep.mubr.bf16.mxu0 0
  %1882 = vmatmul.mubr.bf16.gmra.mrb[0].mxu0 %v1803
  %v1883 = vpop.f32.mrb[0].mxu0
  %v1884 = vadd.f32 0.0, %v1883
  %v1885 = vpop.f32.mrb[0].mxu0
  %v1886 = vpop.f32.mrb[0].mxu0
  %v1887 = vadd.f32 0.0, %v1886
  %v1888 = vpop.f32.mrb[0].mxu0
  %1889 = vmatprep.mubr.bf16.mxu0 0
  %1890 = vmatmul.mubr.bf16.gmra.mrb[0].mxu0 %v1806
  %v1891 = vpop.f32.mrb[0].mxu0
  %v1892 = vadd.f32 0.0, %v1891
  %v1893 = vpop.f32.mrb[0].mxu0
  %v1894 = vpop.f32.mrb[0].mxu0
  %v1895 = vadd.f32 0.0, %v1894
  %v1896 = vpop.f32.mrb[0].mxu0
  %1897 = vmatprep.mubr.bf16.mxu0 0
  %1898 = vmatmul.mubr.bf16.gmra.mrb[0].mxu0 %v1809
  %v1899 = vpop.f32.mrb[0].mxu0
  %v1900 = vadd.f32 0.0, %v1899
  %v1901 = vpop.f32.mrb[0].mxu0
  %v1902 = vpop.f32.mrb[0].mxu0
  %v1903 = vadd.f32 0.0, %v1902
  %v1904 = vpop.f32.mrb[0].mxu0
  %1905 = vmatprep.mubr.bf16.mxu0 0
  %1906 = vmatmul.mubr.bf16.gmra.mrb[0].mxu0 %v1812
  %v1907 = vpop.f32.mrb[0].mxu0
  %v1908 = vadd.f32 0.0, %v1907
  %v1909 = vpop.f32.mrb[0].mxu0
  %v1910 = vpop.f32.mrb[0].mxu0
  %v1911 = vadd.f32 0.0, %v1910
  %v1912 = vpop.f32.mrb[0].mxu0
  %1913 = vmatprep.mubr.bf16.mxu0 0
  %1914 = vmatmul.mubr.bf16.gmra.mrb[0].mxu0 %v1815
  %v1915 = vpop.f32.mrb[0].mxu0
  %v1916 = vadd.f32 0.0, %v1915
  %v1917 = vpop.f32.mrb[0].mxu0
  %v1918 = vpop.f32.mrb[0].mxu0
  %v1919 = vadd.f32 0.0, %v1918
  %v1920 = vpop.f32.mrb[0].mxu0
  %1921 = vdwg.mxu0
  %v1924 = vunpack.c.l.b16 %v1779
  %v1925 = vunpack.c.l.b16 %v1780
  %v1926 = vpack.c.b16 %v1925, %v1924
  %v1929 = vsel %vm1789, %v1698, 0
  %v1932 = vsel %vm1789, %v1699, 0
  %v1935 = vsel %vm1789, %v1700, 0
  %v1938 = vsel %vm1789, %v1701, 0
  %v1941 = vsel %vm1789, %v1702, 0
  %v1944 = vsel %vm1789, %v1703, 0
  %v1947 = vsel %vm1789, %v1704, 0
  %v1950 = vsel %vm1789, %v1705, 0
  %v1953 = vsel %vm1789, %v1706, 0
  %1955 = vmatprep.subr.bf16.mxu0 0
  %1956 = vmatpush1.bf16.msra.mxu0 %v1926
  %1957 = vmatprep.subr.bf16.mxu0 0
  %1958 = vmatpush1.bf16.msra.mxu0 0
  %1959 = vmatprep.subr.bf16.mxu0 0
  %1960 = vmatpush1.bf16.msra.mxu0 0
  %1961 = vmatprep.subr.bf16.mxu0 0
  %1962 = vmatpush1.bf16.msra.mxu0 0
  %1963 = vmatprep.subr.bf16.mxu0 0
  %1964 = vmatpush1.bf16.msra.mxu0 0
  %1965 = vmatprep.subr.bf16.mxu0 0
  %1966 = vmatpush1.bf16.msra.mxu0 0
  %1967 = vmatprep.subr.bf16.mxu0 0
  %1968 = vmatpush1.bf16.msra.mxu0 0
  %1969 = vmatprep.subr.bf16.mxu0 0
  %1970 = vmatpush1.bf16.msra.mxu0 0
  %1971 = vmatprep.subr.bf16.mxu0 0
  %1972 = vmatpush1.bf16.msra.mxu0 0
  %1973 = vmatprep.subr.bf16.mxu0 0
  %1974 = vmatpush1.bf16.msra.mxu0 0
  %1975 = vmatprep.subr.bf16.mxu0 0
  %1976 = vmatpush1.bf16.msra.mxu0 0
  %1977 = vmatprep.subr.bf16.mxu0 0
  %1978 = vmatpush1.bf16.msra.mxu0 0
  %1979 = vmatprep.subr.bf16.mxu0 0
  %1980 = vmatpush1.bf16.msra.mxu0 0
  %1981 = vmatprep.subr.bf16.mxu0 0
  %1982 = vmatpush1.bf16.msra.mxu0 0
  %1983 = vmatprep.subr.bf16.mxu0 0
  %1984 = vmatpush1.bf16.msra.mxu0 0
  %1985 = vmatprep.subr.bf16.mxu0 0
  %1986 = vmatpush1.bf16.msra.mxu0 0
  %1987 = vmatprep.mubr.bf16.mxu0 0
  %1988 = vmatmul.mubr.bf16.gmra.mrb[0].mxu0 %v1929
  %v1989 = vpop.f32.mrb[0].mxu0
  %v1990 = vadd.f32 %v1852, %v1989
  %v1991 = vpop.f32.mrb[0].mxu0
  %v1992 = vpop.f32.mrb[0].mxu0
  %v1993 = vadd.f32 %v1855, %v1992
  %v1994 = vpop.f32.mrb[0].mxu0
  %1995 = vmatprep.mubr.bf16.mxu0 0
  %1996 = vmatmul.mubr.bf16.gmra.mrb[0].mxu0 %v1932
  %v1997 = vpop.f32.mrb[0].mxu0
  %v1998 = vadd.f32 %v1860, %v1997
  %v1999 = vpop.f32.mrb[0].mxu0
  %v2000 = vpop.f32.mrb[0].mxu0
  %v2001 = vadd.f32 %v1863, %v2000
  %v2002 = vpop.f32.mrb[0].mxu0
  %2003 = vmatprep.mubr.bf16.mxu0 0
  %2004 = vmatmul.mubr.bf16.gmra.mrb[0].mxu0 %v1935
  %v2005 = vpop.f32.mrb[0].mxu0
  %v2006 = vadd.f32 %v1868, %v2005
  %v2007 = vpop.f32.mrb[0].mxu0
  %v2008 = vpop.f32.mrb[0].mxu0
  %v2009 = vadd.f32 %v1871, %v2008
  %v2010 = vpop.f32.mrb[0].mxu0
  %2011 = vmatprep.mubr.bf16.mxu0 0
  %2012 = vmatmul.mubr.bf16.gmra.mrb[0].mxu0 %v1938
  %v2013 = vpop.f32.mrb[0].mxu0
  %v2014 = vadd.f32 %v1876, %v2013
  %v2015 = vpop.f32.mrb[0].mxu0
  %v2016 = vpop.f32.mrb[0].mxu0
  %v2017 = vadd.f32 %v1879, %v2016
  %v2018 = vpop.f32.mrb[0].mxu0
  %2019 = vmatprep.mubr.bf16.mxu0 0
  %2020 = vmatmul.mubr.bf16.gmra.mrb[0].mxu0 %v1941
  %v2021 = vpop.f32.mrb[0].mxu0
  %v2022 = vadd.f32 %v1884, %v2021
  %v2023 = vpop.f32.mrb[0].mxu0
  %v2024 = vpop.f32.mrb[0].mxu0
  %v2025 = vadd.f32 %v1887, %v2024
  %v2026 = vpop.f32.mrb[0].mxu0
  %2027 = vmatprep.mubr.bf16.mxu0 0
  %2028 = vmatmul.mubr.bf16.gmra.mrb[0].mxu0 %v1944
  %v2029 = vpop.f32.mrb[0].mxu0
  %v2030 = vadd.f32 %v1892, %v2029
  %v2031 = vpop.f32.mrb[0].mxu0
  %v2032 = vpop.f32.mrb[0].mxu0
  %v2033 = vadd.f32 %v1895, %v2032
  %v2034 = vpop.f32.mrb[0].mxu0
  %2035 = vmatprep.mubr.bf16.mxu0 0
  %2036 = vmatmul.mubr.bf16.gmra.mrb[0].mxu0 %v1947
  %v2037 = vpop.f32.mrb[0].mxu0
  %v2038 = vadd.f32 %v1900, %v2037
  %v2039 = vpop.f32.mrb[0].mxu0
  %v2040 = vpop.f32.mrb[0].mxu0
  %v2041 = vadd.f32 %v1903, %v2040
  %v2042 = vpop.f32.mrb[0].mxu0
  %2043 = vmatprep.mubr.bf16.mxu0 0
  %2044 = vmatmul.mubr.bf16.gmra.mrb[0].mxu0 %v1950
  %v2045 = vpop.f32.mrb[0].mxu0
  %v2046 = vadd.f32 %v1908, %v2045
  %v2047 = vpop.f32.mrb[0].mxu0
  %v2048 = vpop.f32.mrb[0].mxu0
  %v2049 = vadd.f32 %v1911, %v2048
  %v2050 = vpop.f32.mrb[0].mxu0
  %2051 = vmatprep.mubr.bf16.mxu0 0
  %2052 = vmatmul.mubr.bf16.gmra.mrb[0].mxu0 %v1953
  %v2053 = vpop.f32.mrb[0].mxu0
  %v2054 = vadd.f32 %v1916, %v2053
  %v2055 = vpop.f32.mrb[0].mxu0
  %v2056 = vpop.f32.mrb[0].mxu0
  %v2057 = vadd.f32 %v1919, %v2056
  %v2058 = vpop.f32.mrb[0].mxu0
  %2059 = vdwg.mxu0
  %v2060 = vld [vmem:[%s1 + $0x28] sm:$0xf]
  %v2061 = vld [vmem:[%s1 + $0x2c] sm:$0xf]
  %v2064 = vunpack.c.l.b16 %v2060
  %v2065 = vunpack.c.l.b16 %v2061
  %v2066 = vpack.c.b16 %v2065, %v2064
  %v2069 = vsel %vm1789, %v1716, 0
  %v2072 = vsel %vm1789, %v1717, 0
  %v2075 = vsel %vm1789, %v1718, 0
  %v2078 = vsel %vm1789, %v1719, 0
  %v2081 = vsel %vm1789, %v1720, 0
  %v2084 = vsel %vm1789, %v1721, 0
  %v2087 = vsel %vm1789, %v1722, 0
  %v2090 = vsel %vm1789, %v1723, 0
  %v2093 = vsel %vm1789, %v1724, 0
  %2095 = vmatprep.subr.bf16.mxu0 0
  %2096 = vmatpush1.bf16.msra.mxu0 %v2066
  %2097 = vmatprep.subr.bf16.mxu0 0
  %2098 = vmatpush1.bf16.msra.mxu0 0
  %2099 = vmatprep.subr.bf16.mxu0 0
  %2100 = vmatpush1.bf16.msra.mxu0 0
  %2101 = vmatprep.subr.bf16.mxu0 0
  %2102 = vmatpush1.bf16.msra.mxu0 0
  %2103 = vmatprep.subr.bf16.mxu0 0
  %2104 = vmatpush1.bf16.msra.mxu0 0
  %2105 = vmatprep.subr.bf16.mxu0 0
  %2106 = vmatpush1.bf16.msra.mxu0 0
  %2107 = vmatprep.subr.bf16.mxu0 0
  %2108 = vmatpush1.bf16.msra.mxu0 0
  %2109 = vmatprep.subr.bf16.mxu0 0
  %2110 = vmatpush1.bf16.msra.mxu0 0
  %2111 = vmatprep.subr.bf16.mxu0 0
  %2112 = vmatpush1.bf16.msra.mxu0 0
  %2113 = vmatprep.subr.bf16.mxu0 0
  %2114 = vmatpush1.bf16.msra.mxu0 0
  %2115 = vmatprep.subr.bf16.mxu0 0
  %2116 = vmatpush1.bf16.msra.mxu0 0
  %2117 = vmatprep.subr.bf16.mxu0 0
  %2118 = vmatpush1.bf16.msra.mxu0 0
  %2119 = vmatprep.subr.bf16.mxu0 0
  %2120 = vmatpush1.bf16.msra.mxu0 0
  %2121 = vmatprep.subr.bf16.mxu0 0
  %2122 = vmatpush1.bf16.msra.mxu0 0
  %2123 = vmatprep.subr.bf16.mxu0 0
  %2124 = vmatpush1.bf16.msra.mxu0 0
  %2125 = vmatprep.subr.bf16.mxu0 0
  %2126 = vmatpush1.bf16.msra.mxu0 0
  %2127 = vmatprep.mubr.bf16.mxu0 0
  %2128 = vmatmul.mubr.bf16.gmra.mrb[0].mxu0 %v2069
  %v2129 = vpop.f32.mrb[0].mxu0
  %v2130 = vadd.f32 0.0, %v2129
  %v2131 = vpop.f32.mrb[0].mxu0
  %v2132 = vpop.f32.mrb[0].mxu0
  %v2133 = vadd.f32 0.0, %v2132
  %v2134 = vpop.f32.mrb[0].mxu0
  %2135 = vmatprep.mubr.bf16.mxu0 0
  %2136 = vmatmul.mubr.bf16.gmra.mrb[0].mxu0 %v2072
  %v2137 = vpop.f32.mrb[0].mxu0
  %v2138 = vadd.f32 0.0, %v2137
  %v2139 = vpop.f32.mrb[0].mxu0
  %v2140 = vpop.f32.mrb[0].mxu0
  %v2141 = vadd.f32 0.0, %v2140
  %v2142 = vpop.f32.mrb[0].mxu0
  %2143 = vmatprep.mubr.bf16.mxu0 0
  %2144 = vmatmul.mubr.bf16.gmra.mrb[0].mxu0 %v2075
  %v2145 = vpop.f32.mrb[0].mxu0
  %v2146 = vadd.f32 0.0, %v2145
  %v2147 = vpop.f32.mrb[0].mxu0
  %v2148 = vpop.f32.mrb[0].mxu0
  %v2149 = vadd.f32 0.0, %v2148
  %v2150 = vpop.f32.mrb[0].mxu0
  %2151 = vmatprep.mubr.bf16.mxu0 0
  %2152 = vmatmul.mubr.bf16.gmra.mrb[0].mxu0 %v2078
  %v2153 = vpop.f32.mrb[0].mxu0
  %v2154 = vadd.f32 0.0, %v2153
  %v2155 = vpop.f32.mrb[0].mxu0
  %v2156 = vpop.f32.mrb[0].mxu0
  %v2157 = vadd.f32 0.0, %v2156
  %v2158 = vpop.f32.mrb[0].mxu0
  %2159 = vmatprep.mubr.bf16.mxu0 0
  %2160 = vmatmul.mubr.bf16.gmra.mrb[0].mxu0 %v2081
  %v2161 = vpop.f32.mrb[0].mxu0
  %v2162 = vadd.f32 0.0, %v2161
  %v2163 = vpop.f32.mrb[0].mxu0
  %v2164 = vpop.f32.mrb[0].mxu0
  %v2165 = vadd.f32 0.0, %v2164
  %v2166 = vpop.f32.mrb[0].mxu0
  %2167 = vmatprep.mubr.bf16.mxu0 0
  %2168 = vmatmul.mubr.bf16.gmra.mrb[0].mxu0 %v2084
  %v2169 = vpop.f32.mrb[0].mxu0
  %v2170 = vadd.f32 0.0, %v2169
  %v2171 = vpop.f32.mrb[0].mxu0
  %v2172 = vpop.f32.mrb[0].mxu0
  %v2173 = vadd.f32 0.0, %v2172
  %v2174 = vpop.f32.mrb[0].mxu0
  %2175 = vmatprep.mubr.bf16.mxu0 0
  %2176 = vmatmul.mubr.bf16.gmra.mrb[0].mxu0 %v2087
  %v2177 = vpop.f32.mrb[0].mxu0
  %v2178 = vadd.f32 0.0, %v2177
  %v2179 = vpop.f32.mrb[0].mxu0
  %v2180 = vpop.f32.mrb[0].mxu0
  %v2181 = vadd.f32 0.0, %v2180
  %v2182 = vpop.f32.mrb[0].mxu0
  %2183 = vmatprep.mubr.bf16.mxu0 0
  %2184 = vmatmul.mubr.bf16.gmra.mrb[0].mxu0 %v2090
  %v2185 = vpop.f32.mrb[0].mxu0
  %v2186 = vadd.f32 0.0, %v2185
  %v2187 = vpop.f32.mrb[0].mxu0
  %v2188 = vpop.f32.mrb[0].mxu0
  %v2189 = vadd.f32 0.0, %v2188
  %v2190 = vpop.f32.mrb[0].mxu0
  %2191 = vmatprep.mubr.bf16.mxu0 0
  %2192 = vmatmul.mubr.bf16.gmra.mrb[0].mxu0 %v2093
  %v2193 = vpop.f32.mrb[0].mxu0
  %v2194 = vadd.f32 0.0, %v2193
  %v2195 = vpop.f32.mrb[0].mxu0
  %v2196 = vpop.f32.mrb[0].mxu0
  %v2197 = vadd.f32 0.0, %v2196
  %v2198 = vpop.f32.mrb[0].mxu0
  %2199 = vdwg.mxu0
  %v2200 = vadd.f32 %v1990, %v2130
  %v2201 = vadd.f32 %v1993, %v2133
  %v2202 = vadd.f32 %v1998, %v2138
  %v2203 = vadd.f32 %v2001, %v2141
  %v2204 = vadd.f32 %v2006, %v2146
  %v2205 = vadd.f32 %v2009, %v2149
  %v2206 = vadd.f32 %v2014, %v2154
  %v2207 = vadd.f32 %v2017, %v2157
  %v2208 = vadd.f32 %v2022, %v2162
  %v2209 = vadd.f32 %v2025, %v2165
  %v2210 = vadd.f32 %v2030, %v2170
  %v2211 = vadd.f32 %v2033, %v2173
  %v2212 = vadd.f32 %v2038, %v2178
  %v2213 = vadd.f32 %v2041, %v2181
  %v2214 = vadd.f32 %v2046, %v2186
  %v2215 = vadd.f32 %v2049, %v2189
  %v2216 = vadd.f32 %v2054, %v2194
  %v2217 = vadd.f32 %v2057, %v2197
  %v2218 = vld [vmem:[%s1 + $0x30] sm:$0xf]
  %v2219 = vld [vmem:[%s1 + $0x34] sm:$0xf]
  %v2222 = vunpack.c.l.b16 %v2218
  %v2223 = vunpack.c.l.b16 %v2219
  %v2224 = vpack.c.b16 %v2223, %v2222
  %v2227 = vsel %vm1789, %v1725, 0
  %v2230 = vsel %vm1789, %v1726, 0
  %v2233 = vsel %vm1789, %v1727, 0
  %v2236 = vsel %vm1789, %v1728, 0
  %v2239 = vsel %vm1789, %v1729, 0
  %v2242 = vsel %vm1789, %v1730, 0
  %v2245 = vsel %vm1789, %v1731, 0
  %v2248 = vsel %vm1789, %v1732, 0
  %v2251 = vsel %vm1789, %v1733, 0
  %2253 = vmatprep.subr.bf16.mxu0 0
  %2254 = vmatpush1.bf16.msra.mxu0 %v2224
  %2255 = vmatprep.subr.bf16.mxu0 0
  %2256 = vmatpush1.bf16.msra.mxu0 0
  %2257 = vmatprep.subr.bf16.mxu0 0
  %2258 = vmatpush1.bf16.msra.mxu0 0
  %2259 = vmatprep.subr.bf16.mxu0 0
  %2260 = vmatpush1.bf16.msra.mxu0 0
  %2261 = vmatprep.subr.bf16.mxu0 0
  %2262 = vmatpush1.bf16.msra.mxu0 0
  %2263 = vmatprep.subr.bf16.mxu0 0
  %2264 = vmatpush1.bf16.msra.mxu0 0
  %2265 = vmatprep.subr.bf16.mxu0 0
  %2266 = vmatpush1.bf16.msra.mxu0 0
  %2267 = vmatprep.subr.bf16.mxu0 0
  %2268 = vmatpush1.bf16.msra.mxu0 0
  %2269 = vmatprep.subr.bf16.mxu0 0
  %2270 = vmatpush1.bf16.msra.mxu0 0
  %2271 = vmatprep.subr.bf16.mxu0 0
  %2272 = vmatpush1.bf16.msra.mxu0 0
  %2273 = vmatprep.subr.bf16.mxu0 0
  %2274 = vmatpush1.bf16.msra.mxu0 0
  %2275 = vmatprep.subr.bf16.mxu0 0
  %2276 = vmatpush1.bf16.msra.mxu0 0
  %2277 = vmatprep.subr.bf16.mxu0 0
  %2278 = vmatpush1.bf16.msra.mxu0 0
  %2279 = vmatprep.subr.bf16.mxu0 0
  %2280 = vmatpush1.bf16.msra.mxu0 0
  %2281 = vmatprep.subr.bf16.mxu0 0
  %2282 = vmatpush1.bf16.msra.mxu0 0
  %2283 = vmatprep.subr.bf16.mxu0 0
  %2284 = vmatpush1.bf16.msra.mxu0 0
  %2285 = vmatprep.mubr.bf16.mxu0 0
  %2286 = vmatmul.mubr.bf16.gmra.mrb[0].mxu0 %v2227
  %v2287 = vpop.f32.mrb[0].mxu0
  %v2288 = vadd.f32 0.0, %v2287
  %v2289 = vpop.f32.mrb[0].mxu0
  %v2290 = vpop.f32.mrb[0].mxu0
  %v2291 = vadd.f32 0.0, %v2290
  %v2292 = vpop.f32.mrb[0].mxu0
  %2293 = vmatprep.mubr.bf16.mxu0 0
  %2294 = vmatmul.mubr.bf16.gmra.mrb[0].mxu0 %v2230
  %v2295 = vpop.f32.mrb[0].mxu0
  %v2296 = vadd.f32 0.0, %v2295
  %v2297 = vpop.f32.mrb[0].mxu0
  %v2298 = vpop.f32.mrb[0].mxu0
  %v2299 = vadd.f32 0.0, %v2298
  %v2300 = vpop.f32.mrb[0].mxu0
  %2301 = vmatprep.mubr.bf16.mxu0 0
  %2302 = vmatmul.mubr.bf16.gmra.mrb[0].mxu0 %v2233
  %v2303 = vpop.f32.mrb[0].mxu0
  %v2304 = vadd.f32 0.0, %v2303
  %v2305 = vpop.f32.mrb[0].mxu0
  %v2306 = vpop.f32.mrb[0].mxu0
  %v2307 = vadd.f32 0.0, %v2306
  %v2308 = vpop.f32.mrb[0].mxu0
  %2309 = vmatprep.mubr.bf16.mxu0 0
  %2310 = vmatmul.mubr.bf16.gmra.mrb[0].mxu0 %v2236
  %v2311 = vpop.f32.mrb[0].mxu0
  %v2312 = vadd.f32 0.0, %v2311
  %v2313 = vpop.f32.mrb[0].mxu0
  %v2314 = vpop.f32.mrb[0].mxu0
  %v2315 = vadd.f32 0.0, %v2314
  %v2316 = vpop.f32.mrb[0].mxu0
  %2317 = vmatprep.mubr.bf16.mxu0 0
  %2318 = vmatmul.mubr.bf16.gmra.mrb[0].mxu0 %v2239
  %v2319 = vpop.f32.mrb[0].mxu0
  %v2320 = vadd.f32 0.0, %v2319
  %v2321 = vpop.f32.mrb[0].mxu0
  %v2322 = vpop.f32.mrb[0].mxu0
  %v2323 = vadd.f32 0.0, %v2322
  %v2324 = vpop.f32.mrb[0].mxu0
  %2325 = vmatprep.mubr.bf16.mxu0 0
  %2326 = vmatmul.mubr.bf16.gmra.mrb[0].mxu0 %v2242
  %v2327 = vpop.f32.mrb[0].mxu0
  %v2328 = vadd.f32 0.0, %v2327
  %v2329 = vpop.f32.mrb[0].mxu0
  %v2330 = vpop.f32.mrb[0].mxu0
  %v2331 = vadd.f32 0.0, %v2330
  %v2332 = vpop.f32.mrb[0].mxu0
  %2333 = vmatprep.mubr.bf16.mxu0 0
  %2334 = vmatmul.mubr.bf16.gmra.mrb[0].mxu0 %v2245
  %v2335 = vpop.f32.mrb[0].mxu0
  %v2336 = vadd.f32 0.0, %v2335
  %v2337 = vpop.f32.mrb[0].mxu0
  %v2338 = vpop.f32.mrb[0].mxu0
  %v2339 = vadd.f32 0.0, %v2338
  %v2340 = vpop.f32.mrb[0].mxu0
  %2341 = vmatprep.mubr.bf16.mxu0 0
  %2342 = vmatmul.mubr.bf16.gmra.mrb[0].mxu0 %v2248
  %v2343 = vpop.f32.mrb[0].mxu0
  %v2344 = vadd.f32 0.0, %v2343
  %v2345 = vpop.f32.mrb[0].mxu0
  %v2346 = vpop.f32.mrb[0].mxu0
  %v2347 = vadd.f32 0.0, %v2346
  %v2348 = vpop.f32.mrb[0].mxu0
  %2349 = vmatprep.mubr.bf16.mxu0 0
  %2350 = vmatmul.mubr.bf16.gmra.mrb[0].mxu0 %v2251
  %v2351 = vpop.f32.mrb[0].mxu0
  %v2352 = vadd.f32 0.0, %v2351
  %v2353 = vpop.f32.mrb[0].mxu0
  %v2354 = vpop.f32.mrb[0].mxu0
  %v2355 = vadd.f32 0.0, %v2354
  %v2356 = vpop.f32.mrb[0].mxu0
  %2357 = vdwg.mxu0
  %v2358 = vadd.f32 %v2200, %v2288
  %v2359 = vadd.f32 %v2201, %v2291
  %v2360 = vadd.f32 %v2202, %v2296
  %v2361 = vadd.f32 %v2203, %v2299
  %v2362 = vadd.f32 %v2204, %v2304
  %v2363 = vadd.f32 %v2205, %v2307
  %v2364 = vadd.f32 %v2206, %v2312
  %v2365 = vadd.f32 %v2207, %v2315
  %v2366 = vadd.f32 %v2208, %v2320
  %v2367 = vadd.f32 %v2209, %v2323
  %v2368 = vadd.f32 %v2210, %v2328
  %v2369 = vadd.f32 %v2211, %v2331
  %v2370 = vadd.f32 %v2212, %v2336
  %v2371 = vadd.f32 %v2213, %v2339
  %v2372 = vadd.f32 %v2214, %v2344
  %v2373 = vadd.f32 %v2215, %v2347
  %v2374 = vadd.f32 %v2216, %v2352
  %v2375 = vadd.f32 %v2217, %v2355
  %v2376 = vld [vmem:[%s1 + $0x38] sm:$0xf]
  %v2377 = vld [vmem:[%s1 + $0x3c] sm:$0xf]
  %v2380 = vunpack.c.l.b16 %v2376
  %v2381 = vunpack.c.l.b16 %v2377
  %v2382 = vpack.c.b16 %v2381, %v2380
  %v2385 = vsel %vm1789, %v1734, 0
  %v2388 = vsel %vm1789, %v1735, 0
  %v2391 = vsel %vm1789, %v1736, 0
  %v2394 = vsel %vm1789, %v1737, 0
  %v2397 = vsel %vm1789, %v1738, 0
  %v2400 = vsel %vm1789, %v1739, 0
  %v2403 = vsel %vm1789, %v1740, 0
  %v2406 = vsel %vm1789, %v1741, 0
  %v2409 = vsel %vm1789, %v1742, 0
  %2411 = vmatprep.subr.bf16.mxu0 0
  %2412 = vmatpush1.bf16.msra.mxu0 %v2382
  %2413 = vmatprep.subr.bf16.mxu0 0
  %2414 = vmatpush1.bf16.msra.mxu0 0
  %2415 = vmatprep.subr.bf16.mxu0 0
  %2416 = vmatpush1.bf16.msra.mxu0 0
  %2417 = vmatprep.subr.bf16.mxu0 0
  %2418 = vmatpush1.bf16.msra.mxu0 0
  %2419 = vmatprep.subr.bf16.mxu0 0
  %2420 = vmatpush1.bf16.msra.mxu0 0
  %2421 = vmatprep.subr.bf16.mxu0 0
  %2422 = vmatpush1.bf16.msra.mxu0 0
  %2423 = vmatprep.subr.bf16.mxu0 0
  %2424 = vmatpush1.bf16.msra.mxu0 0
  %2425 = vmatprep.subr.bf16.mxu0 0
  %2426 = vmatpush1.bf16.msra.mxu0 0
  %2427 = vmatprep.subr.bf16.mxu0 0
  %2428 = vmatpush1.bf16.msra.mxu0 0
  %2429 = vmatprep.subr.bf16.mxu0 0
  %2430 = vmatpush1.bf16.msra.mxu0 0
  %2431 = vmatprep.subr.bf16.mxu0 0
  %2432 = vmatpush1.bf16.msra.mxu0 0
  %2433 = vmatprep.subr.bf16.mxu0 0
  %2434 = vmatpush1.bf16.msra.mxu0 0
  %2435 = vmatprep.subr.bf16.mxu0 0
  %2436 = vmatpush1.bf16.msra.mxu0 0
  %2437 = vmatprep.subr.bf16.mxu0 0
  %2438 = vmatpush1.bf16.msra.mxu0 0
  %2439 = vmatprep.subr.bf16.mxu0 0
  %2440 = vmatpush1.bf16.msra.mxu0 0
  %2441 = vmatprep.subr.bf16.mxu0 0
  %2442 = vmatpush1.bf16.msra.mxu0 0
  %2443 = vmatprep.mubr.bf16.mxu0 0
  %2444 = vmatmul.mubr.bf16.gmra.mrb[0].mxu0 %v2385
  %v2445 = vpop.f32.mrb[0].mxu0
  %v2446 = vadd.f32 0.0, %v2445
  %v2447 = vpop.f32.mrb[0].mxu0
  %v2448 = vpop.f32.mrb[0].mxu0
  %v2449 = vadd.f32 0.0, %v2448
  %v2450 = vpop.f32.mrb[0].mxu0
  %2451 = vmatprep.mubr.bf16.mxu0 0
  %2452 = vmatmul.mubr.bf16.gmra.mrb[0].mxu0 %v2388
  %v2453 = vpop.f32.mrb[0].mxu0
  %v2454 = vadd.f32 0.0, %v2453
  %v2455 = vpop.f32.mrb[0].mxu0
  %v2456 = vpop.f32.mrb[0].mxu0
  %v2457 = vadd.f32 0.0, %v2456
  %v2458 = vpop.f32.mrb[0].mxu0
  %2459 = vmatprep.mubr.bf16.mxu0 0
  %2460 = vmatmul.mubr.bf16.gmra.mrb[0].mxu0 %v2391
  %v2461 = vpop.f32.mrb[0].mxu0
  %v2462 = vadd.f32 0.0, %v2461
  %v2463 = vpop.f32.mrb[0].mxu0
  %v2464 = vpop.f32.mrb[0].mxu0
  %v2465 = vadd.f32 0.0, %v2464
  %v2466 = vpop.f32.mrb[0].mxu0
  %2467 = vmatprep.mubr.bf16.mxu0 0
  %2468 = vmatmul.mubr.bf16.gmra.mrb[0].mxu0 %v2394
  %v2469 = vpop.f32.mrb[0].mxu0
  %v2470 = vadd.f32 0.0, %v2469
  %v2471 = vpop.f32.mrb[0].mxu0
  %v2472 = vpop.f32.mrb[0].mxu0
  %v2473 = vadd.f32 0.0, %v2472
  %v2474 = vpop.f32.mrb[0].mxu0
  %2475 = vmatprep.mubr.bf16.mxu0 0
  %2476 = vmatmul.mubr.bf16.gmra.mrb[0].mxu0 %v2397
  %v2477 = vpop.f32.mrb[0].mxu0
  %v2478 = vadd.f32 0.0, %v2477
  %v2479 = vpop.f32.mrb[0].mxu0
  %v2480 = vpop.f32.mrb[0].mxu0
  %v2481 = vadd.f32 0.0, %v2480
  %v2482 = vpop.f32.mrb[0].mxu0
  %2483 = vmatprep.mubr.bf16.mxu0 0
  %2484 = vmatmul.mubr.bf16.gmra.mrb[0].mxu0 %v2400
  %v2485 = vpop.f32.mrb[0].mxu0
  %v2486 = vadd.f32 0.0, %v2485
  %v2487 = vpop.f32.mrb[0].mxu0
  %v2488 = vpop.f32.mrb[0].mxu0
  %v2489 = vadd.f32 0.0, %v2488
  %v2490 = vpop.f32.mrb[0].mxu0
  %2491 = vmatprep.mubr.bf16.mxu0 0
  %2492 = vmatmul.mubr.bf16.gmra.mrb[0].mxu0 %v2403
  %v2493 = vpop.f32.mrb[0].mxu0
  %v2494 = vadd.f32 0.0, %v2493
  %v2495 = vpop.f32.mrb[0].mxu0
  %v2496 = vpop.f32.mrb[0].mxu0
  %v2497 = vadd.f32 0.0, %v2496
  %v2498 = vpop.f32.mrb[0].mxu0
  %2499 = vmatprep.mubr.bf16.mxu0 0
  %2500 = vmatmul.mubr.bf16.gmra.mrb[0].mxu0 %v2406
  %v2501 = vpop.f32.mrb[0].mxu0
  %v2502 = vadd.f32 0.0, %v2501
  %v2503 = vpop.f32.mrb[0].mxu0
  %v2504 = vpop.f32.mrb[0].mxu0
  %v2505 = vadd.f32 0.0, %v2504
  %v2506 = vpop.f32.mrb[0].mxu0
  %2507 = vmatprep.mubr.bf16.mxu0 0
  %2508 = vmatmul.mubr.bf16.gmra.mrb[0].mxu0 %v2409
  %v2509 = vpop.f32.mrb[0].mxu0
  %v2510 = vadd.f32 0.0, %v2509
  %v2511 = vpop.f32.mrb[0].mxu0
  %v2512 = vpop.f32.mrb[0].mxu0
  %v2513 = vadd.f32 0.0, %v2512
  %v2514 = vpop.f32.mrb[0].mxu0
  %2515 = vdwg.mxu0
  %v2516 = vadd.f32 %v2358, %v2446
  %v2517 = vadd.f32 %v2359, %v2449
  %v2518 = vadd.f32 %v2360, %v2454
  %v2519 = vadd.f32 %v2361, %v2457
  %v2520 = vadd.f32 %v2362, %v2462
  %v2521 = vadd.f32 %v2363, %v2465
  %v2522 = vadd.f32 %v2364, %v2470
  %v2523 = vadd.f32 %v2365, %v2473
  %v2524 = vadd.f32 %v2366, %v2478
  %v2525 = vadd.f32 %v2367, %v2481
  %v2526 = vadd.f32 %v2368, %v2486
  %v2527 = vadd.f32 %v2369, %v2489
  %v2528 = vadd.f32 %v2370, %v2494
  %v2529 = vadd.f32 %v2371, %v2497
  %v2530 = vadd.f32 %v2372, %v2502
  %v2531 = vadd.f32 %v2373, %v2505
  %v2532 = vadd.f32 %v2374, %v2510
  %v2533 = vadd.f32 %v2375, %v2513
  %v2534 = vld [vmem:[%s1 + $0x40] sm:$0xf]
  %v2535 = vld [vmem:[%s1 + $0x44] sm:$0xf]
  %v2538 = vunpack.c.l.b16 %v2534
  %v2539 = vunpack.c.l.b16 %v2535
  %v2540 = vpack.c.b16 %v2539, %v2538
  %v2543 = vsel %vm1789, %v1743, 0
  %v2546 = vsel %vm1789, %v1744, 0
  %v2549 = vsel %vm1789, %v1745, 0
  %v2552 = vsel %vm1789, %v1746, 0
  %v2555 = vsel %vm1789, %v1747, 0
  %v2558 = vsel %vm1789, %v1748, 0
  %v2561 = vsel %vm1789, %v1749, 0
  %v2564 = vsel %vm1789, %v1750, 0
  %v2567 = vsel %vm1789, %v1751, 0
  %2569 = vmatprep.subr.bf16.mxu0 0
  %2570 = vmatpush1.bf16.msra.mxu0 %v2540
  %2571 = vmatprep.subr.bf16.mxu0 0
  %2572 = vmatpush1.bf16.msra.mxu0 0
  %2573 = vmatprep.subr.bf16.mxu0 0
  %2574 = vmatpush1.bf16.msra.mxu0 0
  %2575 = vmatprep.subr.bf16.mxu0 0
  %2576 = vmatpush1.bf16.msra.mxu0 0
  %2577 = vmatprep.subr.bf16.mxu0 0
  %2578 = vmatpush1.bf16.msra.mxu0 0
  %2579 = vmatprep.subr.bf16.mxu0 0
  %2580 = vmatpush1.bf16.msra.mxu0 0
  %2581 = vmatprep.subr.bf16.mxu0 0
  %2582 = vmatpush1.bf16.msra.mxu0 0
  %2583 = vmatprep.subr.bf16.mxu0 0
  %2584 = vmatpush1.bf16.msra.mxu0 0
  %2585 = vmatprep.subr.bf16.mxu0 0
  %2586 = vmatpush1.bf16.msra.mxu0 0
  %2587 = vmatprep.subr.bf16.mxu0 0
  %2588 = vmatpush1.bf16.msra.mxu0 0
  %2589 = vmatprep.subr.bf16.mxu0 0
  %2590 = vmatpush1.bf16.msra.mxu0 0
  %2591 = vmatprep.subr.bf16.mxu0 0
  %2592 = vmatpush1.bf16.msra.mxu0 0
  %2593 = vmatprep.subr.bf16.mxu0 0
  %2594 = vmatpush1.bf16.msra.mxu0 0
  %2595 = vmatprep.subr.bf16.mxu0 0
  %2596 = vmatpush1.bf16.msra.mxu0 0
  %2597 = vmatprep.subr.bf16.mxu0 0
  %2598 = vmatpush1.bf16.msra.mxu0 0
  %2599 = vmatprep.subr.bf16.mxu0 0
  %2600 = vmatpush1.bf16.msra.mxu0 0
  %2601 = vmatprep.mubr.bf16.mxu0 0
  %2602 = vmatmul.mubr.bf16.gmra.mrb[0].mxu0 %v2543
  %v2603 = vpop.f32.mrb[0].mxu0
  %v2604 = vadd.f32 0.0, %v2603
  %v2605 = vpop.f32.mrb[0].mxu0
  %v2606 = vpop.f32.mrb[0].mxu0
  %v2607 = vadd.f32 0.0, %v2606
  %v2608 = vpop.f32.mrb[0].mxu0
  %2609 = vmatprep.mubr.bf16.mxu0 0
  %2610 = vmatmul.mubr.bf16.gmra.mrb[0].mxu0 %v2546
  %v2611 = vpop.f32.mrb[0].mxu0
  %v2612 = vadd.f32 0.0, %v2611
  %v2613 = vpop.f32.mrb[0].mxu0
  %v2614 = vpop.f32.mrb[0].mxu0
  %v2615 = vadd.f32 0.0, %v2614
  %v2616 = vpop.f32.mrb[0].mxu0
  %2617 = vmatprep.mubr.bf16.mxu0 0
  %2618 = vmatmul.mubr.bf16.gmra.mrb[0].mxu0 %v2549
  %v2619 = vpop.f32.mrb[0].mxu0
  %v2620 = vadd.f32 0.0, %v2619
  %v2621 = vpop.f32.mrb[0].mxu0
  %v2622 = vpop.f32.mrb[0].mxu0
  %v2623 = vadd.f32 0.0, %v2622
  %v2624 = vpop.f32.mrb[0].mxu0
  %2625 = vmatprep.mubr.bf16.mxu0 0
  %2626 = vmatmul.mubr.bf16.gmra.mrb[0].mxu0 %v2552
  %v2627 = vpop.f32.mrb[0].mxu0
  %v2628 = vadd.f32 0.0, %v2627
  %v2629 = vpop.f32.mrb[0].mxu0
  %v2630 = vpop.f32.mrb[0].mxu0
  %v2631 = vadd.f32 0.0, %v2630
  %v2632 = vpop.f32.mrb[0].mxu0
  %2633 = vmatprep.mubr.bf16.mxu0 0
  %2634 = vmatmul.mubr.bf16.gmra.mrb[0].mxu0 %v2555
  %v2635 = vpop.f32.mrb[0].mxu0
  %v2636 = vadd.f32 0.0, %v2635
  %v2637 = vpop.f32.mrb[0].mxu0
  %v2638 = vpop.f32.mrb[0].mxu0
  %v2639 = vadd.f32 0.0, %v2638
  %v2640 = vpop.f32.mrb[0].mxu0
  %2641 = vmatprep.mubr.bf16.mxu0 0
  %2642 = vmatmul.mubr.bf16.gmra.mrb[0].mxu0 %v2558
  %v2643 = vpop.f32.mrb[0].mxu0
  %v2644 = vadd.f32 0.0, %v2643
  %v2645 = vpop.f32.mrb[0].mxu0
  %v2646 = vpop.f32.mrb[0].mxu0
  %v2647 = vadd.f32 0.0, %v2646
  %v2648 = vpop.f32.mrb[0].mxu0
  %2649 = vmatprep.mubr.bf16.mxu0 0
  %2650 = vmatmul.mubr.bf16.gmra.mrb[0].mxu0 %v2561
  %v2651 = vpop.f32.mrb[0].mxu0
  %v2652 = vadd.f32 0.0, %v2651
  %v2653 = vpop.f32.mrb[0].mxu0
  %v2654 = vpop.f32.mrb[0].mxu0
  %v2655 = vadd.f32 0.0, %v2654
  %v2656 = vpop.f32.mrb[0].mxu0
  %2657 = vmatprep.mubr.bf16.mxu0 0
  %2658 = vmatmul.mubr.bf16.gmra.mrb[0].mxu0 %v2564
  %v2659 = vpop.f32.mrb[0].mxu0
  %v2660 = vadd.f32 0.0, %v2659
  %v2661 = vpop.f32.mrb[0].mxu0
  %v2662 = vpop.f32.mrb[0].mxu0
  %v2663 = vadd.f32 0.0, %v2662
  %v2664 = vpop.f32.mrb[0].mxu0
  %2665 = vmatprep.mubr.bf16.mxu0 0
  %2666 = vmatmul.mubr.bf16.gmra.mrb[0].mxu0 %v2567
  %v2667 = vpop.f32.mrb[0].mxu0
  %v2668 = vadd.f32 0.0, %v2667
  %v2669 = vpop.f32.mrb[0].mxu0
  %v2670 = vpop.f32.mrb[0].mxu0
  %v2671 = vadd.f32 0.0, %v2670
  %v2672 = vpop.f32.mrb[0].mxu0
  %2673 = vdwg.mxu0
  %v2674 = vadd.f32 %v2516, %v2604
  %v2675 = vadd.f32 %v2517, %v2607
  %v2676 = vadd.f32 %v2518, %v2612
  %v2677 = vadd.f32 %v2519, %v2615
  %v2678 = vadd.f32 %v2520, %v2620
  %v2679 = vadd.f32 %v2521, %v2623
  %v2680 = vadd.f32 %v2522, %v2628
  %v2681 = vadd.f32 %v2523, %v2631
  %v2682 = vadd.f32 %v2524, %v2636
  %v2683 = vadd.f32 %v2525, %v2639
  %v2684 = vadd.f32 %v2526, %v2644
  %v2685 = vadd.f32 %v2527, %v2647
  %v2686 = vadd.f32 %v2528, %v2652
  %v2687 = vadd.f32 %v2529, %v2655
  %v2688 = vadd.f32 %v2530, %v2660
  %v2689 = vadd.f32 %v2531, %v2663
  %v2690 = vadd.f32 %v2532, %v2668
  %v2691 = vadd.f32 %v2533, %v2671
  %v2692 = vld [vmem:[%s1 + $0x48] sm:$0xf]
  %v2693 = vld [vmem:[%s1 + $0x4c] sm:$0xf]
  %v2696 = vunpack.c.l.b16 %v2692
  %v2697 = vunpack.c.l.b16 %v2693
  %v2698 = vpack.c.b16 %v2697, %v2696
  %v2701 = vsel %vm1789, %v1752, 0
  %v2704 = vsel %vm1789, %v1753, 0
  %v2707 = vsel %vm1789, %v1754, 0
  %v2710 = vsel %vm1789, %v1755, 0
  %v2713 = vsel %vm1789, %v1756, 0
  %v2716 = vsel %vm1789, %v1757, 0
  %v2719 = vsel %vm1789, %v1758, 0
  %v2722 = vsel %vm1789, %v1759, 0
  %v2725 = vsel %vm1789, %v1760, 0
  %2727 = vmatprep.subr.bf16.mxu0 0
  %2728 = vmatpush1.bf16.msra.mxu0 %v2698
  %2729 = vmatprep.subr.bf16.mxu0 0
  %2730 = vmatpush1.bf16.msra.mxu0 0
  %2731 = vmatprep.subr.bf16.mxu0 0
  %2732 = vmatpush1.bf16.msra.mxu0 0
  %2733 = vmatprep.subr.bf16.mxu0 0
  %2734 = vmatpush1.bf16.msra.mxu0 0
  %2735 = vmatprep.subr.bf16.mxu0 0
  %2736 = vmatpush1.bf16.msra.mxu0 0
  %2737 = vmatprep.subr.bf16.mxu0 0
  %2738 = vmatpush1.bf16.msra.mxu0 0
  %2739 = vmatprep.subr.bf16.mxu0 0
  %2740 = vmatpush1.bf16.msra.mxu0 0
  %2741 = vmatprep.subr.bf16.mxu0 0
  %2742 = vmatpush1.bf16.msra.mxu0 0
  %2743 = vmatprep.subr.bf16.mxu0 0
  %2744 = vmatpush1.bf16.msra.mxu0 0
  %2745 = vmatprep.subr.bf16.mxu0 0
  %2746 = vmatpush1.bf16.msra.mxu0 0
  %2747 = vmatprep.subr.bf16.mxu0 0
  %2748 = vmatpush1.bf16.msra.mxu0 0
  %2749 = vmatprep.subr.bf16.mxu0 0
  %2750 = vmatpush1.bf16.msra.mxu0 0
  %2751 = vmatprep.subr.bf16.mxu0 0
  %2752 = vmatpush1.bf16.msra.mxu0 0
  %2753 = vmatprep.subr.bf16.mxu0 0
  %2754 = vmatpush1.bf16.msra.mxu0 0
  %2755 = vmatprep.subr.bf16.mxu0 0
  %2756 = vmatpush1.bf16.msra.mxu0 0
  %2757 = vmatprep.subr.bf16.mxu0 0
  %2758 = vmatpush1.bf16.msra.mxu0 0
  %2759 = vmatprep.mubr.bf16.mxu0 0
  %2760 = vmatmul.mubr.bf16.gmra.mrb[0].mxu0 %v2701
  %v2761 = vpop.f32.mrb[0].mxu0
  %v2762 = vadd.f32 0.0, %v2761
  %v2763 = vpop.f32.mrb[0].mxu0
  %v2764 = vpop.f32.mrb[0].mxu0
  %v2765 = vadd.f32 0.0, %v2764
  %v2766 = vpop.f32.mrb[0].mxu0
  %2767 = vmatprep.mubr.bf16.mxu0 0
  %2768 = vmatmul.mubr.bf16.gmra.mrb[0].mxu0 %v2704
  %v2769 = vpop.f32.mrb[0].mxu0
  %v2770 = vadd.f32 0.0, %v2769
  %v2771 = vpop.f32.mrb[0].mxu0
  %v2772 = vpop.f32.mrb[0].mxu0
  %v2773 = vadd.f32 0.0, %v2772
  %v2774 = vpop.f32.mrb[0].mxu0
  %2775 = vmatprep.mubr.bf16.mxu0 0
  %2776 = vmatmul.mubr.bf16.gmra.mrb[0].mxu0 %v2707
  %v2777 = vpop.f32.mrb[0].mxu0
  %v2778 = vadd.f32 0.0, %v2777
  %v2779 = vpop.f32.mrb[0].mxu0
  %v2780 = vpop.f32.mrb[0].mxu0
  %v2781 = vadd.f32 0.0, %v2780
  %v2782 = vpop.f32.mrb[0].mxu0
  %2783 = vmatprep.mubr.bf16.mxu0 0
  %2784 = vmatmul.mubr.bf16.gmra.mrb[0].mxu0 %v2710
  %v2785 = vpop.f32.mrb[0].mxu0
  %v2786 = vadd.f32 0.0, %v2785
  %v2787 = vpop.f32.mrb[0].mxu0
  %v2788 = vpop.f32.mrb[0].mxu0
  %v2789 = vadd.f32 0.0, %v2788
  %v2790 = vpop.f32.mrb[0].mxu0
  %2791 = vmatprep.mubr.bf16.mxu0 0
  %2792 = vmatmul.mubr.bf16.gmra.mrb[0].mxu0 %v2713
  %v2793 = vpop.f32.mrb[0].mxu0
  %v2794 = vadd.f32 0.0, %v2793
  %v2795 = vpop.f32.mrb[0].mxu0
  %v2796 = vpop.f32.mrb[0].mxu0
  %v2797 = vadd.f32 0.0, %v2796
  %v2798 = vpop.f32.mrb[0].mxu0
  %2799 = vmatprep.mubr.bf16.mxu0 0
  %2800 = vmatmul.mubr.bf16.gmra.mrb[0].mxu0 %v2716
  %v2801 = vpop.f32.mrb[0].mxu0
  %v2802 = vadd.f32 0.0, %v2801
  %v2803 = vpop.f32.mrb[0].mxu0
  %v2804 = vpop.f32.mrb[0].mxu0
  %v2805 = vadd.f32 0.0, %v2804
  %v2806 = vpop.f32.mrb[0].mxu0
  %2807 = vmatprep.mubr.bf16.mxu0 0
  %2808 = vmatmul.mubr.bf16.gmra.mrb[0].mxu0 %v2719
  %v2809 = vpop.f32.mrb[0].mxu0
  %v2810 = vadd.f32 0.0, %v2809
  %v2811 = vpop.f32.mrb[0].mxu0
  %v2812 = vpop.f32.mrb[0].mxu0
  %v2813 = vadd.f32 0.0, %v2812
  %v2814 = vpop.f32.mrb[0].mxu0
  %2815 = vmatprep.mubr.bf16.mxu0 0
  %2816 = vmatmul.mubr.bf16.gmra.mrb[0].mxu0 %v2722
  %v2817 = vpop.f32.mrb[0].mxu0
  %v2818 = vadd.f32 0.0, %v2817
  %v2819 = vpop.f32.mrb[0].mxu0
  %v2820 = vpop.f32.mrb[0].mxu0
  %v2821 = vadd.f32 0.0, %v2820
  %v2822 = vpop.f32.mrb[0].mxu0
  %2823 = vmatprep.mubr.bf16.mxu0 0
  %2824 = vmatmul.mubr.bf16.gmra.mrb[0].mxu0 %v2725
  %v2825 = vpop.f32.mrb[0].mxu0
  %v2826 = vadd.f32 0.0, %v2825
  %v2827 = vpop.f32.mrb[0].mxu0
  %v2828 = vpop.f32.mrb[0].mxu0
  %v2829 = vadd.f32 0.0, %v2828
  %v2830 = vpop.f32.mrb[0].mxu0
  %2831 = vdwg.mxu0
  %v2832 = vadd.f32 %v2674, %v2762
  %v2833 = vadd.f32 %v2675, %v2765
  %v2834 = vadd.f32 %v2676, %v2770
  %v2835 = vadd.f32 %v2677, %v2773
  %v2836 = vadd.f32 %v2678, %v2778
  %v2837 = vadd.f32 %v2679, %v2781
  %v2838 = vadd.f32 %v2680, %v2786
  %v2839 = vadd.f32 %v2681, %v2789
  %v2840 = vadd.f32 %v2682, %v2794
  %v2841 = vadd.f32 %v2683, %v2797
  %v2842 = vadd.f32 %v2684, %v2802
  %v2843 = vadd.f32 %v2685, %v2805
  %v2844 = vadd.f32 %v2686, %v2810
  %v2845 = vadd.f32 %v2687, %v2813
  %v2846 = vadd.f32 %v2688, %v2818
  %v2847 = vadd.f32 %v2689, %v2821
  %v2848 = vadd.f32 %v2690, %v2826
  %v2849 = vadd.f32 %v2691, %v2829
  %v2850 = vld [vmem:[%s1 + $0x50] sm:$0xf]
  %v2851 = vld [vmem:[%s1 + $0x54] sm:$0xf]
  %v2854 = vunpack.c.l.b16 %v2850
  %v2855 = vunpack.c.l.b16 %v2851
  %v2856 = vpack.c.b16 %v2855, %v2854
  %v2859 = vsel %vm1789, %v1761, 0
  %v2862 = vsel %vm1789, %v1762, 0
  %v2865 = vsel %vm1789, %v1763, 0
  %v2868 = vsel %vm1789, %v1764, 0
  %v2871 = vsel %vm1789, %v1765, 0
  %v2874 = vsel %vm1789, %v1766, 0
  %v2877 = vsel %vm1789, %v1767, 0
  %v2880 = vsel %vm1789, %v1768, 0
  %v2883 = vsel %vm1789, %v1769, 0
  %2885 = vmatprep.subr.bf16.mxu0 0
  %2886 = vmatpush1.bf16.msra.mxu0 %v2856
  %2887 = vmatprep.subr.bf16.mxu0 0
  %2888 = vmatpush1.bf16.msra.mxu0 0
  %2889 = vmatprep.subr.bf16.mxu0 0
  %2890 = vmatpush1.bf16.msra.mxu0 0
  %2891 = vmatprep.subr.bf16.mxu0 0
  %2892 = vmatpush1.bf16.msra.mxu0 0
  %2893 = vmatprep.subr.bf16.mxu0 0
  %2894 = vmatpush1.bf16.msra.mxu0 0
  %2895 = vmatprep.subr.bf16.mxu0 0
  %2896 = vmatpush1.bf16.msra.mxu0 0
  %2897 = vmatprep.subr.bf16.mxu0 0
  %2898 = vmatpush1.bf16.msra.mxu0 0
  %2899 = vmatprep.subr.bf16.mxu0 0
  %2900 = vmatpush1.bf16.msra.mxu0 0
  %2901 = vmatprep.subr.bf16.mxu0 0
  %2902 = vmatpush1.bf16.msra.mxu0 0
  %2903 = vmatprep.subr.bf16.mxu0 0
  %2904 = vmatpush1.bf16.msra.mxu0 0
  %2905 = vmatprep.subr.bf16.mxu0 0
  %2906 = vmatpush1.bf16.msra.mxu0 0
  %2907 = vmatprep.subr.bf16.mxu0 0
  %2908 = vmatpush1.bf16.msra.mxu0 0
  %2909 = vmatprep.subr.bf16.mxu0 0
  %2910 = vmatpush1.bf16.msra.mxu0 0
  %2911 = vmatprep.subr.bf16.mxu0 0
  %2912 = vmatpush1.bf16.msra.mxu0 0
  %2913 = vmatprep.subr.bf16.mxu0 0
  %2914 = vmatpush1.bf16.msra.mxu0 0
  %2915 = vmatprep.subr.bf16.mxu0 0
  %2916 = vmatpush1.bf16.msra.mxu0 0
  %2917 = vmatprep.mubr.bf16.mxu0 0
  %2918 = vmatmul.mubr.bf16.gmra.mrb[0].mxu0 %v2859
  %v2919 = vpop.f32.mrb[0].mxu0
  %v2920 = vadd.f32 0.0, %v2919
  %v2921 = vpop.f32.mrb[0].mxu0
  %v2922 = vpop.f32.mrb[0].mxu0
  %v2923 = vadd.f32 0.0, %v2922
  %v2924 = vpop.f32.mrb[0].mxu0
  %2925 = vmatprep.mubr.bf16.mxu0 0
  %2926 = vmatmul.mubr.bf16.gmra.mrb[0].mxu0 %v2862
  %v2927 = vpop.f32.mrb[0].mxu0
  %v2928 = vadd.f32 0.0, %v2927
  %v2929 = vpop.f32.mrb[0].mxu0
  %v2930 = vpop.f32.mrb[0].mxu0
  %v2931 = vadd.f32 0.0, %v2930
  %v2932 = vpop.f32.mrb[0].mxu0
  %2933 = vmatprep.mubr.bf16.mxu0 0
  %2934 = vmatmul.mubr.bf16.gmra.mrb[0].mxu0 %v2865
  %v2935 = vpop.f32.mrb[0].mxu0
  %v2936 = vadd.f32 0.0, %v2935
  %v2937 = vpop.f32.mrb[0].mxu0
  %v2938 = vpop.f32.mrb[0].mxu0
  %v2939 = vadd.f32 0.0, %v2938
  %v2940 = vpop.f32.mrb[0].mxu0
  %2941 = vmatprep.mubr.bf16.mxu0 0
  %2942 = vmatmul.mubr.bf16.gmra.mrb[0].mxu0 %v2868
  %v2943 = vpop.f32.mrb[0].mxu0
  %v2944 = vadd.f32 0.0, %v2943
  %v2945 = vpop.f32.mrb[0].mxu0
  %v2946 = vpop.f32.mrb[0].mxu0
  %v2947 = vadd.f32 0.0, %v2946
  %v2948 = vpop.f32.mrb[0].mxu0
  %2949 = vmatprep.mubr.bf16.mxu0 0
  %2950 = vmatmul.mubr.bf16.gmra.mrb[0].mxu0 %v2871
  %v2951 = vpop.f32.mrb[0].mxu0
  %v2952 = vadd.f32 0.0, %v2951
  %v2953 = vpop.f32.mrb[0].mxu0
  %v2954 = vpop.f32.mrb[0].mxu0
  %v2955 = vadd.f32 0.0, %v2954
  %v2956 = vpop.f32.mrb[0].mxu0
  %2957 = vmatprep.mubr.bf16.mxu0 0
  %2958 = vmatmul.mubr.bf16.gmra.mrb[0].mxu0 %v2874
  %v2959 = vpop.f32.mrb[0].mxu0
  %v2960 = vadd.f32 0.0, %v2959
  %v2961 = vpop.f32.mrb[0].mxu0
  %v2962 = vpop.f32.mrb[0].mxu0
  %v2963 = vadd.f32 0.0, %v2962
  %v2964 = vpop.f32.mrb[0].mxu0
  %2965 = vmatprep.mubr.bf16.mxu0 0
  %2966 = vmatmul.mubr.bf16.gmra.mrb[0].mxu0 %v2877
  %v2967 = vpop.f32.mrb[0].mxu0
  %v2968 = vadd.f32 0.0, %v2967
  %v2969 = vpop.f32.mrb[0].mxu0
  %v2970 = vpop.f32.mrb[0].mxu0
  %v2971 = vadd.f32 0.0, %v2970
  %v2972 = vpop.f32.mrb[0].mxu0
  %2973 = vmatprep.mubr.bf16.mxu0 0
  %2974 = vmatmul.mubr.bf16.gmra.mrb[0].mxu0 %v2880
  %v2975 = vpop.f32.mrb[0].mxu0
  %v2976 = vadd.f32 0.0, %v2975
  %v2977 = vpop.f32.mrb[0].mxu0
  %v2978 = vpop.f32.mrb[0].mxu0
  %v2979 = vadd.f32 0.0, %v2978
  %v2980 = vpop.f32.mrb[0].mxu0
  %2981 = vmatprep.mubr.bf16.mxu0 0
  %2982 = vmatmul.mubr.bf16.gmra.mrb[0].mxu0 %v2883
  %v2983 = vpop.f32.mrb[0].mxu0
  %v2984 = vadd.f32 0.0, %v2983
  %v2985 = vpop.f32.mrb[0].mxu0
  %v2986 = vpop.f32.mrb[0].mxu0
  %v2987 = vadd.f32 0.0, %v2986
  %v2988 = vpop.f32.mrb[0].mxu0
  %2989 = vdwg.mxu0
  %v2990 = vadd.f32 %v2832, %v2920
  %v2991 = vadd.f32 %v2833, %v2923
  %v2992 = vadd.f32 %v2834, %v2928
  %v2993 = vadd.f32 %v2835, %v2931
  %v2994 = vadd.f32 %v2836, %v2936
  %v2995 = vadd.f32 %v2837, %v2939
  %v2996 = vadd.f32 %v2838, %v2944
  %v2997 = vadd.f32 %v2839, %v2947
  %v2998 = vadd.f32 %v2840, %v2952
  %v2999 = vadd.f32 %v2841, %v2955
  %v3000 = vadd.f32 %v2842, %v2960
  %v3001 = vadd.f32 %v2843, %v2963
  %v3002 = vadd.f32 %v2844, %v2968
  %v3003 = vadd.f32 %v2845, %v2971
  %v3004 = vadd.f32 %v2846, %v2976
  %v3005 = vadd.f32 %v2847, %v2979
  %v3006 = vadd.f32 %v2848, %v2984
  %v3007 = vadd.f32 %v2849, %v2987
  %v3008 = vld [vmem:[%s1 + $0x58] sm:$0xf]
  %v3009 = vld [vmem:[%s1 + $0x5c] sm:$0xf]
  %v3012 = vunpack.c.l.b16 %v3008
  %v3013 = vunpack.c.l.b16 %v3009
  %v3014 = vpack.c.b16 %v3013, %v3012
  %v3017 = vsel %vm1789, %v1770, 0
  %v3020 = vsel %vm1789, %v1771, 0
  %v3023 = vsel %vm1789, %v1772, 0
  %v3026 = vsel %vm1789, %v1773, 0
  %v3029 = vsel %vm1789, %v1774, 0
  %v3032 = vsel %vm1789, %v1775, 0
  %v3035 = vsel %vm1789, %v1776, 0
  %v3038 = vsel %vm1789, %v1777, 0
  %v3041 = vsel %vm1789, %v1778, 0
  %3043 = vmatprep.subr.bf16.mxu0 0
  %3044 = vmatpush1.bf16.msra.mxu0 %v3014
  %3045 = vmatprep.subr.bf16.mxu0 0
  %3046 = vmatpush1.bf16.msra.mxu0 0
  %3047 = vmatprep.subr.bf16.mxu0 0
  %3048 = vmatpush1.bf16.msra.mxu0 0
  %3049 = vmatprep.subr.bf16.mxu0 0
  %3050 = vmatpush1.bf16.msra.mxu0 0
  %3051 = vmatprep.subr.bf16.mxu0 0
  %3052 = vmatpush1.bf16.msra.mxu0 0
  %3053 = vmatprep.subr.bf16.mxu0 0
  %3054 = vmatpush1.bf16.msra.mxu0 0
  %3055 = vmatprep.subr.bf16.mxu0 0
  %3056 = vmatpush1.bf16.msra.mxu0 0
  %3057 = vmatprep.subr.bf16.mxu0 0
  %3058 = vmatpush1.bf16.msra.mxu0 0
  %3059 = vmatprep.subr.bf16.mxu0 0
  %3060 = vmatpush1.bf16.msra.mxu0 0
  %3061 = vmatprep.subr.bf16.mxu0 0
  %3062 = vmatpush1.bf16.msra.mxu0 0
  %3063 = vmatprep.subr.bf16.mxu0 0
  %3064 = vmatpush1.bf16.msra.mxu0 0
  %3065 = vmatprep.subr.bf16.mxu0 0
  %3066 = vmatpush1.bf16.msra.mxu0 0
  %3067 = vmatprep.subr.bf16.mxu0 0
  %3068 = vmatpush1.bf16.msra.mxu0 0
  %3069 = vmatprep.subr.bf16.mxu0 0
  %3070 = vmatpush1.bf16.msra.mxu0 0
  %3071 = vmatprep.subr.bf16.mxu0 0
  %3072 = vmatpush1.bf16.msra.mxu0 0
  %3073 = vmatprep.subr.bf16.mxu0 0
  %3074 = vmatpush1.bf16.msra.mxu0 0
  %3075 = vmatprep.mubr.bf16.mxu0 0
  %3076 = vmatmul.mubr.bf16.gmra.mrb[0].mxu0 %v3017
  %v3077 = vpop.f32.mrb[0].mxu0
  %v3078 = vadd.f32 0.0, %v3077
  %v3079 = vpop.f32.mrb[0].mxu0
  %v3080 = vpop.f32.mrb[0].mxu0
  %v3081 = vadd.f32 0.0, %v3080
  %v3082 = vpop.f32.mrb[0].mxu0
  %3083 = vmatprep.mubr.bf16.mxu0 0
  %3084 = vmatmul.mubr.bf16.gmra.mrb[0].mxu0 %v3020
  %v3085 = vpop.f32.mrb[0].mxu0
  %v3086 = vadd.f32 0.0, %v3085
  %v3087 = vpop.f32.mrb[0].mxu0
  %v3088 = vpop.f32.mrb[0].mxu0
  %v3089 = vadd.f32 0.0, %v3088
  %v3090 = vpop.f32.mrb[0].mxu0
  %3091 = vmatprep.mubr.bf16.mxu0 0
  %3092 = vmatmul.mubr.bf16.gmra.mrb[0].mxu0 %v3023
  %v3093 = vpop.f32.mrb[0].mxu0
  %v3094 = vadd.f32 0.0, %v3093
  %v3095 = vpop.f32.mrb[0].mxu0
  %v3096 = vpop.f32.mrb[0].mxu0
  %v3097 = vadd.f32 0.0, %v3096
  %v3098 = vpop.f32.mrb[0].mxu0
  %3099 = vmatprep.mubr.bf16.mxu0 0
  %3100 = vmatmul.mubr.bf16.gmra.mrb[0].mxu0 %v3026
  %v3101 = vpop.f32.mrb[0].mxu0
  %v3102 = vadd.f32 0.0, %v3101
  %v3103 = vpop.f32.mrb[0].mxu0
  %v3104 = vpop.f32.mrb[0].mxu0
  %v3105 = vadd.f32 0.0, %v3104
  %v3106 = vpop.f32.mrb[0].mxu0
  %3107 = vmatprep.mubr.bf16.mxu0 0
  %3108 = vmatmul.mubr.bf16.gmra.mrb[0].mxu0 %v3029
  %v3109 = vpop.f32.mrb[0].mxu0
  %v3110 = vadd.f32 0.0, %v3109
  %v3111 = vpop.f32.mrb[0].mxu0
  %v3112 = vpop.f32.mrb[0].mxu0
  %v3113 = vadd.f32 0.0, %v3112
  %v3114 = vpop.f32.mrb[0].mxu0
  %3115 = vmatprep.mubr.bf16.mxu0 0
  %3116 = vmatmul.mubr.bf16.gmra.mrb[0].mxu0 %v3032
  %v3117 = vpop.f32.mrb[0].mxu0
  %v3118 = vadd.f32 0.0, %v3117
  %v3119 = vpop.f32.mrb[0].mxu0
  %v3120 = vpop.f32.mrb[0].mxu0
  %v3121 = vadd.f32 0.0, %v3120
  %v3122 = vpop.f32.mrb[0].mxu0
  %3123 = vmatprep.mubr.bf16.mxu0 0
  %3124 = vmatmul.mubr.bf16.gmra.mrb[0].mxu0 %v3035
  %v3125 = vpop.f32.mrb[0].mxu0
  %v3126 = vadd.f32 0.0, %v3125
  %v3127 = vpop.f32.mrb[0].mxu0
  %v3128 = vpop.f32.mrb[0].mxu0
  %v3129 = vadd.f32 0.0, %v3128
  %v3130 = vpop.f32.mrb[0].mxu0
  %3131 = vmatprep.mubr.bf16.mxu0 0
  %3132 = vmatmul.mubr.bf16.gmra.mrb[0].mxu0 %v3038
  %v3133 = vpop.f32.mrb[0].mxu0
  %v3134 = vadd.f32 0.0, %v3133
  %v3135 = vpop.f32.mrb[0].mxu0
  %v3136 = vpop.f32.mrb[0].mxu0
  %v3137 = vadd.f32 0.0, %v3136
  %v3138 = vpop.f32.mrb[0].mxu0
  %3139 = vmatprep.mubr.bf16.mxu0 0
  %3140 = vmatmul.mubr.bf16.gmra.mrb[0].mxu0 %v3041
  %v3141 = vpop.f32.mrb[0].mxu0
  %v3142 = vadd.f32 0.0, %v3141
  %v3143 = vpop.f32.mrb[0].mxu0
  %v3144 = vpop.f32.mrb[0].mxu0
  %v3145 = vadd.f32 0.0, %v3144
  %v3146 = vpop.f32.mrb[0].mxu0
  %3147 = vdwg.mxu0
  %v3148 = vadd.f32 %v2990, %v3078
  %v3149 = vadd.f32 %v2991, %v3081
  %v3150 = vadd.f32 %v2992, %v3086
  %v3151 = vadd.f32 %v2993, %v3089
  %v3152 = vadd.f32 %v2994, %v3094
  %v3153 = vadd.f32 %v2995, %v3097
  %v3154 = vadd.f32 %v2996, %v3102
  %v3155 = vadd.f32 %v2997, %v3105
  %v3156 = vadd.f32 %v2998, %v3110
  %v3157 = vadd.f32 %v2999, %v3113
  %v3158 = vadd.f32 %v3000, %v3118
  %v3159 = vadd.f32 %v3001, %v3121
  %v3160 = vadd.f32 %v3002, %v3126
  %v3161 = vadd.f32 %v3003, %v3129
  %v3162 = vadd.f32 %v3004, %v3134
  %v3163 = vadd.f32 %v3005, %v3137
  %v3164 = vadd.f32 %v3006, %v3142
  %v3165 = vadd.f32 %v3007, %v3145
  %v3166 = vld [vmem:[%s2 + $0x1] sm:$0x1]
  %v3167 = vlaneseq
  %v3168 = vshrl.u32 %v3167, 7
  %v3169 = vsub.s32 0, %v3168
  %v3170 = vrot.slane %v3166, %v3169
  %v3171 = vadd.f32 %v3148, %v3170
  %v3172 = vadd.f32 %v3149, %v3170
  %v3173 = vadd.f32 %v3150, %v3170
  %v3174 = vadd.f32 %v3151, %v3170
  %v3175 = vadd.f32 %v3152, %v3170
  %v3176 = vadd.f32 %v3153, %v3170
  %v3177 = vadd.f32 %v3154, %v3170
  %v3178 = vadd.f32 %v3155, %v3170
  %v3179 = vadd.f32 %v3156, %v3170
  %v3180 = vadd.f32 %v3157, %v3170
  %v3181 = vadd.f32 %v3158, %v3170
  %v3182 = vadd.f32 %v3159, %v3170
  %v3183 = vadd.f32 %v3160, %v3170
  %v3184 = vadd.f32 %v3161, %v3170
  %v3185 = vadd.f32 %v3162, %v3170
  %v3186 = vadd.f32 %v3163, %v3170
  %v3187 = vadd.f32 %v3164, %v3170
  %v3188 = vadd.f32 %v3165, %v3170
  %v3189 = vmax.f32 %v3171, 0.0
  %v3190 = vmax.f32 %v3172, 0.0
  %v3191 = vmax.f32 %v3173, 0.0
  %v3192 = vmax.f32 %v3174, 0.0
  %v3193 = vmax.f32 %v3175, 0.0
  %v3194 = vmax.f32 %v3176, 0.0
  %v3195 = vmax.f32 %v3177, 0.0
  %v3196 = vmax.f32 %v3178, 0.0
  %v3197 = vmax.f32 %v3179, 0.0
  %v3198 = vmax.f32 %v3180, 0.0
  %v3199 = vmax.f32 %v3181, 0.0
  %v3200 = vmax.f32 %v3182, 0.0
  %v3201 = vmax.f32 %v3183, 0.0
  %v3202 = vmax.f32 %v3184, 0.0
  %v3203 = vmax.f32 %v3185, 0.0
  %v3204 = vmax.f32 %v3186, 0.0
  %v3205 = vmax.f32 %v3187, 0.0
  %v3206 = vmax.f32 %v3188, 0.0
  %v3207 = vpack.c.bf16 %v3190, %v3189
  %v3208 = vpack.c.bf16 %v3192, %v3191
  %v3209 = vpack.c.bf16 %v3194, %v3193
  %v3210 = vpack.c.bf16 %v3196, %v3195
  %v3211 = vpack.c.bf16 %v3198, %v3197
  %v3212 = vpack.c.bf16 %v3200, %v3199
  %v3213 = vpack.c.bf16 %v3202, %v3201
  %v3214 = vpack.c.bf16 %v3204, %v3203
  %v3215 = vpack.c.bf16 %v3206, %v3205
  %v3216 = vld [vmem:[%s1 + $0x60] sm:$0xf]
  %v3217 = vld [vmem:[%s1 + $0x64] sm:$0xf]
  %v3218 = vld [vmem:[%s1 + $0x68] sm:$0xf]
  %v3219 = vld [vmem:[%s1 + $0x6c] sm:$0xf]
  %v3222 = vunpack.c.l.b16 %v3218
  %v3223 = vunpack.c.l.b16 %v3219
  %v3224 = vpack.c.b16 %v3223, %v3222
  %v3227 = vsel %vm1789, %v3208, 0
  %3229 = vmatprep.subr.bf16.mxu0 0
  %3230 = vmatpush1.bf16.msra.mxu0 %v3224
  %3231 = vmatprep.subr.bf16.mxu0 0
  %3232 = vmatpush1.bf16.msra.mxu0 0
  %3233 = vmatprep.subr.bf16.mxu0 0
  %3234 = vmatpush1.bf16.msra.mxu0 0
  %3235 = vmatprep.subr.bf16.mxu0 0
  %3236 = vmatpush1.bf16.msra.mxu0 0
  %3237 = vmatprep.subr.bf16.mxu0 0
  %3238 = vmatpush1.bf16.msra.mxu0 0
  %3239 = vmatprep.subr.bf16.mxu0 0
  %3240 = vmatpush1.bf16.msra.mxu0 0
  %3241 = vmatprep.subr.bf16.mxu0 0
  %3242 = vmatpush1.bf16.msra.mxu0 0
  %3243 = vmatprep.subr.bf16.mxu0 0
  %3244 = vmatpush1.bf16.msra.mxu0 0
  %3245 = vmatprep.subr.bf16.mxu0 0
  %3246 = vmatpush1.bf16.msra.mxu0 0
  %3247 = vmatprep.subr.bf16.mxu0 0
  %3248 = vmatpush1.bf16.msra.mxu0 0
  %3249 = vmatprep.subr.bf16.mxu0 0
  %3250 = vmatpush1.bf16.msra.mxu0 0
  %3251 = vmatprep.subr.bf16.mxu0 0
  %3252 = vmatpush1.bf16.msra.mxu0 0
  %3253 = vmatprep.subr.bf16.mxu0 0
  %3254 = vmatpush1.bf16.msra.mxu0 0
  %3255 = vmatprep.subr.bf16.mxu0 0
  %3256 = vmatpush1.bf16.msra.mxu0 0
  %3257 = vmatprep.subr.bf16.mxu0 0
  %3258 = vmatpush1.bf16.msra.mxu0 0
  %3259 = vmatprep.subr.bf16.mxu0 0
  %3260 = vmatpush1.bf16.msra.mxu0 0
  %3261 = vmatprep.mubr.bf16.mxu0 0
  %3262 = vmatmul.mubr.bf16.gmra.mrb[0].mxu0 %v3227
  %v3263 = vpop.f32.mrb[0].mxu0
  %v3264 = vadd.f32 0.0, %v3263
  %v3265 = vpop.f32.mrb[0].mxu0
  %v3266 = vpop.f32.mrb[0].mxu0
  %v3267 = vadd.f32 0.0, %v3266
  %v3268 = vpop.f32.mrb[0].mxu0
  %3269 = vdwg.mxu0
  %v3272 = vunpack.c.l.b16 %v3216
  %v3273 = vunpack.c.l.b16 %v3217
  %v3274 = vpack.c.b16 %v3273, %v3272
  %v3277 = vsel %vm1789, %v3207, 0
  %3279 = vmatprep.subr.bf16.mxu0 0
  %3280 = vmatpush1.bf16.msra.mxu0 %v3274
  %3281 = vmatprep.subr.bf16.mxu0 0
  %3282 = vmatpush1.bf16.msra.mxu0 0
  %3283 = vmatprep.subr.bf16.mxu0 0
  %3284 = vmatpush1.bf16.msra.mxu0 0
  %3285 = vmatprep.subr.bf16.mxu0 0
  %3286 = vmatpush1.bf16.msra.mxu0 0
  %3287 = vmatprep.subr.bf16.mxu0 0
  %3288 = vmatpush1.bf16.msra.mxu0 0
  %3289 = vmatprep.subr.bf16.mxu0 0
  %3290 = vmatpush1.bf16.msra.mxu0 0
  %3291 = vmatprep.subr.bf16.mxu0 0
  %3292 = vmatpush1.bf16.msra.mxu0 0
  %3293 = vmatprep.subr.bf16.mxu0 0
  %3294 = vmatpush1.bf16.msra.mxu0 0
  %3295 = vmatprep.subr.bf16.mxu0 0
  %3296 = vmatpush1.bf16.msra.mxu0 0
  %3297 = vmatprep.subr.bf16.mxu0 0
  %3298 = vmatpush1.bf16.msra.mxu0 0
  %3299 = vmatprep.subr.bf16.mxu0 0
  %3300 = vmatpush1.bf16.msra.mxu0 0
  %3301 = vmatprep.subr.bf16.mxu0 0
  %3302 = vmatpush1.bf16.msra.mxu0 0
  %3303 = vmatprep.subr.bf16.mxu0 0
  %3304 = vmatpush1.bf16.msra.mxu0 0
  %3305 = vmatprep.subr.bf16.mxu0 0
  %3306 = vmatpush1.bf16.msra.mxu0 0
  %3307 = vmatprep.subr.bf16.mxu0 0
  %3308 = vmatpush1.bf16.msra.mxu0 0
  %3309 = vmatprep.subr.bf16.mxu0 0
  %3310 = vmatpush1.bf16.msra.mxu0 0
  %3311 = vmatprep.mubr.bf16.mxu0 0
  %3312 = vmatmul.mubr.bf16.gmra.mrb[0].mxu0 %v3277
  %v3313 = vpop.f32.mrb[0].mxu0
  %v3314 = vadd.f32 %v3264, %v3313
  %v3315 = vpop.f32.mrb[0].mxu0
  %v3316 = vpop.f32.mrb[0].mxu0
  %v3317 = vadd.f32 %v3267, %v3316
  %v3318 = vpop.f32.mrb[0].mxu0
  %3319 = vdwg.mxu0
  %v3320 = vld [vmem:[%s1 + $0x70] sm:$0xf]
  %v3321 = vld [vmem:[%s1 + $0x74] sm:$0xf]
  %v3324 = vunpack.c.l.b16 %v3320
  %v3325 = vunpack.c.l.b16 %v3321
  %v3326 = vpack.c.b16 %v3325, %v3324
  %v3329 = vsel %vm1789, %v3209, 0
  %3331 = vmatprep.subr.bf16.mxu0 0
  %3332 = vmatpush1.bf16.msra.mxu0 %v3326
  %3333 = vmatprep.subr.bf16.mxu0 0
  %3334 = vmatpush1.bf16.msra.mxu0 0
  %3335 = vmatprep.subr.bf16.mxu0 0
  %3336 = vmatpush1.bf16.msra.mxu0 0
  %3337 = vmatprep.subr.bf16.mxu0 0
  %3338 = vmatpush1.bf16.msra.mxu0 0
  %3339 = vmatprep.subr.bf16.mxu0 0
  %3340 = vmatpush1.bf16.msra.mxu0 0
  %3341 = vmatprep.subr.bf16.mxu0 0
  %3342 = vmatpush1.bf16.msra.mxu0 0
  %3343 = vmatprep.subr.bf16.mxu0 0
  %3344 = vmatpush1.bf16.msra.mxu0 0
  %3345 = vmatprep.subr.bf16.mxu0 0
  %3346 = vmatpush1.bf16.msra.mxu0 0
  %3347 = vmatprep.subr.bf16.mxu0 0
  %3348 = vmatpush1.bf16.msra.mxu0 0
  %3349 = vmatprep.subr.bf16.mxu0 0
  %3350 = vmatpush1.bf16.msra.mxu0 0
  %3351 = vmatprep.subr.bf16.mxu0 0
  %3352 = vmatpush1.bf16.msra.mxu0 0
  %3353 = vmatprep.subr.bf16.mxu0 0
  %3354 = vmatpush1.bf16.msra.mxu0 0
  %3355 = vmatprep.subr.bf16.mxu0 0
  %3356 = vmatpush1.bf16.msra.mxu0 0
  %3357 = vmatprep.subr.bf16.mxu0 0
  %3358 = vmatpush1.bf16.msra.mxu0 0
  %3359 = vmatprep.subr.bf16.mxu0 0
  %3360 = vmatpush1.bf16.msra.mxu0 0
  %3361 = vmatprep.subr.bf16.mxu0 0
  %3362 = vmatpush1.bf16.msra.mxu0 0
  %3363 = vmatprep.mubr.bf16.mxu0 0
  %3364 = vmatmul.mubr.bf16.gmra.mrb[0].mxu0 %v3329
  %v3365 = vpop.f32.mrb[0].mxu0
  %v3366 = vadd.f32 0.0, %v3365
  %v3367 = vpop.f32.mrb[0].mxu0
  %v3368 = vpop.f32.mrb[0].mxu0
  %v3369 = vadd.f32 0.0, %v3368
  %v3370 = vpop.f32.mrb[0].mxu0
  %3371 = vdwg.mxu0
  %v3372 = vadd.f32 %v3314, %v3366
  %v3373 = vadd.f32 %v3317, %v3369
  %v3374 = vld [vmem:[%s1 + $0x78] sm:$0xf]
  %v3375 = vld [vmem:[%s1 + $0x7c] sm:$0xf]
  %v3378 = vunpack.c.l.b16 %v3374
  %v3379 = vunpack.c.l.b16 %v3375
  %v3380 = vpack.c.b16 %v3379, %v3378
  %v3383 = vsel %vm1789, %v3210, 0
  %3385 = vmatprep.subr.bf16.mxu0 0
  %3386 = vmatpush1.bf16.msra.mxu0 %v3380
  %3387 = vmatprep.subr.bf16.mxu0 0
  %3388 = vmatpush1.bf16.msra.mxu0 0
  %3389 = vmatprep.subr.bf16.mxu0 0
  %3390 = vmatpush1.bf16.msra.mxu0 0
  %3391 = vmatprep.subr.bf16.mxu0 0
  %3392 = vmatpush1.bf16.msra.mxu0 0
  %3393 = vmatprep.subr.bf16.mxu0 0
  %3394 = vmatpush1.bf16.msra.mxu0 0
  %3395 = vmatprep.subr.bf16.mxu0 0
  %3396 = vmatpush1.bf16.msra.mxu0 0
  %3397 = vmatprep.subr.bf16.mxu0 0
  %3398 = vmatpush1.bf16.msra.mxu0 0
  %3399 = vmatprep.subr.bf16.mxu0 0
  %3400 = vmatpush1.bf16.msra.mxu0 0
  %3401 = vmatprep.subr.bf16.mxu0 0
  %3402 = vmatpush1.bf16.msra.mxu0 0
  %3403 = vmatprep.subr.bf16.mxu0 0
  %3404 = vmatpush1.bf16.msra.mxu0 0
  %3405 = vmatprep.subr.bf16.mxu0 0
  %3406 = vmatpush1.bf16.msra.mxu0 0
  %3407 = vmatprep.subr.bf16.mxu0 0
  %3408 = vmatpush1.bf16.msra.mxu0 0
  %3409 = vmatprep.subr.bf16.mxu0 0
  %3410 = vmatpush1.bf16.msra.mxu0 0
  %3411 = vmatprep.subr.bf16.mxu0 0
  %3412 = vmatpush1.bf16.msra.mxu0 0
  %3413 = vmatprep.subr.bf16.mxu0 0
  %3414 = vmatpush1.bf16.msra.mxu0 0
  %3415 = vmatprep.subr.bf16.mxu0 0
  %3416 = vmatpush1.bf16.msra.mxu0 0
  %3417 = vmatprep.mubr.bf16.mxu0 0
  %3418 = vmatmul.mubr.bf16.gmra.mrb[0].mxu0 %v3383
  %v3419 = vpop.f32.mrb[0].mxu0
  %v3420 = vadd.f32 0.0, %v3419
  %v3421 = vpop.f32.mrb[0].mxu0
  %v3422 = vpop.f32.mrb[0].mxu0
  %v3423 = vadd.f32 0.0, %v3422
  %v3424 = vpop.f32.mrb[0].mxu0
  %3425 = vdwg.mxu0
  %v3426 = vadd.f32 %v3372, %v3420
  %v3427 = vadd.f32 %v3373, %v3423
  %v3428 = vld [vmem:[%s1 + $0x80] sm:$0xf]
  %v3429 = vld [vmem:[%s1 + $0x84] sm:$0xf]
  %v3432 = vunpack.c.l.b16 %v3428
  %v3433 = vunpack.c.l.b16 %v3429
  %v3434 = vpack.c.b16 %v3433, %v3432
  %v3437 = vsel %vm1789, %v3211, 0
  %3439 = vmatprep.subr.bf16.mxu0 0
  %3440 = vmatpush1.bf16.msra.mxu0 %v3434
  %3441 = vmatprep.subr.bf16.mxu0 0
  %3442 = vmatpush1.bf16.msra.mxu0 0
  %3443 = vmatprep.subr.bf16.mxu0 0
  %3444 = vmatpush1.bf16.msra.mxu0 0
  %3445 = vmatprep.subr.bf16.mxu0 0
  %3446 = vmatpush1.bf16.msra.mxu0 0
  %3447 = vmatprep.subr.bf16.mxu0 0
  %3448 = vmatpush1.bf16.msra.mxu0 0
  %3449 = vmatprep.subr.bf16.mxu0 0
  %3450 = vmatpush1.bf16.msra.mxu0 0
  %3451 = vmatprep.subr.bf16.mxu0 0
  %3452 = vmatpush1.bf16.msra.mxu0 0
  %3453 = vmatprep.subr.bf16.mxu0 0
  %3454 = vmatpush1.bf16.msra.mxu0 0
  %3455 = vmatprep.subr.bf16.mxu0 0
  %3456 = vmatpush1.bf16.msra.mxu0 0
  %3457 = vmatprep.subr.bf16.mxu0 0
  %3458 = vmatpush1.bf16.msra.mxu0 0
  %3459 = vmatprep.subr.bf16.mxu0 0
  %3460 = vmatpush1.bf16.msra.mxu0 0
  %3461 = vmatprep.subr.bf16.mxu0 0
  %3462 = vmatpush1.bf16.msra.mxu0 0
  %3463 = vmatprep.subr.bf16.mxu0 0
  %3464 = vmatpush1.bf16.msra.mxu0 0
  %3465 = vmatprep.subr.bf16.mxu0 0
  %3466 = vmatpush1.bf16.msra.mxu0 0
  %3467 = vmatprep.subr.bf16.mxu0 0
  %3468 = vmatpush1.bf16.msra.mxu0 0
  %3469 = vmatprep.subr.bf16.mxu0 0
  %3470 = vmatpush1.bf16.msra.mxu0 0
  %3471 = vmatprep.mubr.bf16.mxu0 0
  %3472 = vmatmul.mubr.bf16.gmra.mrb[0].mxu0 %v3437
  %v3473 = vpop.f32.mrb[0].mxu0
  %v3474 = vadd.f32 0.0, %v3473
  %v3475 = vpop.f32.mrb[0].mxu0
  %v3476 = vpop.f32.mrb[0].mxu0
  %v3477 = vadd.f32 0.0, %v3476
  %v3478 = vpop.f32.mrb[0].mxu0
  %3479 = vdwg.mxu0
  %v3480 = vadd.f32 %v3426, %v3474
  %v3481 = vadd.f32 %v3427, %v3477
  %v3482 = vld [vmem:[%s1 + $0x88] sm:$0xf]
  %v3483 = vld [vmem:[%s1 + $0x8c] sm:$0xf]
  %v3486 = vunpack.c.l.b16 %v3482
  %v3487 = vunpack.c.l.b16 %v3483
  %v3488 = vpack.c.b16 %v3487, %v3486
  %v3491 = vsel %vm1789, %v3212, 0
  %3493 = vmatprep.subr.bf16.mxu0 0
  %3494 = vmatpush1.bf16.msra.mxu0 %v3488
  %3495 = vmatprep.subr.bf16.mxu0 0
  %3496 = vmatpush1.bf16.msra.mxu0 0
  %3497 = vmatprep.subr.bf16.mxu0 0
  %3498 = vmatpush1.bf16.msra.mxu0 0
  %3499 = vmatprep.subr.bf16.mxu0 0
  %3500 = vmatpush1.bf16.msra.mxu0 0
  %3501 = vmatprep.subr.bf16.mxu0 0
  %3502 = vmatpush1.bf16.msra.mxu0 0
  %3503 = vmatprep.subr.bf16.mxu0 0
  %3504 = vmatpush1.bf16.msra.mxu0 0
  %3505 = vmatprep.subr.bf16.mxu0 0
  %3506 = vmatpush1.bf16.msra.mxu0 0
  %3507 = vmatprep.subr.bf16.mxu0 0
  %3508 = vmatpush1.bf16.msra.mxu0 0
  %3509 = vmatprep.subr.bf16.mxu0 0
  %3510 = vmatpush1.bf16.msra.mxu0 0
  %3511 = vmatprep.subr.bf16.mxu0 0
  %3512 = vmatpush1.bf16.msra.mxu0 0
  %3513 = vmatprep.subr.bf16.mxu0 0
  %3514 = vmatpush1.bf16.msra.mxu0 0
  %3515 = vmatprep.subr.bf16.mxu0 0
  %3516 = vmatpush1.bf16.msra.mxu0 0
  %3517 = vmatprep.subr.bf16.mxu0 0
  %3518 = vmatpush1.bf16.msra.mxu0 0
  %3519 = vmatprep.subr.bf16.mxu0 0
  %3520 = vmatpush1.bf16.msra.mxu0 0
  %3521 = vmatprep.subr.bf16.mxu0 0
  %3522 = vmatpush1.bf16.msra.mxu0 0
  %3523 = vmatprep.subr.bf16.mxu0 0
  %3524 = vmatpush1.bf16.msra.mxu0 0
  %3525 = vmatprep.mubr.bf16.mxu0 0
  %3526 = vmatmul.mubr.bf16.gmra.mrb[0].mxu0 %v3491
  %v3527 = vpop.f32.mrb[0].mxu0
  %v3528 = vadd.f32 0.0, %v3527
  %v3529 = vpop.f32.mrb[0].mxu0
  %v3530 = vpop.f32.mrb[0].mxu0
  %v3531 = vadd.f32 0.0, %v3530
  %v3532 = vpop.f32.mrb[0].mxu0
  %3533 = vdwg.mxu0
  %v3534 = vadd.f32 %v3480, %v3528
  %v3535 = vadd.f32 %v3481, %v3531
  %v3536 = vld [vmem:[%s1 + $0x90] sm:$0xf]
  %v3537 = vld [vmem:[%s1 + $0x94] sm:$0xf]
  %v3540 = vunpack.c.l.b16 %v3536
  %v3541 = vunpack.c.l.b16 %v3537
  %v3542 = vpack.c.b16 %v3541, %v3540
  %v3545 = vsel %vm1789, %v3213, 0
  %3547 = vmatprep.subr.bf16.mxu0 0
  %3548 = vmatpush1.bf16.msra.mxu0 %v3542
  %3549 = vmatprep.subr.bf16.mxu0 0
  %3550 = vmatpush1.bf16.msra.mxu0 0
  %3551 = vmatprep.subr.bf16.mxu0 0
  %3552 = vmatpush1.bf16.msra.mxu0 0
  %3553 = vmatprep.subr.bf16.mxu0 0
  %3554 = vmatpush1.bf16.msra.mxu0 0
  %3555 = vmatprep.subr.bf16.mxu0 0
  %3556 = vmatpush1.bf16.msra.mxu0 0
  %3557 = vmatprep.subr.bf16.mxu0 0
  %3558 = vmatpush1.bf16.msra.mxu0 0
  %3559 = vmatprep.subr.bf16.mxu0 0
  %3560 = vmatpush1.bf16.msra.mxu0 0
  %3561 = vmatprep.subr.bf16.mxu0 0
  %3562 = vmatpush1.bf16.msra.mxu0 0
  %3563 = vmatprep.subr.bf16.mxu0 0
  %3564 = vmatpush1.bf16.msra.mxu0 0
  %3565 = vmatprep.subr.bf16.mxu0 0
  %3566 = vmatpush1.bf16.msra.mxu0 0
  %3567 = vmatprep.subr.bf16.mxu0 0
  %3568 = vmatpush1.bf16.msra.mxu0 0
  %3569 = vmatprep.subr.bf16.mxu0 0
  %3570 = vmatpush1.bf16.msra.mxu0 0
  %3571 = vmatprep.subr.bf16.mxu0 0
  %3572 = vmatpush1.bf16.msra.mxu0 0
  %3573 = vmatprep.subr.bf16.mxu0 0
  %3574 = vmatpush1.bf16.msra.mxu0 0
  %3575 = vmatprep.subr.bf16.mxu0 0
  %3576 = vmatpush1.bf16.msra.mxu0 0
  %3577 = vmatprep.subr.bf16.mxu0 0
  %3578 = vmatpush1.bf16.msra.mxu0 0
  %3579 = vmatprep.mubr.bf16.mxu0 0
  %3580 = vmatmul.mubr.bf16.gmra.mrb[0].mxu0 %v3545
  %v3581 = vpop.f32.mrb[0].mxu0
  %v3582 = vadd.f32 0.0, %v3581
  %v3583 = vpop.f32.mrb[0].mxu0
  %v3584 = vpop.f32.mrb[0].mxu0
  %v3585 = vadd.f32 0.0, %v3584
  %v3586 = vpop.f32.mrb[0].mxu0
  %3587 = vdwg.mxu0
  %v3588 = vadd.f32 %v3534, %v3582
  %v3589 = vadd.f32 %v3535, %v3585
  %v3590 = vld [vmem:[%s1 + $0x98] sm:$0xf]
  %v3591 = vld [vmem:[%s1 + $0x9c] sm:$0xf]
  %v3594 = vunpack.c.l.b16 %v3590
  %v3595 = vunpack.c.l.b16 %v3591
  %v3596 = vpack.c.b16 %v3595, %v3594
  %v3599 = vsel %vm1789, %v3214, 0
  %3601 = vmatprep.subr.bf16.mxu0 0
  %3602 = vmatpush1.bf16.msra.mxu0 %v3596
  %3603 = vmatprep.subr.bf16.mxu0 0
  %3604 = vmatpush1.bf16.msra.mxu0 0
  %3605 = vmatprep.subr.bf16.mxu0 0
  %3606 = vmatpush1.bf16.msra.mxu0 0
  %3607 = vmatprep.subr.bf16.mxu0 0
  %3608 = vmatpush1.bf16.msra.mxu0 0
  %3609 = vmatprep.subr.bf16.mxu0 0
  %3610 = vmatpush1.bf16.msra.mxu0 0
  %3611 = vmatprep.subr.bf16.mxu0 0
  %3612 = vmatpush1.bf16.msra.mxu0 0
  %3613 = vmatprep.subr.bf16.mxu0 0
  %3614 = vmatpush1.bf16.msra.mxu0 0
  %3615 = vmatprep.subr.bf16.mxu0 0
  %3616 = vmatpush1.bf16.msra.mxu0 0
  %3617 = vmatprep.subr.bf16.mxu0 0
  %3618 = vmatpush1.bf16.msra.mxu0 0
  %3619 = vmatprep.subr.bf16.mxu0 0
  %3620 = vmatpush1.bf16.msra.mxu0 0
  %3621 = vmatprep.subr.bf16.mxu0 0
  %3622 = vmatpush1.bf16.msra.mxu0 0
  %3623 = vmatprep.subr.bf16.mxu0 0
  %3624 = vmatpush1.bf16.msra.mxu0 0
  %3625 = vmatprep.subr.bf16.mxu0 0
  %3626 = vmatpush1.bf16.msra.mxu0 0
  %3627 = vmatprep.subr.bf16.mxu0 0
  %3628 = vmatpush1.bf16.msra.mxu0 0
  %3629 = vmatprep.subr.bf16.mxu0 0
  %3630 = vmatpush1.bf16.msra.mxu0 0
  %3631 = vmatprep.subr.bf16.mxu0 0
  %3632 = vmatpush1.bf16.msra.mxu0 0
  %3633 = vmatprep.mubr.bf16.mxu0 0
  %3634 = vmatmul.mubr.bf16.gmra.mrb[0].mxu0 %v3599
  %v3635 = vpop.f32.mrb[0].mxu0
  %v3636 = vadd.f32 0.0, %v3635
  %v3637 = vpop.f32.mrb[0].mxu0
  %v3638 = vpop.f32.mrb[0].mxu0
  %v3639 = vadd.f32 0.0, %v3638
  %v3640 = vpop.f32.mrb[0].mxu0
  %3641 = vdwg.mxu0
  %v3642 = vadd.f32 %v3588, %v3636
  %v3643 = vadd.f32 %v3589, %v3639
  %v3644 = vld [vmem:[%s1 + $0xa0] sm:$0xf]
  %v3645 = vld [vmem:[%s1 + $0xa4] sm:$0xf]
  %v3648 = vunpack.c.l.b16 %v3644
  %v3649 = vunpack.c.l.b16 %v3645
  %v3650 = vpack.c.b16 %v3649, %v3648
  %v3653 = vsel %vm1789, %v3215, 0
  %3655 = vmatprep.subr.bf16.mxu0 0
  %3656 = vmatpush1.bf16.msra.mxu0 %v3650
  %3657 = vmatprep.subr.bf16.mxu0 0
  %3658 = vmatpush1.bf16.msra.mxu0 0
  %3659 = vmatprep.subr.bf16.mxu0 0
  %3660 = vmatpush1.bf16.msra.mxu0 0
  %3661 = vmatprep.subr.bf16.mxu0 0
  %3662 = vmatpush1.bf16.msra.mxu0 0
  %3663 = vmatprep.subr.bf16.mxu0 0
  %3664 = vmatpush1.bf16.msra.mxu0 0
  %3665 = vmatprep.subr.bf16.mxu0 0
  %3666 = vmatpush1.bf16.msra.mxu0 0
  %3667 = vmatprep.subr.bf16.mxu0 0
  %3668 = vmatpush1.bf16.msra.mxu0 0
  %3669 = vmatprep.subr.bf16.mxu0 0
  %3670 = vmatpush1.bf16.msra.mxu0 0
  %3671 = vmatprep.subr.bf16.mxu0 0
  %3672 = vmatpush1.bf16.msra.mxu0 0
  %3673 = vmatprep.subr.bf16.mxu0 0
  %3674 = vmatpush1.bf16.msra.mxu0 0
  %3675 = vmatprep.subr.bf16.mxu0 0
  %3676 = vmatpush1.bf16.msra.mxu0 0
  %3677 = vmatprep.subr.bf16.mxu0 0
  %3678 = vmatpush1.bf16.msra.mxu0 0
  %3679 = vmatprep.subr.bf16.mxu0 0
  %3680 = vmatpush1.bf16.msra.mxu0 0
  %3681 = vmatprep.subr.bf16.mxu0 0
  %3682 = vmatpush1.bf16.msra.mxu0 0
  %3683 = vmatprep.subr.bf16.mxu0 0
  %3684 = vmatpush1.bf16.msra.mxu0 0
  %3685 = vmatprep.subr.bf16.mxu0 0
  %3686 = vmatpush1.bf16.msra.mxu0 0
  %3687 = vmatprep.mubr.bf16.mxu0 0
  %3688 = vmatmul.mubr.bf16.gmra.mrb[0].mxu0 %v3653
  %v3689 = vpop.f32.mrb[0].mxu0
  %v3690 = vadd.f32 0.0, %v3689
  %v3691 = vpop.f32.mrb[0].mxu0
  %v3692 = vpop.f32.mrb[0].mxu0
  %v3693 = vadd.f32 0.0, %v3692
  %v3694 = vpop.f32.mrb[0].mxu0
  %3695 = vdwg.mxu0
  %v3696 = vadd.f32 %v3642, %v3690
  %v3697 = vadd.f32 %v3643, %v3693
  %v3698 = vld [vmem:[%s2 + $0x2] sm:$0x1]
  %v3699 = vlaneseq
  %v3700 = vshrl.u32 %v3699, 7
  %v3701 = vsub.s32 0, %v3700
  %v3702 = vrot.slane %v3698, %v3701
  %v3703 = vadd.f32 %v3696, %v3702
  %v3704 = vadd.f32 %v3697, %v3702
  %v3705 = vmax.f32 %v3703, 0.0
  %v3706 = vmax.f32 %v3704, 0.0
  %v3707 = vpack.c.bf16 %v3706, %v3705
  %v3708 = vld [vmem:[%s1 + $0xa8] sm:$0xf]
  %v3709 = vld [vmem:[%s1 + $0xac] sm:$0xf]
  %v3710 = vld [vmem:[%s1 + $0xb0] sm:$0xf]
  %v3711 = vld [vmem:[%s1 + $0xb4] sm:$0xf]
  %v3712 = vld [vmem:[%s2 + $0x3] sm:$0x1]
  %v3713 = vlaneseq
  %v3714 = vshrl.u32 %v3713, 7
  %v3715 = vsub.s32 0, %v3714
  %v3716 = vrot.slane %v3712, %v3715
  %v3721 = vunpack.c.l.b16 %v3708
  %v3722 = vunpack.c.l.b16 %v3709
  %v3723 = vunpack.c.l.b16 %v3710
  %v3724 = vunpack.c.l.b16 %v3711
  %v3725 = vpack.c.b16 %v3722, %v3721
  %v3726 = vpack.c.b16 %v3724, %v3723
  %vm3729 = vcmask 261120
  %v3731 = vsel %vm3729, %v3707, 0
  %3733 = vmatprep.subr.bf16.mxu0 0
  %3734 = vmatpush1.bf16.msra.mxu0 %v3725
  %3735 = vmatprep.subr.bf16.mxu0 0
  %3736 = vmatpush1.bf16.msra.mxu0 %v3726
  %3737 = vmatprep.subr.bf16.mxu0 0
  %3738 = vmatpush1.bf16.msra.mxu0 0
  %3739 = vmatprep.subr.bf16.mxu0 0
  %3740 = vmatpush1.bf16.msra.mxu0 0
  %3741 = vmatprep.subr.bf16.mxu0 0
  %3742 = vmatpush1.bf16.msra.mxu0 0
  %3743 = vmatprep.subr.bf16.mxu0 0
  %3744 = vmatpush1.bf16.msra.mxu0 0
  %3745 = vmatprep.subr.bf16.mxu0 0
  %3746 = vmatpush1.bf16.msra.mxu0 0
  %3747 = vmatprep.subr.bf16.mxu0 0
  %3748 = vmatpush1.bf16.msra.mxu0 0
  %3749 = vmatprep.subr.bf16.mxu0 0
  %3750 = vmatpush1.bf16.msra.mxu0 0
  %3751 = vmatprep.subr.bf16.mxu0 0
  %3752 = vmatpush1.bf16.msra.mxu0 0
  %3753 = vmatprep.subr.bf16.mxu0 0
  %3754 = vmatpush1.bf16.msra.mxu0 0
  %3755 = vmatprep.subr.bf16.mxu0 0
  %3756 = vmatpush1.bf16.msra.mxu0 0
  %3757 = vmatprep.subr.bf16.mxu0 0
  %3758 = vmatpush1.bf16.msra.mxu0 0
  %3759 = vmatprep.subr.bf16.mxu0 0
  %3760 = vmatpush1.bf16.msra.mxu0 0
  %3761 = vmatprep.subr.bf16.mxu0 0
  %3762 = vmatpush1.bf16.msra.mxu0 0
  %3763 = vmatprep.subr.bf16.mxu0 0
  %3764 = vmatpush1.bf16.msra.mxu0 0
  %3765 = vmatprep.mubr.bf16.mxu0 0
  %3766 = vmatmul.mubr.bf16.gmra.mrb[0].mxu0 %v3731
  %v3767 = vpop.f32.mrb[0].mxu0
  %v3768 = vadd.f32 %v3716, %v3767
  %v3769 = vpop.f32.mrb[0].mxu0
  %v3770 = vpop.f32.mrb[0].mxu0
  %v3771 = vadd.f32 %v3716, %v3770
  %v3772 = vpop.f32.mrb[0].mxu0
  %3773 = vdwg.mxu0
  %3774 = vst [vmem:[%s3] sm:$0xff] %v3768
  %3775 = vst [vmem:[%s3 + $0x8] sm:$0xff] %v3771
  // Predicated region
  $region14: #{cnn_forward.1} parent=0 // pred_check
    _
  $region15: #{cnn_forward.1} parent=0 // pred_check_branch
    %3777 = sbr.rel (0) target = $region17
  $region16: #{cnn_forward.1} parent=0 // pred_region
    _
  $region17: #{cnn_forward.1} parent=0 // pred_fallthru
    _
  // Predicated region
  $region18: #{cnn_forward.1} parent=0 // pred_check
    _
  $region19: #{cnn_forward.1} parent=0 // pred_check_branch
    %3779 = sbr.rel (0) target = $region21
  $region20: #{cnn_forward.1} parent=0 // pred_region
    _
  $region21: #{cnn_forward.1} parent=0 // pred_fallthru
    _

</llo_original>
